<compile_context>
chip_gen: v7x
topology: tpu7x:2x2x1
jax: 0.10.0
libtpu: 0.0.40
codegen_flags: <defaults>
</compile_context>

<pallas_src>
import functools

import jax
import jax.numpy as jnp
from jax.experimental import pallas as pl
from jax.experimental.pallas import tpu as pltpu

EPS = 1e-5
NEG_SLOPE = 0.1
# Above the 32 MiB scoped-VMEM default, comfortably under v7x's 64 MiB physical.
_VMEM_LIMIT = 48 * 1024 * 1024


def _scale_shift(sum_v, sumsq_v, gamma, beta, count):
    """Training-mode BatchNorm scale/shift from per-channel sum / sum-of-sq."""
    mean = sum_v * (1.0 / count)
    var = jnp.maximum(sumsq_v * (1.0 / count) - mean * mean, 0.0)
    scale = gamma * jax.lax.rsqrt(var + EPS)
    shift = beta - mean * scale
    return scale, shift


# ----------------------------------------------------------------------------
# Kernels
# ----------------------------------------------------------------------------
def conv1x1_stats_kernel(x_ref, w_ref, y_ref, sum_ref, sumsq_ref,
                         *, tm, total_rows, needs_mask):
    """Tiled 1x1-conv GEMM + per-channel sum / sum-of-squares accumulation.

    x_ref: [tm, Cin] f32 (cast to the MXU dtype in-kernel -- no wrapper cast)
    w_ref: [Cin, Cout] compute dtype      y_ref: [tm, Cout] compute dtype
    sum/sumsq_ref: [1, Cout] f32 resident accumulators ("arbitrary" grid axis)
    """
    y = jnp.dot(x_ref[...].astype(w_ref.dtype), w_ref[...],
                preferred_element_type=jnp.float32)
    y_ref[...] = y.astype(y_ref.dtype)

    @pl.when(pl.program_id(0) == 0)
    def _init():
        sum_ref[...] = jnp.zeros_like(sum_ref)
        sumsq_ref[...] = jnp.zeros_like(sumsq_ref)

    if needs_mask:  # partial last tile: keep garbage rows out of the stats
        rows = (jax.lax.broadcasted_iota(jnp.int32, y.shape, 0)
                + pl.program_id(0) * tm)
        y = jnp.where(rows < total_rows, y, 0.0)
    sum_ref[...] += jnp.sum(y, axis=0, keepdims=True)
    sumsq_ref[...] += jnp.sum(y * y, axis=0, keepdims=True)


def conv3x3_fused_kernel(cur_ref, prev_ref, next_ref, s1_ref, ss1_ref,
                         g1_ref, b1_ref, w_ref,
                         z_ref, sum_ref, sumsq_ref, pad_ref,
                         *, th, width, halo_rows, count1, c_block):
    """BN1+LeakyReLU fused into the 3x3 conv for a TH-row tile of one image.

    cur_ref : [1, TH, W, Cmid] rows j*TH .. j*TH+TH-1 of the 1x1-conv output
    prev/next_ref : [1, HB, W, Cmid] halo blocks (only the last / first row is
                    used; zero-masked at the top / bottom image border)
    s1/ss1/g1/b1_ref : [1, Cmid] global BN1 statistics / affine parameters
    w_ref  : [9, Cmid, Cout] conv taps (ky-major)
    z_ref  : [1, TH, W, Cout] conv output (compute dtype)
    sum/sumsq_ref : [1, Cout] f32 resident BN2-stat accumulators
    pad_ref : [(TH+2)*(W+2)+pad, Cmid] f32 scratch: the normalized, zero-
              bordered activation tile flattened so every conv tap is one
              contiguous [TH*(W+2), Cmid] slice -> one MXU matmul per tap.
    """
    wp = width + 2
    j = pl.program_id(1)
    nj = pl.num_programs(1)
    m_rows = th * wp

    @pl.when((pl.program_id(0) == 0) & (j == 0))
    def _first_step():
        # Zero the persistent scratch once: only interior columns are rewritten
        # below, so the 1-pixel zero border survives across grid steps.
        pad_ref[...] = jnp.zeros_like(pad_ref)
        sum_ref[...] = jnp.zeros_like(sum_ref)
        sumsq_ref[...] = jnp.zeros_like(sumsq_ref)

    scale1, shift1 = _scale_shift(s1_ref[...], ss1_ref[...],
                                  g1_ref[...], b1_ref[...], count1)

    def norm(v):  # BN1 + LeakyReLU(0.1), in f32
        y = v.astype(jnp.float32) * scale1 + shift1
        return jnp.where(y >= 0.0, y, NEG_SLOPE * y)

    # Interior rows of the padded tile.
    a_cur = norm(cur_ref[0])                                   # [TH, W, Cmid]
    for rr in range(th):
        pad_ref[pl.ds((rr + 1) * wp + 1, width), :] = a_cur[rr]
    # Halo rows (zeros at the image borders).
    top = jnp.where(j > 0, norm(prev_ref[0, halo_rows - 1]), 0.0)
    pad_ref[pl.ds(1, width), :] = top
    bot = jnp.where(j < nj - 1, norm(next_ref[0, 0]), 0.0)
    pad_ref[pl.ds((th + 1) * wp + 1, width), :] = bot

    # 9 shifted matmuls with M = TH*(W+2); f32 accumulator chunked over Cout.
    cout = z_ref.shape[-1]
    for cs in range(0, cout, c_block):
        cw = min(c_block, cout - cs)
        acc = jnp.zeros((m_rows, cw), jnp.float32)
        for ky in range(3):
            for kx in range(3):
                lhs = pad_ref[pl.ds(ky * wp + kx, m_rows), :]
                acc = acc + jnp.dot(lhs.astype(w_ref.dtype),
                                    w_ref[3 * ky + kx, :, cs:cs + cw],
                                    preferred_element_type=jnp.float32)
        # Extract the W valid columns of each output row; accumulate BN2 stats
        # on the f32 values before rounding to the storage dtype.
        csum = jnp.zeros((1, cw), jnp.float32)
        csq = jnp.zeros((1, cw), jnp.float32)
        for rr in range(th):
            row = acc[rr * wp:rr * wp + width, :]               # [W, cw]
            z_ref[0, rr, :, cs:cs + cw] = row.astype(z_ref.dtype)
            csum = csum + jnp.sum(row, axis=0, keepdims=True)
            csq = csq + jnp.sum(row * row, axis=0, keepdims=True)
        sum_ref[:, cs:cs + cw] += csum
        sumsq_ref[:, cs:cs + cw] += csq


def bn_lrelu_kernel(y_ref, sum_ref, sumsq_ref, g_ref, b_ref, o_ref, *, count):
    """Normalize with global batch stats + LeakyReLU(0.1). Tiled over M."""
    scale, shift = _scale_shift(sum_ref[...], sumsq_ref[...],
                                g_ref[...], b_ref[...], count)
    z = y_ref[...].astype(jnp.float32) * scale + shift
    o_ref[...] = jnp.where(z >= 0, z, NEG_SLOPE * z).astype(o_ref.dtype)


def bn_lrelu_res_kernel(y_ref, sum_ref, sumsq_ref, g_ref, b_ref, res_ref,
                        o_ref, *, count):
    """Normalize + LeakyReLU + residual add (residual buffer aliased to out)."""
    scale, shift = _scale_shift(sum_ref[...], sumsq_ref[...],
                                g_ref[...], b_ref[...], count)
    z = y_ref[...].astype(jnp.float32) * scale + shift
    z = jnp.where(z >= 0, z, NEG_SLOPE * z)
    o_ref[...] = (z + res_ref[...].astype(jnp.float32)).astype(o_ref.dtype)


# ----------------------------------------------------------------------------
# pallas_call wrappers
# ----------------------------------------------------------------------------
def _conv1x1_stats(x, w, *, tm, out_dtype):
    m, cin = x.shape
    cout = w.shape[1]
    nb = pl.cdiv(m, tm)
    kern = functools.partial(conv1x1_stats_kernel, tm=tm, total_rows=m,
                             needs_mask=(m % tm) != 0)
    return pl.pallas_call(
        kern,
        grid=(nb,),
        in_specs=[pl.BlockSpec((tm, cin), lambda i: (i, 0)),
                  pl.BlockSpec((cin, cout), lambda i: (0, 0))],
        out_specs=(pl.BlockSpec((tm, cout), lambda i: (i, 0)),
                   pl.BlockSpec((1, cout), lambda i: (0, 0)),
                   pl.BlockSpec((1, cout), lambda i: (0, 0))),
        out_shape=(jax.ShapeDtypeStruct((m, cout), out_dtype),
                   jax.ShapeDtypeStruct((1, cout), jnp.float32),
                   jax.ShapeDtypeStruct((1, cout), jnp.float32)),
        compiler_params=pltpu.CompilerParams(
            dimension_semantics=("arbitrary",),
            vmem_limit_bytes=_VMEM_LIMIT),
    )(x, w)


def _conv3x3_fused(y1, s1, ss1, g1, b1, w3, *, th, hb, count1, out_dtype):
    n, h, w, cmid = y1.shape
    cout = w3.shape[-1]
    nj = h // th
    r = th // hb                      # halo blocks per row tile
    hbn = h // hb                     # halo blocks per image
    wp = w + 2
    p_flat = ((th + 2) * wp + 2 + 7) // 8 * 8
    c_block = min(cout, 256)

    kern = functools.partial(conv3x3_fused_kernel, th=th, width=w,
                             halo_rows=hb, count1=count1, c_block=c_block)
    cur_spec = pl.BlockSpec((1, th, w, cmid), lambda i, j: (i, j, 0, 0))
    prev_spec = pl.BlockSpec(
        (1, hb, w, cmid), lambda i, j: (i, jnp.maximum(j * r - 1, 0), 0, 0))
    next_spec = pl.BlockSpec(
        (1, hb, w, cmid),
        lambda i, j: (i, jnp.minimum((j + 1) * r, hbn - 1), 0, 0))
    vec_spec = pl.BlockSpec((1, cmid), lambda i, j: (0, 0))
    return pl.pallas_call(
        kern,
        grid=(n, nj),
        in_specs=[cur_spec, prev_spec, next_spec,
                  vec_spec, vec_spec, vec_spec, vec_spec,
                  pl.BlockSpec((9, cmid, cout), lambda i, j: (0, 0, 0))],
        out_specs=(pl.BlockSpec((1, th, w, cout), lambda i, j: (i, j, 0, 0)),
                   pl.BlockSpec((1, cout), lambda i, j: (0, 0)),
                   pl.BlockSpec((1, cout), lambda i, j: (0, 0))),
        out_shape=(jax.ShapeDtypeStruct((n, h, w, cout), out_dtype),
                   jax.ShapeDtypeStruct((1, cout), jnp.float32),
                   jax.ShapeDtypeStruct((1, cout), jnp.float32)),
        scratch_shapes=[pltpu.VMEM((p_flat, cmid), jnp.float32)],
        compiler_params=pltpu.CompilerParams(
            dimension_semantics=("arbitrary", "arbitrary"),
            vmem_limit_bytes=_VMEM_LIMIT),
    )(y1, y1, y1, s1, ss1, g1, b1, w3)


def _bn_lrelu(y, s, ss, gamma, beta, *, count, tm, residual=None):
    m, c = y.shape
    nb = pl.cdiv(m, tm)
    vec_spec = pl.BlockSpec((1, c), lambda i: (0, 0))
    tile_spec = pl.BlockSpec((tm, c), lambda i: (i, 0))
    common = dict(
        grid=(nb,),
        out_specs=tile_spec,
        out_shape=jax.ShapeDtypeStruct((m, c), jnp.float32),
        compiler_params=pltpu.CompilerParams(
            dimension_semantics=("parallel",),
            vmem_limit_bytes=_VMEM_LIMIT),
    )
    if residual is None:
        return pl.pallas_call(
            functools.partial(bn_lrelu_kernel, count=count),
            in_specs=[tile_spec, vec_spec, vec_spec, vec_spec, vec_spec],
            **common)(y, s, ss, gamma, beta)
    return pl.pallas_call(
        functools.partial(bn_lrelu_res_kernel, count=count),
        in_specs=[tile_spec, vec_spec, vec_spec, vec_spec, vec_spec, tile_spec],
        input_output_aliases={5: 0},        # reuse the residual buffer
        **common)(y, s, ss, gamma, beta, residual)


# ----------------------------------------------------------------------------
# Forward pass
# ----------------------------------------------------------------------------
def _pick_row_block(h, max_rows):
    """Largest divisor of H <= max_rows (whole image for small prime-ish H)."""
    best = 1
    for t in range(1, h + 1):
        if h % t == 0 and t <= max_rows:
            best = t
    if best == 1 and h <= 64:
        best = h
    return best


@functools.partial(jax.jit, static_argnames=("use_residual", "compute_dtype",
                                              "row_tile", "row_block"))
def residual_block_forward(x_nchw, params, use_residual=True,
                           compute_dtype=jnp.bfloat16, row_tile=1024,
                           row_block=8):
    """Pallas forward of ResidualBlock. x_nchw: [N, C, H, W] float32."""
    n, c, h, w = x_nchw.shape
    cmid = c // 2
    m = n * h * w
    # M-tile for the mem-bound GEMM / BN passes: bigger is better up to ~1024.
    # Double-buffered footprint is ~2 x 3 tiles of tm x C, well under 64 MiB
    # (v7x) even at tm=1024, C=1024.
    tm = min(row_tile, m)
    if tm < m:
        tm = max(8, (tm // 8) * 8)
    # Output rows per 3x3-conv grid step; halo blocks of `hb` rows.
    th = _pick_row_block(h, row_block)
    hb = 8 if th % 8 == 0 else th

    x = jnp.transpose(x_nchw, (0, 2, 3, 1)).reshape(m, c).astype(jnp.float32)

    for p in params:
        residual = x                                            # [M, C] f32
        # 1x1 conv GEMM (+BN1 stats); cast to the MXU dtype inside the kernel.
        y1, s1, ss1 = _conv1x1_stats(x, p["w1"].astype(compute_dtype),
                                     tm=tm, out_dtype=compute_dtype)
        # Fused BN1+LeakyReLU -> 3x3 conv (+BN2 stats); no HBM pad / im2col.
        w3 = p["w3"].reshape(9, cmid, c).astype(compute_dtype)
        z, s2, ss2 = _conv3x3_fused(y1.reshape(n, h, w, cmid), s1, ss1,
                                    p["g1"], p["bt1"], w3, th=th, hb=hb,
                                    count1=float(m), out_dtype=compute_dtype)
        # BN2 + LeakyReLU (+ residual); carry stays f32.
        x = _bn_lrelu(z.reshape(m, c), s2, ss2, p["g2"], p["bt2"],
                      count=float(m), tm=tm,
                      residual=residual if use_residual else None)

    return jnp.transpose(x.reshape(n, h, w, c), (0, 3, 1, 2))   # back to NCHW


# ----------------------------------------------------------------------------
# Parameters + pure-JAX reference (mirrors the PyTorch module, training mode)
# ----------------------------------------------------------------------------
def make_params(key, channels, num_repeats):
    cmid = channels // 2
    params = []
    for _ in range(num_repeats):
        k1, k2, k3, k4, k5, k6, k7, k8, key = jax.random.split(key, 9)
        # torch Conv2d(C, C//2, 1): weight [Cmid, C, 1, 1] -> jax [C, Cmid]
        w1_t = 0.1 * jax.random.normal(k1, (cmid, channels, 1, 1), jnp.float32)
        w1 = jnp.transpose(w1_t[:, :, 0, 0], (1, 0))
        b1 = 0.05 * jax.random.normal(k2, (1, cmid), jnp.float32)
        # torch Conv2d(C//2, C, 3, pad=1): [C, Cmid, 3, 3] -> [3,3,Cmid,C] -> [9*Cmid, C]
        w3_t = 0.1 * jax.random.normal(k3, (channels, cmid, 3, 3), jnp.float32)
        w3 = jnp.transpose(w3_t, (2, 3, 1, 0)).reshape(9 * cmid, channels)
        b3 = 0.05 * jax.random.normal(k4, (1, channels), jnp.float32)
        params.append({
            "w1": w1, "b1": b1,
            "g1": 1.0 + 0.1 * jax.random.normal(k5, (1, cmid), jnp.float32),
            "bt1": 0.05 * jax.random.normal(k6, (1, cmid), jnp.float32),
            "w3": w3, "b3": b3,
            "g2": 1.0 + 0.1 * jax.random.normal(k7, (1, channels), jnp.float32),
            "bt2": 0.05 * jax.random.normal(k8, (1, channels), jnp.float32),
        })
    return params


def ref_forward(x_nchw, params, use_residual=True):
    """Pure-JAX reference (NCHW, full precision, mirrors PyTorch semantics)."""
    x = x_nchw
    N, C, H, W = x.shape
    cmid = C // 2
    for p in params:
        residual = x
        y = jnp.einsum("nchw,cm->nmhw", x, p["w1"],
                       precision="highest") + p["b1"].reshape(1, cmid, 1, 1)
        mean = jnp.mean(y, axis=(0, 2, 3), keepdims=True)
        var = jnp.mean((y - mean) ** 2, axis=(0, 2, 3), keepdims=True)
        y = ((y - mean) / jnp.sqrt(var + EPS) * p["g1"].reshape(1, cmid, 1, 1)
             + p["bt1"].reshape(1, cmid, 1, 1))
        y = jnp.where(y >= 0, y, NEG_SLOPE * y)

        w3 = p["w3"].reshape(3, 3, cmid, C)
        yp = jnp.pad(y, ((0, 0), (0, 0), (1, 1), (1, 1)))
        z = jnp.zeros((N, C, H, W), jnp.float32)
        for ky in range(3):
            for kx in range(3):
                z = z + jnp.einsum("nmhw,mo->nohw",
                                   yp[:, :, ky:ky + H, kx:kx + W],
                                   w3[ky, kx], precision="highest")
        z = z + p["b3"].reshape(1, C, 1, 1)
        mean = jnp.mean(z, axis=(0, 2, 3), keepdims=True)
        var = jnp.mean((z - mean) ** 2, axis=(0, 2, 3), keepdims=True)
        z = ((z - mean) / jnp.sqrt(var + EPS) * p["g2"].reshape(1, C, 1, 1)
             + p["bt2"].reshape(1, C, 1, 1))
        z = jnp.where(z >= 0, z, NEG_SLOPE * z)
        x = z + residual if use_residual else z
    return x


if __name__ == "__main__":
    channels, num_repeats, use_residual = 4, 2, True
    N, H, W = 2, 16, 16

    key = jax.random.PRNGKey(0)
    kx, kp = jax.random.split(key)
    x = jax.random.normal(kx, (N, channels, H, W), jnp.float32)
    params = make_params(kp, channels, num_repeats)

    ref = ref_forward(x, params, use_residual=use_residual)

    # f32 storage path with a small row tile: exercises multi-tile grids and
    # gives a tight functional check against the pure-JAX reference.
    out_f32 = jax.block_until_ready(
        residual_block_forward(x, params, use_residual=use_residual,
                               compute_dtype=jnp.float32, row_tile=128))
    assert out_f32.shape == (N, channels, H, W)
    assert jnp.allclose(out_f32, ref, rtol=1e-3, atol=1e-3), \
        "f32 Pallas path mismatch vs pure-JAX reference"

    # No-residual branch with a non-dividing row tile (exercises the masked
    # partial-tail path in the 1x1 stats kernel).
    out_nores = jax.block_until_ready(
        residual_block_forward(x, params, use_residual=False,
                               compute_dtype=jnp.float32, row_tile=96))
    ref_nores = ref_forward(x, params, use_residual=False)
    assert jnp.allclose(out_nores, ref_nores, rtol=1e-3, atol=1e-3), \
        "no-residual / partial-tile path mismatch vs pure-JAX reference"

    # bf16 MXU-input path with default (large) tiles -- the performance
    # configuration. Looser tolerance: bf16 rounding of matmul inputs and the
    # stored intermediates propagates through two BN stages.
    out_bf16 = jax.block_until_ready(
        residual_block_forward(x, params, use_residual=use_residual,
                               compute_dtype=jnp.bfloat16))
    max_err = float(jnp.max(jnp.abs(out_bf16 - ref)))
    assert max_err < 0.35, f"bf16 Pallas path diverged: max|err|={max_err}"

    print("KERNEL_OK")
</pallas_src>

<mosaic_0001>
module attributes {stable_mosaic.version = 11 : i64} {
  func.func @conv1x1_stats_kernel(%arg0: i32, %arg1: memref<128x4xf32, #tpu.memory_space<vmem>>, %arg2: memref<4x2xf32, #tpu.memory_space<vmem>>, %arg3: memref<128x2xf32, #tpu.memory_space<vmem>>, %arg4: memref<1x2xf32, #tpu.memory_space<vmem>>, %arg5: memref<1x2xf32, #tpu.memory_space<vmem>>) attributes {dimension_semantics = [#tpu.dimension_semantics<arbitrary>], iteration_bounds = array<i64: 4>, scalar_prefetch = 0 : i64, scratch_operands = 0 : i64, tpu.core_type = #tpu.core_type<tc>, window_params = [{transform_indices = @transform_0, window_bounds = array<i64: 128, 4>}, {pipeline_mode = #tpu.pipeline_mode<synchronous>, transform_indices = @transform_1, window_bounds = array<i64: 4, 2>}, {transform_indices = @transform_2, window_bounds = array<i64: 128, 2>}, {pipeline_mode = #tpu.pipeline_mode<synchronous>, transform_indices = @transform_3, window_bounds = array<i64: 1, 2>}, {pipeline_mode = #tpu.pipeline_mode<synchronous>, transform_indices = @transform_4, window_bounds = array<i64: 1, 2>}]} {
    %c0 = arith.constant 0 : index
    %c0_0 = arith.constant 0 : index
    %0 = vector.load %arg1[%c0, %c0_0] : memref<128x4xf32, #tpu.memory_space<vmem>>, vector<128x4xf32>
    %c0_1 = arith.constant 0 : index
    %c0_2 = arith.constant 0 : index
    %1 = vector.load %arg2[%c0_1, %c0_2] : memref<4x2xf32, #tpu.memory_space<vmem>>, vector<4x2xf32>
    %cst = arith.constant dense<0.000000e+00> : vector<128x2xf32>
    %2 = tpu.matmul %0, %1, %cst {dimension_numbers = #tpu.dot_dimension_numbers<[1], [0], [0], [1], [0, 0, 1, 1], [], []>} : vector<128x4xf32>, vector<4x2xf32>, vector<128x2xf32> -> vector<128x2xf32>
    %c0_3 = arith.constant 0 : index
    %c0_4 = arith.constant 0 : index
    %3 = vector.load %arg3[%c0_3, %c0_4] : memref<128x2xf32, #tpu.memory_space<vmem>>, vector<128x2xf32>
    tpu.vector_store %arg3[%c0_3, %c0_4], %2 {strides = array<i32>} : memref<128x2xf32, #tpu.memory_space<vmem>>, vector<128x2xf32>,
    %c0_i32 = arith.constant 0 : i32
    %4 = arith.cmpi eq, %arg0, %c0_i32 : i32
    %5 = arith.extui %4 : i1 to i32
    %c0_i32_5 = arith.constant 0 : i32
    %6 = arith.cmpi ne, %5, %c0_i32_5 : i32
    scf.if %6 {
      %cst_16 = arith.constant 0.000000e+00 : f32
      %18 = vector.broadcast %cst_16 : f32 to vector<1x2xf32>
      %c0_17 = arith.constant 0 : index
      %c0_18 = arith.constant 0 : index
      %19 = vector.load %arg4[%c0_17, %c0_18] : memref<1x2xf32, #tpu.memory_space<vmem>>, vector<1x2xf32>
      tpu.vector_store %arg4[%c0_17, %c0_18], %18 {strides = array<i32>} : memref<1x2xf32, #tpu.memory_space<vmem>>, vector<1x2xf32>,
      %cst_19 = arith.constant 0.000000e+00 : f32
      %20 = vector.broadcast %cst_19 : f32 to vector<1x2xf32>
      %c0_20 = arith.constant 0 : index
      %c0_21 = arith.constant 0 : index
      %21 = vector.load %arg5[%c0_20, %c0_21] : memref<1x2xf32, #tpu.memory_space<vmem>>, vector<1x2xf32>
      tpu.vector_store %arg5[%c0_20, %c0_21], %20 {strides = array<i32>} : memref<1x2xf32, #tpu.memory_space<vmem>>, vector<1x2xf32>,
    } else {
    }
    %c0_6 = arith.constant 0 : index
    %c0_7 = arith.constant 0 : index
    %7 = vector.load %arg4[%c0_6, %c0_7] : memref<1x2xf32, #tpu.memory_space<vmem>>, vector<1x2xf32>
    %cst_8 = arith.constant dense<0.000000e+00> : vector<2xf32>
    %8 = vector.multi_reduction <add>, %2, %cst_8 [0] : vector<128x2xf32> to vector<2xf32>
    %9 = vector.shape_cast %8 : vector<2xf32> to vector<1x2xf32>
    %10 = arith.addf %7, %9 : vector<1x2xf32>
    %c0_9 = arith.constant 0 : index
    %c0_10 = arith.constant 0 : index
    %11 = vector.load %arg4[%c0_9, %c0_10] : memref<1x2xf32, #tpu.memory_space<vmem>>, vector<1x2xf32>
    tpu.vector_store %arg4[%c0_9, %c0_10], %10 {strides = array<i32>} : memref<1x2xf32, #tpu.memory_space<vmem>>, vector<1x2xf32>,
    %c0_11 = arith.constant 0 : index
    %c0_12 = arith.constant 0 : index
    %12 = vector.load %arg5[%c0_11, %c0_12] : memref<1x2xf32, #tpu.memory_space<vmem>>, vector<1x2xf32>
    %13 = arith.mulf %2, %2 : vector<128x2xf32>
    %cst_13 = arith.constant dense<0.000000e+00> : vector<2xf32>
    %14 = vector.multi_reduction <add>, %13, %cst_13 [0] : vector<128x2xf32> to vector<2xf32>
    %15 = vector.shape_cast %14 : vector<2xf32> to vector<1x2xf32>
    %16 = arith.addf %12, %15 : vector<1x2xf32>
    %c0_14 = arith.constant 0 : index
    %c0_15 = arith.constant 0 : index
    %17 = vector.load %arg5[%c0_14, %c0_15] : memref<1x2xf32, #tpu.memory_space<vmem>>, vector<1x2xf32>
    tpu.vector_store %arg5[%c0_14, %c0_15], %16 {strides = array<i32>} : memref<1x2xf32, #tpu.memory_space<vmem>>, vector<1x2xf32>,
    return
  }
  func.func @transform_0(%arg0: i32) -> (i32, i32) {
    %c0_i32 = arith.constant 0 : i32
    %c0_i32_0 = arith.constant 0 : i32
    return %arg0, %c0_i32 : i32, i32
  }
  func.func @transform_1(%arg0: i32) -> (i32, i32) {
    %c0_i32 = arith.constant 0 : i32
    %c0_i32_0 = arith.constant 0 : i32
    %c0_i32_1 = arith.constant 0 : i32
    return %c0_i32, %c0_i32_0 : i32, i32
  }
  func.func @transform_2(%arg0: i32) -> (i32, i32) {
    %c0_i32 = arith.constant 0 : i32
    %c0_i32_0 = arith.constant 0 : i32
    return %arg0, %c0_i32 : i32, i32
  }
  func.func @transform_3(%arg0: i32) -> (i32, i32) {
    %c0_i32 = arith.constant 0 : i32
    %c0_i32_0 = arith.constant 0 : i32
    %c0_i32_1 = arith.constant 0 : i32
    return %c0_i32, %c0_i32_0 : i32, i32
  }
  func.func @transform_4(%arg0: i32) -> (i32, i32) {
    %c0_i32 = arith.constant 0 : i32
    %c0_i32_0 = arith.constant 0 : i32
    %c0_i32_1 = arith.constant 0 : i32
    return %c0_i32, %c0_i32_0 : i32, i32
  }
}

module attributes {stable_mosaic.version = 11 : i64} {
  func.func @bn_lrelu_res_kernel(%arg0: i32, %arg1: memref<128x4xf32, #tpu.memory_space<vmem>>, %arg2: memref<1x4xf32, #tpu.memory_space<vmem>>, %arg3: memref<1x4xf32, #tpu.memory_space<vmem>>, %arg4: memref<1x4xf32, #tpu.memory_space<vmem>>, %arg5: memref<1x4xf32, #tpu.memory_space<vmem>>, %arg6: memref<128x4xf32, #tpu.memory_space<vmem>>, %arg7: memref<128x4xf32, #tpu.memory_space<vmem>>) attributes {dimension_semantics = [#tpu.dimension_semantics<parallel>], iteration_bounds = array<i64: 4>, scalar_prefetch = 0 : i64, scratch_operands = 0 : i64, tpu.core_type = #tpu.core_type<tc>, window_params = [{transform_indices = @transform_0, window_bounds = array<i64: 128, 4>}, {pipeline_mode = #tpu.pipeline_mode<synchronous>, transform_indices = @transform_1, window_bounds = array<i64: 1, 4>}, {pipeline_mode = #tpu.pipeline_mode<synchronous>, transform_indices = @transform_2, window_bounds = array<i64: 1, 4>}, {pipeline_mode = #tpu.pipeline_mode<synchronous>, transform_indices = @transform_3, window_bounds = array<i64: 1, 4>}, {pipeline_mode = #tpu.pipeline_mode<synchronous>, transform_indices = @transform_4, window_bounds = array<i64: 1, 4>}, {transform_indices = @transform_5, window_bounds = array<i64: 128, 4>}, {transform_indices = @transform_6, window_bounds = array<i64: 128, 4>}]} {
    %c0 = arith.constant 0 : index
    %c0_0 = arith.constant 0 : index
    %0 = vector.load %arg2[%c0, %c0_0] : memref<1x4xf32, #tpu.memory_space<vmem>>, vector<1x4xf32>
    %c0_1 = arith.constant 0 : index
    %c0_2 = arith.constant 0 : index
    %1 = vector.load %arg3[%c0_1, %c0_2] : memref<1x4xf32, #tpu.memory_space<vmem>>, vector<1x4xf32>
    %c0_3 = arith.constant 0 : index
    %c0_4 = arith.constant 0 : index
    %2 = vector.load %arg4[%c0_3, %c0_4] : memref<1x4xf32, #tpu.memory_space<vmem>>, vector<1x4xf32>
    %c0_5 = arith.constant 0 : index
    %c0_6 = arith.constant 0 : index
    %3 = vector.load %arg5[%c0_5, %c0_6] : memref<1x4xf32, #tpu.memory_space<vmem>>, vector<1x4xf32>
    %cst = arith.constant 0.001953125 : f32
    %4 = vector.broadcast %cst : f32 to vector<1x4xf32>
    %5 = arith.mulf %0, %4 : vector<1x4xf32>
    %cst_7 = arith.constant 0.001953125 : f32
    %6 = vector.broadcast %cst_7 : f32 to vector<1x4xf32>
    %7 = arith.mulf %1, %6 : vector<1x4xf32>
    %8 = arith.mulf %5, %5 : vector<1x4xf32>
    %9 = arith.subf %7, %8 : vector<1x4xf32>
    %cst_8 = arith.constant 0.000000e+00 : f32
    %10 = vector.broadcast %cst_8 : f32 to vector<1x4xf32>
    %11 = arith.maximumf %9, %10 : vector<1x4xf32>
    %cst_9 = arith.constant 9.99999974E-6 : f32
    %12 = vector.broadcast %cst_9 : f32 to vector<1x4xf32>
    %13 = arith.addf %11, %12 : vector<1x4xf32>
    %14 = math.rsqrt %13 : vector<1x4xf32>
    %15 = arith.mulf %2, %14 : vector<1x4xf32>
    %16 = arith.mulf %5, %15 : vector<1x4xf32>
    %17 = arith.subf %3, %16 : vector<1x4xf32>
    %c0_10 = arith.constant 0 : index
    %c0_11 = arith.constant 0 : index
    %18 = vector.load %arg1[%c0_10, %c0_11] : memref<128x4xf32, #tpu.memory_space<vmem>>, vector<128x4xf32>
    %19 = vector.broadcast %15 : vector<1x4xf32> to vector<128x4xf32>
    %20 = arith.mulf %18, %19 : vector<128x4xf32>
    %21 = vector.broadcast %17 : vector<1x4xf32> to vector<128x4xf32>
    %22 = arith.addf %20, %21 : vector<128x4xf32>
    %cst_12 = arith.constant 0.000000e+00 : f32
    %23 = vector.broadcast %cst_12 : f32 to vector<128x4xf32>
    %24 = arith.cmpf oge, %22, %23 : vector<128x4xf32>
    %cst_13 = arith.constant 1.000000e-01 : f32
    %25 = vector.broadcast %cst_13 : f32 to vector<128x4xf32>
    %26 = arith.mulf %25, %22 : vector<128x4xf32>
    %27 = arith.select %24, %22, %26 : vector<128x4xi1>, vector<128x4xf32>
    %c0_14 = arith.constant 0 : index
    %c0_15 = arith.constant 0 : index
    %28 = vector.load %arg6[%c0_14, %c0_15] : memref<128x4xf32, #tpu.memory_space<vmem>>, vector<128x4xf32>
    %29 = arith.addf %27, %28 : vector<128x4xf32>
    %c0_16 = arith.constant 0 : index
    %c0_17 = arith.constant 0 : index
    %30 = vector.load %arg7[%c0_16, %c0_17] : memref<128x4xf32, #tpu.memory_space<vmem>>, vector<128x4xf32>
    tpu.vector_store %arg7[%c0_16, %c0_17], %29 {strides = array<i32>} : memref<128x4xf32, #tpu.memory_space<vmem>>, vector<128x4xf32>,
    return
  }
  func.func @transform_0(%arg0: i32) -> (i32, i32) {
    %c0_i32 = arith.constant 0 : i32
    %c0_i32_0 = arith.constant 0 : i32
    return %arg0, %c0_i32 : i32, i32
  }
  func.func @transform_1(%arg0: i32) -> (i32, i32) {
    %c0_i32 = arith.constant 0 : i32
    %c0_i32_0 = arith.constant 0 : i32
    %c0_i32_1 = arith.constant 0 : i32
    return %c0_i32, %c0_i32_0 : i32, i32
  }
  func.func @transform_2(%arg0: i32) -> (i32, i32) {
    %c0_i32 = arith.constant 0 : i32
    %c0_i32_0 = arith.constant 0 : i32
    %c0_i32_1 = arith.constant 0 : i32
    return %c0_i32, %c0_i32_0 : i32, i32
  }
  func.func @transform_3(%arg0: i32) -> (i32, i32) {
    %c0_i32 = arith.constant 0 : i32
    %c0_i32_0 = arith.constant 0 : i32
    %c0_i32_1 = arith.constant 0 : i32
    return %c0_i32, %c0_i32_0 : i32, i32
  }
  func.func @transform_4(%arg0: i32) -> (i32, i32) {
    %c0_i32 = arith.constant 0 : i32
    %c0_i32_0 = arith.constant 0 : i32
    %c0_i32_1 = arith.constant 0 : i32
    return %c0_i32, %c0_i32_0 : i32, i32
  }
  func.func @transform_5(%arg0: i32) -> (i32, i32) {
    %c0_i32 = arith.constant 0 : i32
    %c0_i32_0 = arith.constant 0 : i32
    return %arg0, %c0_i32 : i32, i32
  }
  func.func @transform_6(%arg0: i32) -> (i32, i32) {
    %c0_i32 = arith.constant 0 : i32
    %c0_i32_0 = arith.constant 0 : i32
    return %arg0, %c0_i32 : i32, i32
  }
}

module attributes {stable_mosaic.version = 11 : i64} {
  func.func @conv3x3_fused_kernel(%arg0: i32, %arg1: i32, %arg2: memref<1x8x16x2xf32, #tpu.memory_space<vmem>>, %arg3: memref<1x8x16x2xf32, #tpu.memory_space<vmem>>, %arg4: memref<1x8x16x2xf32, #tpu.memory_space<vmem>>, %arg5: memref<1x2xf32, #tpu.memory_space<vmem>>, %arg6: memref<1x2xf32, #tpu.memory_space<vmem>>, %arg7: memref<1x2xf32, #tpu.memory_space<vmem>>, %arg8: memref<1x2xf32, #tpu.memory_space<vmem>>, %arg9: memref<9x2x4xf32, #tpu.memory_space<vmem>>, %arg10: memref<1x8x16x4xf32, #tpu.memory_space<vmem>>, %arg11: memref<1x4xf32, #tpu.memory_space<vmem>>, %arg12: memref<1x4xf32, #tpu.memory_space<vmem>>, %arg13: memref<184x2xf32, #tpu.memory_space<vmem>>) attributes {dimension_semantics = [#tpu.dimension_semantics<arbitrary>, #tpu.dimension_semantics<arbitrary>], iteration_bounds = array<i64: 2, 2>, scalar_prefetch = 0 : i64, scratch_operands = 1 : i64, tpu.core_type = #tpu.core_type<tc>, window_params = [{transform_indices = @transform_0, window_bounds = array<i64: 1, 8, 16, 2>}, {transform_indices = @transform_1, window_bounds = array<i64: 1, 8, 16, 2>}, {transform_indices = @transform_2, window_bounds = array<i64: 1, 8, 16, 2>}, {pipeline_mode = #tpu.pipeline_mode<synchronous>, transform_indices = @transform_3, window_bounds = array<i64: 1, 2>}, {pipeline_mode = #tpu.pipeline_mode<synchronous>, transform_indices = @transform_4, window_bounds = array<i64: 1, 2>}, {pipeline_mode = #tpu.pipeline_mode<synchronous>, transform_indices = @transform_5, window_bounds = array<i64: 1, 2>}, {pipeline_mode = #tpu.pipeline_mode<synchronous>, transform_indices = @transform_6, window_bounds = array<i64: 1, 2>}, {pipeline_mode = #tpu.pipeline_mode<synchronous>, transform_indices = @transform_7, window_bounds = array<i64: 9, 2, 4>}, {transform_indices = @transform_8, window_bounds = array<i64: 1, 8, 16, 4>}, {pipeline_mode = #tpu.pipeline_mode<synchronous>, transform_indices = @transform_9, window_bounds = array<i64: 1, 4>}, {pipeline_mode = #tpu.pipeline_mode<synchronous>, transform_indices = @transform_10, window_bounds = array<i64: 1, 4>}]} {
    %c0_i32 = arith.constant 0 : i32
    %0 = arith.cmpi eq, %arg0, %c0_i32 : i32
    %c0_i32_0 = arith.constant 0 : i32
    %1 = arith.cmpi eq, %arg1, %c0_i32_0 : i32
    %2 = arith.andi %0, %1 : i1
    %3 = arith.extui %2 : i1 to i32
    %c0_i32_1 = arith.constant 0 : i32
    %4 = arith.cmpi ne, %3, %c0_i32_1 : i32
    scf.if %4 {
      %cst_145 = arith.constant 0.000000e+00 : f32
      %232 = vector.broadcast %cst_145 : f32 to vector<184x2xf32>
      %c0_146 = arith.constant 0 : index
      %c0_147 = arith.constant 0 : index
      %233 = vector.load %arg13[%c0_146, %c0_147] : memref<184x2xf32, #tpu.memory_space<vmem>>, vector<184x2xf32>
      tpu.vector_store %arg13[%c0_146, %c0_147], %232 {strides = array<i32>} : memref<184x2xf32, #tpu.memory_space<vmem>>, vector<184x2xf32>,
      %cst_148 = arith.constant 0.000000e+00 : f32
      %234 = vector.broadcast %cst_148 : f32 to vector<1x4xf32>
      %c0_149 = arith.constant 0 : index
      %c0_150 = arith.constant 0 : index
      %235 = vector.load %arg11[%c0_149, %c0_150] : memref<1x4xf32, #tpu.memory_space<vmem>>, vector<1x4xf32>
      tpu.vector_store %arg11[%c0_149, %c0_150], %234 {strides = array<i32>} : memref<1x4xf32, #tpu.memory_space<vmem>>, vector<1x4xf32>,
      %cst_151 = arith.constant 0.000000e+00 : f32
      %236 = vector.broadcast %cst_151 : f32 to vector<1x4xf32>
      %c0_152 = arith.constant 0 : index
      %c0_153 = arith.constant 0 : index
      %237 = vector.load %arg12[%c0_152, %c0_153] : memref<1x4xf32, #tpu.memory_space<vmem>>, vector<1x4xf32>
      tpu.vector_store %arg12[%c0_152, %c0_153], %236 {strides = array<i32>} : memref<1x4xf32, #tpu.memory_space<vmem>>, vector<1x4xf32>,
    } else {
    }
    %c0 = arith.constant 0 : index
    %c0_2 = arith.constant 0 : index
    %5 = vector.load %arg5[%c0, %c0_2] : memref<1x2xf32, #tpu.memory_space<vmem>>, vector<1x2xf32>
    %c0_3 = arith.constant 0 : index
    %c0_4 = arith.constant 0 : index
    %6 = vector.load %arg6[%c0_3, %c0_4] : memref<1x2xf32, #tpu.memory_space<vmem>>, vector<1x2xf32>
    %c0_5 = arith.constant 0 : index
    %c0_6 = arith.constant 0 : index
    %7 = vector.load %arg7[%c0_5, %c0_6] : memref<1x2xf32, #tpu.memory_space<vmem>>, vector<1x2xf32>
    %c0_7 = arith.constant 0 : index
    %c0_8 = arith.constant 0 : index
    %8 = vector.load %arg8[%c0_7, %c0_8] : memref<1x2xf32, #tpu.memory_space<vmem>>, vector<1x2xf32>
    %cst = arith.constant 0.001953125 : f32
    %9 = vector.broadcast %cst : f32 to vector<1x2xf32>
    %10 = arith.mulf %5, %9 : vector<1x2xf32>
    %cst_9 = arith.constant 0.001953125 : f32
    %11 = vector.broadcast %cst_9 : f32 to vector<1x2xf32>
    %12 = arith.mulf %6, %11 : vector<1x2xf32>
    %13 = arith.mulf %10, %10 : vector<1x2xf32>
    %14 = arith.subf %12, %13 : vector<1x2xf32>
    %cst_10 = arith.constant 0.000000e+00 : f32
    %15 = vector.broadcast %cst_10 : f32 to vector<1x2xf32>
    %16 = arith.maximumf %14, %15 : vector<1x2xf32>
    %cst_11 = arith.constant 9.99999974E-6 : f32
    %17 = vector.broadcast %cst_11 : f32 to vector<1x2xf32>
    %18 = arith.addf %16, %17 : vector<1x2xf32>
    %19 = math.rsqrt %18 : vector<1x2xf32>
    %20 = arith.mulf %7, %19 : vector<1x2xf32>
    %21 = arith.mulf %10, %20 : vector<1x2xf32>
    %22 = arith.subf %8, %21 : vector<1x2xf32>
    %c0_12 = arith.constant 0 : index
    %c0_13 = arith.constant 0 : index
    %c0_14 = arith.constant 0 : index
    %c0_15 = arith.constant 0 : index
    %23 = vector.load %arg2[%c0_12, %c0_13, %c0_14, %c0_15] : memref<1x8x16x2xf32, #tpu.memory_space<vmem>>, vector<1x8x16x2xf32>
    %24 = vector.shape_cast %23 : vector<1x8x16x2xf32> to vector<8x16x2xf32>
    %25 = vector.shape_cast %20 : vector<1x2xf32> to vector<1x1x2xf32>
    %26 = vector.broadcast %25 : vector<1x1x2xf32> to vector<8x16x2xf32>
    %27 = arith.mulf %24, %26 : vector<8x16x2xf32>
    %28 = vector.shape_cast %22 : vector<1x2xf32> to vector<1x1x2xf32>
    %29 = vector.broadcast %28 : vector<1x1x2xf32> to vector<8x16x2xf32>
    %30 = arith.addf %27, %29 : vector<8x16x2xf32>
    %cst_16 = arith.constant 0.000000e+00 : f32
    %31 = vector.broadcast %cst_16 : f32 to vector<8x16x2xf32>
    %32 = arith.cmpf oge, %30, %31 : vector<8x16x2xf32>
    %cst_17 = arith.constant 1.000000e-01 : f32
    %33 = vector.broadcast %cst_17 : f32 to vector<8x16x2xf32>
    %34 = arith.mulf %33, %30 : vector<8x16x2xf32>
    %35 = arith.select %32, %30, %34 : vector<8x16x2xi1>, vector<8x16x2xf32>
    %36 = vector.extract_strided_slice %35 {offsets = [0, 0, 0], sizes = [1, 16, 2], strides = [1, 1, 1]} : vector<8x16x2xf32> to vector<1x16x2xf32>
    %37 = vector.shape_cast %36 : vector<1x16x2xf32> to vector<16x2xf32>
    %c19 = arith.constant 19 : index
    %c0_18 = arith.constant 0 : index
    %38 = vector.load %arg13[%c19, %c0_18] : memref<184x2xf32, #tpu.memory_space<vmem>>, vector<16x2xf32>
    tpu.vector_store %arg13[%c19, %c0_18], %37 {strides = array<i32>} : memref<184x2xf32, #tpu.memory_space<vmem>>, vector<16x2xf32>,
    %39 = vector.extract_strided_slice %35 {offsets = [1, 0, 0], sizes = [1, 16, 2], strides = [1, 1, 1]} : vector<8x16x2xf32> to vector<1x16x2xf32>
    %40 = vector.shape_cast %39 : vector<1x16x2xf32> to vector<16x2xf32>
    %c37 = arith.constant 37 : index
    %c0_19 = arith.constant 0 : index
    %41 = vector.load %arg13[%c37, %c0_19] : memref<184x2xf32, #tpu.memory_space<vmem>>, vector<16x2xf32>
    tpu.vector_store %arg13[%c37, %c0_19], %40 {strides = array<i32>} : memref<184x2xf32, #tpu.memory_space<vmem>>, vector<16x2xf32>,
    %42 = vector.extract_strided_slice %35 {offsets = [2, 0, 0], sizes = [1, 16, 2], strides = [1, 1, 1]} : vector<8x16x2xf32> to vector<1x16x2xf32>
    %43 = vector.shape_cast %42 : vector<1x16x2xf32> to vector<16x2xf32>
    %c55 = arith.constant 55 : index
    %c0_20 = arith.constant 0 : index
    %44 = vector.load %arg13[%c55, %c0_20] : memref<184x2xf32, #tpu.memory_space<vmem>>, vector<16x2xf32>
    tpu.vector_store %arg13[%c55, %c0_20], %43 {strides = array<i32>} : memref<184x2xf32, #tpu.memory_space<vmem>>, vector<16x2xf32>,
    %45 = vector.extract_strided_slice %35 {offsets = [3, 0, 0], sizes = [1, 16, 2], strides = [1, 1, 1]} : vector<8x16x2xf32> to vector<1x16x2xf32>
    %46 = vector.shape_cast %45 : vector<1x16x2xf32> to vector<16x2xf32>
    %c73 = arith.constant 73 : index
    %c0_21 = arith.constant 0 : index
    %47 = vector.load %arg13[%c73, %c0_21] : memref<184x2xf32, #tpu.memory_space<vmem>>, vector<16x2xf32>
    tpu.vector_store %arg13[%c73, %c0_21], %46 {strides = array<i32>} : memref<184x2xf32, #tpu.memory_space<vmem>>, vector<16x2xf32>,
    %48 = vector.extract_strided_slice %35 {offsets = [4, 0, 0], sizes = [1, 16, 2], strides = [1, 1, 1]} : vector<8x16x2xf32> to vector<1x16x2xf32>
    %49 = vector.shape_cast %48 : vector<1x16x2xf32> to vector<16x2xf32>
    %c91 = arith.constant 91 : index
    %c0_22 = arith.constant 0 : index
    %50 = vector.load %arg13[%c91, %c0_22] : memref<184x2xf32, #tpu.memory_space<vmem>>, vector<16x2xf32>
    tpu.vector_store %arg13[%c91, %c0_22], %49 {strides = array<i32>} : memref<184x2xf32, #tpu.memory_space<vmem>>, vector<16x2xf32>,
    %51 = vector.extract_strided_slice %35 {offsets = [5, 0, 0], sizes = [1, 16, 2], strides = [1, 1, 1]} : vector<8x16x2xf32> to vector<1x16x2xf32>
    %52 = vector.shape_cast %51 : vector<1x16x2xf32> to vector<16x2xf32>
    %c109 = arith.constant 109 : index
    %c0_23 = arith.constant 0 : index
    %53 = vector.load %arg13[%c109, %c0_23] : memref<184x2xf32, #tpu.memory_space<vmem>>, vector<16x2xf32>
    tpu.vector_store %arg13[%c109, %c0_23], %52 {strides = array<i32>} : memref<184x2xf32, #tpu.memory_space<vmem>>, vector<16x2xf32>,
    %54 = vector.extract_strided_slice %35 {offsets = [6, 0, 0], sizes = [1, 16, 2], strides = [1, 1, 1]} : vector<8x16x2xf32> to vector<1x16x2xf32>
    %55 = vector.shape_cast %54 : vector<1x16x2xf32> to vector<16x2xf32>
    %c127 = arith.constant 127 : index
    %c0_24 = arith.constant 0 : index
    %56 = vector.load %arg13[%c127, %c0_24] : memref<184x2xf32, #tpu.memory_space<vmem>>, vector<16x2xf32>
    tpu.vector_store %arg13[%c127, %c0_24], %55 {strides = array<i32>} : memref<184x2xf32, #tpu.memory_space<vmem>>, vector<16x2xf32>,
    %57 = vector.extract_strided_slice %35 {offsets = [7, 0, 0], sizes = [1, 16, 2], strides = [1, 1, 1]} : vector<8x16x2xf32> to vector<1x16x2xf32>
    %58 = vector.shape_cast %57 : vector<1x16x2xf32> to vector<16x2xf32>
    %c145 = arith.constant 145 : index
    %c0_25 = arith.constant 0 : index
    %59 = vector.load %arg13[%c145, %c0_25] : memref<184x2xf32, #tpu.memory_space<vmem>>, vector<16x2xf32>
    tpu.vector_store %arg13[%c145, %c0_25], %58 {strides = array<i32>} : memref<184x2xf32, #tpu.memory_space<vmem>>, vector<16x2xf32>,
    %c0_i32_26 = arith.constant 0 : i32
    %60 = arith.cmpi sgt, %arg1, %c0_i32_26 : i32
    %c0_27 = arith.constant 0 : index
    %c7 = arith.constant 7 : index
    %c0_28 = arith.constant 0 : index
    %c0_29 = arith.constant 0 : index
    %61 = vector.load %arg3[%c0_27, %c7, %c0_28, %c0_29] : memref<1x8x16x2xf32, #tpu.memory_space<vmem>>, vector<1x1x16x2xf32>
    %62 = vector.shape_cast %61 : vector<1x1x16x2xf32> to vector<16x2xf32>
    %63 = vector.broadcast %20 : vector<1x2xf32> to vector<16x2xf32>
    %64 = arith.mulf %62, %63 : vector<16x2xf32>
    %65 = vector.broadcast %22 : vector<1x2xf32> to vector<16x2xf32>
    %66 = arith.addf %64, %65 : vector<16x2xf32>
    %cst_30 = arith.constant 0.000000e+00 : f32
    %67 = vector.broadcast %cst_30 : f32 to vector<16x2xf32>
    %68 = arith.cmpf oge, %66, %67 : vector<16x2xf32>
    %cst_31 = arith.constant 1.000000e-01 : f32
    %69 = vector.broadcast %cst_31 : f32 to vector<16x2xf32>
    %70 = arith.mulf %69, %66 : vector<16x2xf32>
    %71 = arith.select %68, %66, %70 : vector<16x2xi1>, vector<16x2xf32>
    %cst_32 = arith.constant 0.000000e+00 : f32
    %72 = vector.broadcast %cst_32 : f32 to vector<16x2xf32>
    %73 = arith.select %60, %71, %72 : vector<16x2xf32>
    %c1 = arith.constant 1 : index
    %c0_33 = arith.constant 0 : index
    %74 = vector.load %arg13[%c1, %c0_33] : memref<184x2xf32, #tpu.memory_space<vmem>>, vector<16x2xf32>
    tpu.vector_store %arg13[%c1, %c0_33], %73 {strides = array<i32>} : memref<184x2xf32, #tpu.memory_space<vmem>>, vector<16x2xf32>,
    %c1_i32 = arith.constant 1 : i32
    %75 = arith.cmpi slt, %arg1, %c1_i32 : i32
    %c0_34 = arith.constant 0 : index
    %c0_35 = arith.constant 0 : index
    %c0_36 = arith.constant 0 : index
    %c0_37 = arith.constant 0 : index
    %76 = vector.load %arg4[%c0_34, %c0_35, %c0_36, %c0_37] : memref<1x8x16x2xf32, #tpu.memory_space<vmem>>, vector<1x1x16x2xf32>
    %77 = vector.shape_cast %76 : vector<1x1x16x2xf32> to vector<16x2xf32>
    %78 = vector.broadcast %20 : vector<1x2xf32> to vector<16x2xf32>
    %79 = arith.mulf %77, %78 : vector<16x2xf32>
    %80 = vector.broadcast %22 : vector<1x2xf32> to vector<16x2xf32>
    %81 = arith.addf %79, %80 : vector<16x2xf32>
    %cst_38 = arith.constant 0.000000e+00 : f32
    %82 = vector.broadcast %cst_38 : f32 to vector<16x2xf32>
    %83 = arith.cmpf oge, %81, %82 : vector<16x2xf32>
    %cst_39 = arith.constant 1.000000e-01 : f32
    %84 = vector.broadcast %cst_39 : f32 to vector<16x2xf32>
    %85 = arith.mulf %84, %81 : vector<16x2xf32>
    %86 = arith.select %83, %81, %85 : vector<16x2xi1>, vector<16x2xf32>
    %cst_40 = arith.constant 0.000000e+00 : f32
    %87 = vector.broadcast %cst_40 : f32 to vector<16x2xf32>
    %88 = arith.select %75, %86, %87 : vector<16x2xf32>
    %c163 = arith.constant 163 : index
    %c0_41 = arith.constant 0 : index
    %89 = vector.load %arg13[%c163, %c0_41] : memref<184x2xf32, #tpu.memory_space<vmem>>, vector<16x2xf32>
    tpu.vector_store %arg13[%c163, %c0_41], %88 {strides = array<i32>} : memref<184x2xf32, #tpu.memory_space<vmem>>, vector<16x2xf32>,
    %cst_42 = arith.constant 0.000000e+00 : f32
    %90 = vector.broadcast %cst_42 : f32 to vector<144x4xf32>
    %c0_43 = arith.constant 0 : index
    %c0_44 = arith.constant 0 : index
    %91 = vector.load %arg13[%c0_43, %c0_44] : memref<184x2xf32, #tpu.memory_space<vmem>>, vector<144x2xf32>
    %c0_45 = arith.constant 0 : index
    %c0_46 = arith.constant 0 : index
    %c0_47 = arith.constant 0 : index
    %92 = vector.load %arg9[%c0_45, %c0_46, %c0_47] : memref<9x2x4xf32, #tpu.memory_space<vmem>>, vector<1x2x4xf32>
    %93 = vector.shape_cast %92 : vector<1x2x4xf32> to vector<2x4xf32>
    %cst_48 = arith.constant dense<0.000000e+00> : vector<144x4xf32>
    %94 = tpu.matmul %91, %93, %cst_48 {dimension_numbers = #tpu.dot_dimension_numbers<[1], [0], [0], [1], [0, 0, 1, 1], [], []>} : vector<144x2xf32>, vector<2x4xf32>, vector<144x4xf32> -> vector<144x4xf32>
    %95 = arith.addf %90, %94 : vector<144x4xf32>
    %c1_49 = arith.constant 1 : index
    %c0_50 = arith.constant 0 : index
    %96 = vector.load %arg13[%c1_49, %c0_50] : memref<184x2xf32, #tpu.memory_space<vmem>>, vector<144x2xf32>
    %c1_51 = arith.constant 1 : index
    %c0_52 = arith.constant 0 : index
    %c0_53 = arith.constant 0 : index
    %97 = vector.load %arg9[%c1_51, %c0_52, %c0_53] : memref<9x2x4xf32, #tpu.memory_space<vmem>>, vector<1x2x4xf32>
    %98 = vector.shape_cast %97 : vector<1x2x4xf32> to vector<2x4xf32>
    %cst_54 = arith.constant dense<0.000000e+00> : vector<144x4xf32>
    %99 = tpu.matmul %96, %98, %cst_54 {dimension_numbers = #tpu.dot_dimension_numbers<[1], [0], [0], [1], [0, 0, 1, 1], [], []>} : vector<144x2xf32>, vector<2x4xf32>, vector<144x4xf32> -> vector<144x4xf32>
    %100 = arith.addf %95, %99 : vector<144x4xf32>
    %c2 = arith.constant 2 : index
    %c0_55 = arith.constant 0 : index
    %101 = vector.load %arg13[%c2, %c0_55] : memref<184x2xf32, #tpu.memory_space<vmem>>, vector<144x2xf32>
    %c2_56 = arith.constant 2 : index
    %c0_57 = arith.constant 0 : index
    %c0_58 = arith.constant 0 : index
    %102 = vector.load %arg9[%c2_56, %c0_57, %c0_58] : memref<9x2x4xf32, #tpu.memory_space<vmem>>, vector<1x2x4xf32>
    %103 = vector.shape_cast %102 : vector<1x2x4xf32> to vector<2x4xf32>
    %cst_59 = arith.constant dense<0.000000e+00> : vector<144x4xf32>
    %104 = tpu.matmul %101, %103, %cst_59 {dimension_numbers = #tpu.dot_dimension_numbers<[1], [0], [0], [1], [0, 0, 1, 1], [], []>} : vector<144x2xf32>, vector<2x4xf32>, vector<144x4xf32> -> vector<144x4xf32>
    %105 = arith.addf %100, %104 : vector<144x4xf32>
    %c18 = arith.constant 18 : index
    %c0_60 = arith.constant 0 : index
    %106 = vector.load %arg13[%c18, %c0_60] : memref<184x2xf32, #tpu.memory_space<vmem>>, vector<144x2xf32>
    %c3 = arith.constant 3 : index
    %c0_61 = arith.constant 0 : index
    %c0_62 = arith.constant 0 : index
    %107 = vector.load %arg9[%c3, %c0_61, %c0_62] : memref<9x2x4xf32, #tpu.memory_space<vmem>>, vector<1x2x4xf32>
    %108 = vector.shape_cast %107 : vector<1x2x4xf32> to vector<2x4xf32>
    %cst_63 = arith.constant dense<0.000000e+00> : vector<144x4xf32>
    %109 = tpu.matmul %106, %108, %cst_63 {dimension_numbers = #tpu.dot_dimension_numbers<[1], [0], [0], [1], [0, 0, 1, 1], [], []>} : vector<144x2xf32>, vector<2x4xf32>, vector<144x4xf32> -> vector<144x4xf32>
    %110 = arith.addf %105, %109 : vector<144x4xf32>
    %c19_64 = arith.constant 19 : index
    %c0_65 = arith.constant 0 : index
    %111 = vector.load %arg13[%c19_64, %c0_65] : memref<184x2xf32, #tpu.memory_space<vmem>>, vector<144x2xf32>
    %c4 = arith.constant 4 : index
    %c0_66 = arith.constant 0 : index
    %c0_67 = arith.constant 0 : index
    %112 = vector.load %arg9[%c4, %c0_66, %c0_67] : memref<9x2x4xf32, #tpu.memory_space<vmem>>, vector<1x2x4xf32>
    %113 = vector.shape_cast %112 : vector<1x2x4xf32> to vector<2x4xf32>
    %cst_68 = arith.constant dense<0.000000e+00> : vector<144x4xf32>
    %114 = tpu.matmul %111, %113, %cst_68 {dimension_numbers = #tpu.dot_dimension_numbers<[1], [0], [0], [1], [0, 0, 1, 1], [], []>} : vector<144x2xf32>, vector<2x4xf32>, vector<144x4xf32> -> vector<144x4xf32>
    %115 = arith.addf %110, %114 : vector<144x4xf32>
    %c20 = arith.constant 20 : index
    %c0_69 = arith.constant 0 : index
    %116 = vector.load %arg13[%c20, %c0_69] : memref<184x2xf32, #tpu.memory_space<vmem>>, vector<144x2xf32>
    %c5 = arith.constant 5 : index
    %c0_70 = arith.constant 0 : index
    %c0_71 = arith.constant 0 : index
    %117 = vector.load %arg9[%c5, %c0_70, %c0_71] : memref<9x2x4xf32, #tpu.memory_space<vmem>>, vector<1x2x4xf32>
    %118 = vector.shape_cast %117 : vector<1x2x4xf32> to vector<2x4xf32>
    %cst_72 = arith.constant dense<0.000000e+00> : vector<144x4xf32>
    %119 = tpu.matmul %116, %118, %cst_72 {dimension_numbers = #tpu.dot_dimension_numbers<[1], [0], [0], [1], [0, 0, 1, 1], [], []>} : vector<144x2xf32>, vector<2x4xf32>, vector<144x4xf32> -> vector<144x4xf32>
    %120 = arith.addf %115, %119 : vector<144x4xf32>
    %c36 = arith.constant 36 : index
    %c0_73 = arith.constant 0 : index
    %121 = vector.load %arg13[%c36, %c0_73] : memref<184x2xf32, #tpu.memory_space<vmem>>, vector<144x2xf32>
    %c6 = arith.constant 6 : index
    %c0_74 = arith.constant 0 : index
    %c0_75 = arith.constant 0 : index
    %122 = vector.load %arg9[%c6, %c0_74, %c0_75] : memref<9x2x4xf32, #tpu.memory_space<vmem>>, vector<1x2x4xf32>
    %123 = vector.shape_cast %122 : vector<1x2x4xf32> to vector<2x4xf32>
    %cst_76 = arith.constant dense<0.000000e+00> : vector<144x4xf32>
    %124 = tpu.matmul %121, %123, %cst_76 {dimension_numbers = #tpu.dot_dimension_numbers<[1], [0], [0], [1], [0, 0, 1, 1], [], []>} : vector<144x2xf32>, vector<2x4xf32>, vector<144x4xf32> -> vector<144x4xf32>
    %125 = arith.addf %120, %124 : vector<144x4xf32>
    %c37_77 = arith.constant 37 : index
    %c0_78 = arith.constant 0 : index
    %126 = vector.load %arg13[%c37_77, %c0_78] : memref<184x2xf32, #tpu.memory_space<vmem>>, vector<144x2xf32>
    %c7_79 = arith.constant 7 : index
    %c0_80 = arith.constant 0 : index
    %c0_81 = arith.constant 0 : index
    %127 = vector.load %arg9[%c7_79, %c0_80, %c0_81] : memref<9x2x4xf32, #tpu.memory_space<vmem>>, vector<1x2x4xf32>
    %128 = vector.shape_cast %127 : vector<1x2x4xf32> to vector<2x4xf32>
    %cst_82 = arith.constant dense<0.000000e+00> : vector<144x4xf32>
    %129 = tpu.matmul %126, %128, %cst_82 {dimension_numbers = #tpu.dot_dimension_numbers<[1], [0], [0], [1], [0, 0, 1, 1], [], []>} : vector<144x2xf32>, vector<2x4xf32>, vector<144x4xf32> -> vector<144x4xf32>
    %130 = arith.addf %125, %129 : vector<144x4xf32>
    %c38 = arith.constant 38 : index
    %c0_83 = arith.constant 0 : index
    %131 = vector.load %arg13[%c38, %c0_83] : memref<184x2xf32, #tpu.memory_space<vmem>>, vector<144x2xf32>
    %c8 = arith.constant 8 : index
    %c0_84 = arith.constant 0 : index
    %c0_85 = arith.constant 0 : index
    %132 = vector.load %arg9[%c8, %c0_84, %c0_85] : memref<9x2x4xf32, #tpu.memory_space<vmem>>, vector<1x2x4xf32>
    %133 = vector.shape_cast %132 : vector<1x2x4xf32> to vector<2x4xf32>
    %cst_86 = arith.constant dense<0.000000e+00> : vector<144x4xf32>
    %134 = tpu.matmul %131, %133, %cst_86 {dimension_numbers = #tpu.dot_dimension_numbers<[1], [0], [0], [1], [0, 0, 1, 1], [], []>} : vector<144x2xf32>, vector<2x4xf32>, vector<144x4xf32> -> vector<144x4xf32>
    %135 = arith.addf %130, %134 : vector<144x4xf32>
    %cst_87 = arith.constant 0.000000e+00 : f32
    %136 = vector.broadcast %cst_87 : f32 to vector<1x4xf32>
    %cst_88 = arith.constant 0.000000e+00 : f32
    %137 = vector.broadcast %cst_88 : f32 to vector<1x4xf32>
    %138 = vector.extract_strided_slice %135 {offsets = [0, 0], sizes = [16, 4], strides = [1, 1]} : vector<144x4xf32> to vector<16x4xf32>
    %c0_89 = arith.constant 0 : index
    %c0_90 = arith.constant 0 : index
    %c0_91 = arith.constant 0 : index
    %c0_92 = arith.constant 0 : index
    %139 = vector.load %arg10[%c0_89, %c0_90, %c0_91, %c0_92] : memref<1x8x16x4xf32, #tpu.memory_space<vmem>>, vector<1x1x16x4xf32>
    %140 = vector.shape_cast %139 : vector<1x1x16x4xf32> to vector<16x4xf32>
    %141 = vector.shape_cast %138 : vector<16x4xf32> to vector<1x1x16x4xf32>
    tpu.vector_store %arg10[%c0_89, %c0_90, %c0_91, %c0_92], %141 {strides = array<i32>} : memref<1x8x16x4xf32, #tpu.memory_space<vmem>>, vector<1x1x16x4xf32>,
    %cst_93 = arith.constant dense<0.000000e+00> : vector<4xf32>
    %142 = vector.multi_reduction <add>, %138, %cst_93 [0] : vector<16x4xf32> to vector<4xf32>
    %143 = vector.shape_cast %142 : vector<4xf32> to vector<1x4xf32>
    %144 = arith.addf %136, %143 : vector<1x4xf32>
    %145 = arith.mulf %138, %138 : vector<16x4xf32>
    %cst_94 = arith.constant dense<0.000000e+00> : vector<4xf32>
    %146 = vector.multi_reduction <add>, %145, %cst_94 [0] : vector<16x4xf32> to vector<4xf32>
    %147 = vector.shape_cast %146 : vector<4xf32> to vector<1x4xf32>
    %148 = arith.addf %137, %147 : vector<1x4xf32>
    %149 = vector.extract_strided_slice %135 {offsets = [18, 0], sizes = [16, 4], strides = [1, 1]} : vector<144x4xf32> to vector<16x4xf32>
    %c0_95 = arith.constant 0 : index
    %c1_96 = arith.constant 1 : index
    %c0_97 = arith.constant 0 : index
    %c0_98 = arith.constant 0 : index
    %150 = vector.load %arg10[%c0_95, %c1_96, %c0_97, %c0_98] : memref<1x8x16x4xf32, #tpu.memory_space<vmem>>, vector<1x1x16x4xf32>
    %151 = vector.shape_cast %150 : vector<1x1x16x4xf32> to vector<16x4xf32>
    %152 = vector.shape_cast %149 : vector<16x4xf32> to vector<1x1x16x4xf32>
    tpu.vector_store %arg10[%c0_95, %c1_96, %c0_97, %c0_98], %152 {strides = array<i32>} : memref<1x8x16x4xf32, #tpu.memory_space<vmem>>, vector<1x1x16x4xf32>,
    %cst_99 = arith.constant dense<0.000000e+00> : vector<4xf32>
    %153 = vector.multi_reduction <add>, %149, %cst_99 [0] : vector<16x4xf32> to vector<4xf32>
    %154 = vector.shape_cast %153 : vector<4xf32> to vector<1x4xf32>
    %155 = arith.addf %144, %154 : vector<1x4xf32>
    %156 = arith.mulf %149, %149 : vector<16x4xf32>
    %cst_100 = arith.constant dense<0.000000e+00> : vector<4xf32>
    %157 = vector.multi_reduction <add>, %156, %cst_100 [0] : vector<16x4xf32> to vector<4xf32>
    %158 = vector.shape_cast %157 : vector<4xf32> to vector<1x4xf32>
    %159 = arith.addf %148, %158 : vector<1x4xf32>
    %160 = vector.extract_strided_slice %135 {offsets = [36, 0], sizes = [16, 4], strides = [1, 1]} : vector<144x4xf32> to vector<16x4xf32>
    %c0_101 = arith.constant 0 : index
    %c2_102 = arith.constant 2 : index
    %c0_103 = arith.constant 0 : index
    %c0_104 = arith.constant 0 : index
    %161 = vector.load %arg10[%c0_101, %c2_102, %c0_103, %c0_104] : memref<1x8x16x4xf32, #tpu.memory_space<vmem>>, vector<1x1x16x4xf32>
    %162 = vector.shape_cast %161 : vector<1x1x16x4xf32> to vector<16x4xf32>
    %163 = vector.shape_cast %160 : vector<16x4xf32> to vector<1x1x16x4xf32>
    tpu.vector_store %arg10[%c0_101, %c2_102, %c0_103, %c0_104], %163 {strides = array<i32>} : memref<1x8x16x4xf32, #tpu.memory_space<vmem>>, vector<1x1x16x4xf32>,
    %cst_105 = arith.constant dense<0.000000e+00> : vector<4xf32>
    %164 = vector.multi_reduction <add>, %160, %cst_105 [0] : vector<16x4xf32> to vector<4xf32>
    %165 = vector.shape_cast %164 : vector<4xf32> to vector<1x4xf32>
    %166 = arith.addf %155, %165 : vector<1x4xf32>
    %167 = arith.mulf %160, %160 : vector<16x4xf32>
    %cst_106 = arith.constant dense<0.000000e+00> : vector<4xf32>
    %168 = vector.multi_reduction <add>, %167, %cst_106 [0] : vector<16x4xf32> to vector<4xf32>
    %169 = vector.shape_cast %168 : vector<4xf32> to vector<1x4xf32>
    %170 = arith.addf %159, %169 : vector<1x4xf32>
    %171 = vector.extract_strided_slice %135 {offsets = [54, 0], sizes = [16, 4], strides = [1, 1]} : vector<144x4xf32> to vector<16x4xf32>
    %c0_107 = arith.constant 0 : index
    %c3_108 = arith.constant 3 : index
    %c0_109 = arith.constant 0 : index
    %c0_110 = arith.constant 0 : index
    %172 = vector.load %arg10[%c0_107, %c3_108, %c0_109, %c0_110] : memref<1x8x16x4xf32, #tpu.memory_space<vmem>>, vector<1x1x16x4xf32>
    %173 = vector.shape_cast %172 : vector<1x1x16x4xf32> to vector<16x4xf32>
    %174 = vector.shape_cast %171 : vector<16x4xf32> to vector<1x1x16x4xf32>
    tpu.vector_store %arg10[%c0_107, %c3_108, %c0_109, %c0_110], %174 {strides = array<i32>} : memref<1x8x16x4xf32, #tpu.memory_space<vmem>>, vector<1x1x16x4xf32>,
    %cst_111 = arith.constant dense<0.000000e+00> : vector<4xf32>
    %175 = vector.multi_reduction <add>, %171, %cst_111 [0] : vector<16x4xf32> to vector<4xf32>
    %176 = vector.shape_cast %175 : vector<4xf32> to vector<1x4xf32>
    %177 = arith.addf %166, %176 : vector<1x4xf32>
    %178 = arith.mulf %171, %171 : vector<16x4xf32>
    %cst_112 = arith.constant dense<0.000000e+00> : vector<4xf32>
    %179 = vector.multi_reduction <add>, %178, %cst_112 [0] : vector<16x4xf32> to vector<4xf32>
    %180 = vector.shape_cast %179 : vector<4xf32> to vector<1x4xf32>
    %181 = arith.addf %170, %180 : vector<1x4xf32>
    %182 = vector.extract_strided_slice %135 {offsets = [72, 0], sizes = [16, 4], strides = [1, 1]} : vector<144x4xf32> to vector<16x4xf32>
    %c0_113 = arith.constant 0 : index
    %c4_114 = arith.constant 4 : index
    %c0_115 = arith.constant 0 : index
    %c0_116 = arith.constant 0 : index
    %183 = vector.load %arg10[%c0_113, %c4_114, %c0_115, %c0_116] : memref<1x8x16x4xf32, #tpu.memory_space<vmem>>, vector<1x1x16x4xf32>
    %184 = vector.shape_cast %183 : vector<1x1x16x4xf32> to vector<16x4xf32>
    %185 = vector.shape_cast %182 : vector<16x4xf32> to vector<1x1x16x4xf32>
    tpu.vector_store %arg10[%c0_113, %c4_114, %c0_115, %c0_116], %185 {strides = array<i32>} : memref<1x8x16x4xf32, #tpu.memory_space<vmem>>, vector<1x1x16x4xf32>,
    %cst_117 = arith.constant dense<0.000000e+00> : vector<4xf32>
    %186 = vector.multi_reduction <add>, %182, %cst_117 [0] : vector<16x4xf32> to vector<4xf32>
    %187 = vector.shape_cast %186 : vector<4xf32> to vector<1x4xf32>
    %188 = arith.addf %177, %187 : vector<1x4xf32>
    %189 = arith.mulf %182, %182 : vector<16x4xf32>
    %cst_118 = arith.constant dense<0.000000e+00> : vector<4xf32>
    %190 = vector.multi_reduction <add>, %189, %cst_118 [0] : vector<16x4xf32> to vector<4xf32>
    %191 = vector.shape_cast %190 : vector<4xf32> to vector<1x4xf32>
    %192 = arith.addf %181, %191 : vector<1x4xf32>
    %193 = vector.extract_strided_slice %135 {offsets = [90, 0], sizes = [16, 4], strides = [1, 1]} : vector<144x4xf32> to vector<16x4xf32>
    %c0_119 = arith.constant 0 : index
    %c5_120 = arith.constant 5 : index
    %c0_121 = arith.constant 0 : index
    %c0_122 = arith.constant 0 : index
    %194 = vector.load %arg10[%c0_119, %c5_120, %c0_121, %c0_122] : memref<1x8x16x4xf32, #tpu.memory_space<vmem>>, vector<1x1x16x4xf32>
    %195 = vector.shape_cast %194 : vector<1x1x16x4xf32> to vector<16x4xf32>
    %196 = vector.shape_cast %193 : vector<16x4xf32> to vector<1x1x16x4xf32>
    tpu.vector_store %arg10[%c0_119, %c5_120, %c0_121, %c0_122], %196 {strides = array<i32>} : memref<1x8x16x4xf32, #tpu.memory_space<vmem>>, vector<1x1x16x4xf32>,
    %cst_123 = arith.constant dense<0.000000e+00> : vector<4xf32>
    %197 = vector.multi_reduction <add>, %193, %cst_123 [0] : vector<16x4xf32> to vector<4xf32>
    %198 = vector.shape_cast %197 : vector<4xf32> to vector<1x4xf32>
    %199 = arith.addf %188, %198 : vector<1x4xf32>
    %200 = arith.mulf %193, %193 : vector<16x4xf32>
    %cst_124 = arith.constant dense<0.000000e+00> : vector<4xf32>
    %201 = vector.multi_reduction <add>, %200, %cst_124 [0] : vector<16x4xf32> to vector<4xf32>
    %202 = vector.shape_cast %201 : vector<4xf32> to vector<1x4xf32>
    %203 = arith.addf %192, %202 : vector<1x4xf32>
    %204 = vector.extract_strided_slice %135 {offsets = [108, 0], sizes = [16, 4], strides = [1, 1]} : vector<144x4xf32> to vector<16x4xf32>
    %c0_125 = arith.constant 0 : index
    %c6_126 = arith.constant 6 : index
    %c0_127 = arith.constant 0 : index
    %c0_128 = arith.constant 0 : index
    %205 = vector.load %arg10[%c0_125, %c6_126, %c0_127, %c0_128] : memref<1x8x16x4xf32, #tpu.memory_space<vmem>>, vector<1x1x16x4xf32>
    %206 = vector.shape_cast %205 : vector<1x1x16x4xf32> to vector<16x4xf32>
    %207 = vector.shape_cast %204 : vector<16x4xf32> to vector<1x1x16x4xf32>
    tpu.vector_store %arg10[%c0_125, %c6_126, %c0_127, %c0_128], %207 {strides = array<i32>} : memref<1x8x16x4xf32, #tpu.memory_space<vmem>>, vector<1x1x16x4xf32>,
    %cst_129 = arith.constant dense<0.000000e+00> : vector<4xf32>
    %208 = vector.multi_reduction <add>, %204, %cst_129 [0] : vector<16x4xf32> to vector<4xf32>
    %209 = vector.shape_cast %208 : vector<4xf32> to vector<1x4xf32>
    %210 = arith.addf %199, %209 : vector<1x4xf32>
    %211 = arith.mulf %204, %204 : vector<16x4xf32>
    %cst_130 = arith.constant dense<0.000000e+00> : vector<4xf32>
    %212 = vector.multi_reduction <add>, %211, %cst_130 [0] : vector<16x4xf32> to vector<4xf32>
    %213 = vector.shape_cast %212 : vector<4xf32> to vector<1x4xf32>
    %214 = arith.addf %203, %213 : vector<1x4xf32>
    %215 = vector.extract_strided_slice %135 {offsets = [126, 0], sizes = [16, 4], strides = [1, 1]} : vector<144x4xf32> to vector<16x4xf32>
    %c0_131 = arith.constant 0 : index
    %c7_132 = arith.constant 7 : index
    %c0_133 = arith.constant 0 : index
    %c0_134 = arith.constant 0 : index
    %216 = vector.load %arg10[%c0_131, %c7_132, %c0_133, %c0_134] : memref<1x8x16x4xf32, #tpu.memory_space<vmem>>, vector<1x1x16x4xf32>
    %217 = vector.shape_cast %216 : vector<1x1x16x4xf32> to vector<16x4xf32>
    %218 = vector.shape_cast %215 : vector<16x4xf32> to vector<1x1x16x4xf32>
    tpu.vector_store %arg10[%c0_131, %c7_132, %c0_133, %c0_134], %218 {strides = array<i32>} : memref<1x8x16x4xf32, #tpu.memory_space<vmem>>, vector<1x1x16x4xf32>,
    %cst_135 = arith.constant dense<0.000000e+00> : vector<4xf32>
    %219 = vector.multi_reduction <add>, %215, %cst_135 [0] : vector<16x4xf32> to vector<4xf32>
    %220 = vector.shape_cast %219 : vector<4xf32> to vector<1x4xf32>
    %221 = arith.addf %210, %220 : vector<1x4xf32>
    %222 = arith.mulf %215, %215 : vector<16x4xf32>
    %cst_136 = arith.constant dense<0.000000e+00> : vector<4xf32>
    %223 = vector.multi_reduction <add>, %222, %cst_136 [0] : vector<16x4xf32> to vector<4xf32>
    %224 = vector.shape_cast %223 : vector<4xf32> to vector<1x4xf32>
    %225 = arith.addf %214, %224 : vector<1x4xf32>
    %c0_137 = arith.constant 0 : index
    %c0_138 = arith.constant 0 : index
    %226 = vector.load %arg11[%c0_137, %c0_138] : memref<1x4xf32, #tpu.memory_space<vmem>>, vector<1x4xf32>
    %227 = arith.addf %226, %221 : vector<1x4xf32>
    %c0_139 = arith.constant 0 : index
    %c0_140 = arith.constant 0 : index
    %228 = vector.load %arg11[%c0_139, %c0_140] : memref<1x4xf32, #tpu.memory_space<vmem>>, vector<1x4xf32>
    tpu.vector_store %arg11[%c0_139, %c0_140], %227 {strides = array<i32>} : memref<1x4xf32, #tpu.memory_space<vmem>>, vector<1x4xf32>,
    %c0_141 = arith.constant 0 : index
    %c0_142 = arith.constant 0 : index
    %229 = vector.load %arg12[%c0_141, %c0_142] : memref<1x4xf32, #tpu.memory_space<vmem>>, vector<1x4xf32>
    %230 = arith.addf %229, %225 : vector<1x4xf32>
    %c0_143 = arith.constant 0 : index
    %c0_144 = arith.constant 0 : index
    %231 = vector.load %arg12[%c0_143, %c0_144] : memref<1x4xf32, #tpu.memory_space<vmem>>, vector<1x4xf32>
    tpu.vector_store %arg12[%c0_143, %c0_144], %230 {strides = array<i32>} : memref<1x4xf32, #tpu.memory_space<vmem>>, vector<1x4xf32>,
    return
  }
  func.func @transform_0(%arg0: i32, %arg1: i32) -> (i32, i32, i32, i32) {
    %c0_i32 = arith.constant 0 : i32
    %c0_i32_0 = arith.constant 0 : i32
    %c0_i32_1 = arith.constant 0 : i32
    return %arg0, %arg1, %c0_i32, %c0_i32_0 : i32, i32, i32, i32
  }
  func.func @transform_1(%arg0: i32, %arg1: i32) -> (i32, i32, i32, i32) {
    %c1_i32 = arith.constant 1 : i32
    %0 = arith.muli %arg1, %c1_i32 : i32
    %c1_i32_0 = arith.constant 1 : i32
    %1 = arith.subi %0, %c1_i32_0 : i32
    %c0_i32 = arith.constant 0 : i32
    %2 = arith.maxsi %1, %c0_i32 : i32
    %c0_i32_1 = arith.constant 0 : i32
    %c0_i32_2 = arith.constant 0 : i32
    %c0_i32_3 = arith.constant 0 : i32
    return %arg0, %2, %c0_i32_1, %c0_i32_2 : i32, i32, i32, i32
  }
  func.func @transform_2(%arg0: i32, %arg1: i32) -> (i32, i32, i32, i32) {
    %c1_i32 = arith.constant 1 : i32
    %0 = arith.addi %arg1, %c1_i32 : i32
    %c1_i32_0 = arith.constant 1 : i32
    %1 = arith.muli %0, %c1_i32_0 : i32
    %c1_i32_1 = arith.constant 1 : i32
    %2 = arith.minsi %1, %c1_i32_1 : i32
    %c0_i32 = arith.constant 0 : i32
    %c0_i32_2 = arith.constant 0 : i32
    %c0_i32_3 = arith.constant 0 : i32
    return %arg0, %2, %c0_i32, %c0_i32_2 : i32, i32, i32, i32
  }
  func.func @transform_3(%arg0: i32, %arg1: i32) -> (i32, i32) {
    %c0_i32 = arith.constant 0 : i32
    %c0_i32_0 = arith.constant 0 : i32
    %c0_i32_1 = arith.constant 0 : i32
    return %c0_i32, %c0_i32_0 : i32, i32
  }
  func.func @transform_4(%arg0: i32, %arg1: i32) -> (i32, i32) {
    %c0_i32 = arith.constant 0 : i32
    %c0_i32_0 = arith.constant 0 : i32
    %c0_i32_1 = arith.constant 0 : i32
    return %c0_i32, %c0_i32_0 : i32, i32
  }
  func.func @transform_5(%arg0: i32, %arg1: i32) -> (i32, i32) {
    %c0_i32 = arith.constant 0 : i32
    %c0_i32_0 = arith.constant 0 : i32
    %c0_i32_1 = arith.constant 0 : i32
    return %c0_i32, %c0_i32_0 : i32, i32
  }
  func.func @transform_6(%arg0: i32, %arg1: i32) -> (i32, i32) {
    %c0_i32 = arith.constant 0 : i32
    %c0_i32_0 = arith.constant 0 : i32
    %c0_i32_1 = arith.constant 0 : i32
    return %c0_i32, %c0_i32_0 : i32, i32
  }
  func.func @transform_7(%arg0: i32, %arg1: i32) -> (i32, i32, i32) {
    %c0_i32 = arith.constant 0 : i32
    %c0_i32_0 = arith.constant 0 : i32
    %c0_i32_1 = arith.constant 0 : i32
    %c0_i32_2 = arith.constant 0 : i32
    return %c0_i32, %c0_i32_0, %c0_i32_1 : i32, i32, i32
  }
  func.func @transform_8(%arg0: i32, %arg1: i32) -> (i32, i32, i32, i32) {
    %c0_i32 = arith.constant 0 : i32
    %c0_i32_0 = arith.constant 0 : i32
    %c0_i32_1 = arith.constant 0 : i32
    return %arg0, %arg1, %c0_i32, %c0_i32_0 : i32, i32, i32, i32
  }
  func.func @transform_9(%arg0: i32, %arg1: i32) -> (i32, i32) {
    %c0_i32 = arith.constant 0 : i32
    %c0_i32_0 = arith.constant 0 : i32
    %c0_i32_1 = arith.constant 0 : i32
    return %c0_i32, %c0_i32_0 : i32, i32
  }
  func.func @transform_10(%arg0: i32, %arg1: i32) -> (i32, i32) {
    %c0_i32 = arith.constant 0 : i32
    %c0_i32_0 = arith.constant 0 : i32
    %c0_i32_1 = arith.constant 0 : i32
    return %c0_i32, %c0_i32_0 : i32, i32
  }
}

</mosaic_0001>

<llo_original>
// kernel: residual_block_forward.6
$region0: #{residual_block_forward.6}
  #allocation0 [shape = 'u32[]', space=smem, size = 0x4, offset = 0x4, fixed_abs, tag = 'smem constant byte address 0x4 - core index']
  #allocation1 [shape = 'u32[144,128]{1,0:T(1,128)}', space=vmem, size = 0x12000, scoped, tag = 'internal scratch']
  %s0 = inlined_call_operand.vmem [shape: f32[512,4], index: 0, kind: input, shape index: {}]
  %s1 = inlined_call_operand.vmem [shape: f32[4,2], index: 1, kind: input, shape index: {}]
  %s2 = inlined_call_operand.vmem [shape: f32[512,2], index: 2, kind: output, shape index: {0}]
  %s3 = inlined_call_operand.vmem [shape: f32[1,2], index: 3, kind: output, shape index: {1}]
  %s4 = inlined_call_operand.vmem [shape: f32[1,2], index: 4, kind: output, shape index: {2}]
  %5 = xla_tuple %s2, %s3, %s4
  %s6 = sld [smem:[#allocation0]]
  $region61: #{residual_block_forward.6} parent=0
    _
  %s8 = ssub.s32 1, %s6
  %s9 = scalar_select 0, %s8, %s6
  loop: start=0, step=1, limit=6
  $region2: #{residual_block_forward.6} parent=0 // loop_pre_header
    _
  $region3: #{residual_block_forward.6} parent=0 // loop_header
    %s11 = sphi 0, %s15
    %p12 = scmp.ge.s32.totalorder %s11, 6
    %s21 = sphi 0, %s23
    %s24 = sphi 0, %s21
    %s25 = sphi 0, %s24
    %s41 = sphi 0, %s25
    %s45 = sphi 0, %s45
    %s47 = sphi 0, %s45
    %s48 = sphi 0, %s47
    %s62 = sphi 0, %s48
    %s68 = sphi 0, %s70
    %s71 = sphi 0, %s68
    %s72 = sphi 0, %s71
    %s88 = sphi 0, %s72
    %s92 = sphi 0, %s92
    %s94 = sphi 0, %s92
    %s95 = sphi 0, %s94
    %s109 = sphi 0, %s95
    %s113 = sphi 0, %s113
    %s115 = sphi 0, %s113
    %s116 = sphi 0, %s115
    %s130 = sphi 0, %s116
  $region4: #{residual_block_forward.6} parent=0 // loop_header_branch
    %14 = sbr.rel (%p12) target = $region8
  $region5: #{residual_block_forward.6} parent=0 // loop_body
    %s16 = ssub.s32 %s11, 1
    %s17 = ssub.s32 %s11, 2
    %s18 = sadd.s32 %s11, 1
    %s19 = ssub.s32 %s11, %s18
    %p20 = scmp.eq.s32.totalorder %s19, 0
    %s22 = sadd.s32 %s21, 1
    %s23 = scalar_select %p20, %s21, %s22
    %p26 = pneg %p20
    %p27 = scmp.eq.s32.totalorder %s11, 3
    %p28 = por %p26, %p27
    %p29 = scmp.ne.s32.totalorder %s21, %s24
    %p30 = scmp.eq.s32.totalorder %s11, 0
    %p31 = por %p29, %p30
    %p32 = scmp.ne.s32.totalorder %s21, %s24
    %p33 = scmp.eq.s32.totalorder %s16, 3
    %p34 = por %p32, %p33
    %p35 = scmp.ne.s32.totalorder %s24, %s25
    %p36 = scmp.eq.s32.totalorder %s16, 0
    %p37 = por %p35, %p36
    %p38 = scmp.ne.s32.totalorder %s24, %s25
    %p39 = scmp.eq.s32.totalorder %s17, 3
    %p40 = por %p38, %p39
    %p42 = scmp.ne.s32.totalorder %s25, %s41
    %p43 = scmp.eq.s32.totalorder %s17, 0
    %p44 = por %p42, %p43
    %s46 = sadd.s32 %s45, 1
    %p49 = scmp.eq.s32.totalorder %s11, 3
    %p50 = scmp.ne.s32.totalorder %s45, %s47
    %p51 = scmp.eq.s32.totalorder %s11, 0
    %p52 = por %p50, %p51
    %p53 = scmp.ne.s32.totalorder %s45, %s47
    %p54 = scmp.eq.s32.totalorder %s16, 3
    %p55 = por %p53, %p54
    %p56 = scmp.ne.s32.totalorder %s47, %s48
    %p57 = scmp.eq.s32.totalorder %s16, 0
    %p58 = por %p56, %p57
    %p59 = scmp.ne.s32.totalorder %s47, %s48
    %p60 = scmp.eq.s32.totalorder %s17, 3
    %p61 = por %p59, %p60
    %p63 = scmp.ne.s32.totalorder %s48, %s62
    %p64 = scmp.eq.s32.totalorder %s17, 0
    %p65 = por %p63, %p64
    %s66 = ssub.s32 %s11, %s18
    %p67 = scmp.eq.s32.totalorder %s66, 0
    %s69 = sadd.s32 %s68, 1
    %s70 = scalar_select %p67, %s68, %s69
    %p73 = pneg %p67
    %p74 = scmp.eq.s32.totalorder %s11, 3
    %p75 = por %p73, %p74
    %p76 = scmp.ne.s32.totalorder %s68, %s71
    %p77 = scmp.eq.s32.totalorder %s11, 0
    %p78 = por %p76, %p77
    %p79 = scmp.ne.s32.totalorder %s68, %s71
    %p80 = scmp.eq.s32.totalorder %s16, 3
    %p81 = por %p79, %p80
    %p82 = scmp.ne.s32.totalorder %s71, %s72
    %p83 = scmp.eq.s32.totalorder %s16, 0
    %p84 = por %p82, %p83
    %p85 = scmp.ne.s32.totalorder %s71, %s72
    %p86 = scmp.eq.s32.totalorder %s17, 3
    %p87 = por %p85, %p86
    %p89 = scmp.ne.s32.totalorder %s72, %s88
    %p90 = scmp.eq.s32.totalorder %s17, 0
    %p91 = por %p89, %p90
    %s93 = sadd.s32 %s92, 1
    %p96 = scmp.eq.s32.totalorder %s11, 3
    %p97 = scmp.ne.s32.totalorder %s92, %s94
    %p98 = scmp.eq.s32.totalorder %s11, 0
    %p99 = por %p97, %p98
    %p100 = scmp.ne.s32.totalorder %s92, %s94
    %p101 = scmp.eq.s32.totalorder %s16, 3
    %p102 = por %p100, %p101
    %p103 = scmp.ne.s32.totalorder %s94, %s95
    %p104 = scmp.eq.s32.totalorder %s16, 0
    %p105 = por %p103, %p104
    %p106 = scmp.ne.s32.totalorder %s94, %s95
    %p107 = scmp.eq.s32.totalorder %s17, 3
    %p108 = por %p106, %p107
    %p110 = scmp.ne.s32.totalorder %s95, %s109
    %p111 = scmp.eq.s32.totalorder %s17, 0
    %p112 = por %p110, %p111
    %s114 = sadd.s32 %s113, 1
    %p117 = scmp.eq.s32.totalorder %s11, 3
    %p118 = scmp.ne.s32.totalorder %s113, %s115
    %p119 = scmp.eq.s32.totalorder %s11, 0
    %p120 = por %p118, %p119
    %p121 = scmp.ne.s32.totalorder %s113, %s115
    %p122 = scmp.eq.s32.totalorder %s16, 3
    %p123 = por %p121, %p122
    %p124 = scmp.ne.s32.totalorder %s115, %s116
    %p125 = scmp.eq.s32.totalorder %s16, 0
    %p126 = por %p124, %p125
    %p127 = scmp.ne.s32.totalorder %s115, %s116
    %p128 = scmp.eq.s32.totalorder %s17, 3
    %p129 = por %p127, %p128
    %p131 = scmp.ne.s32.totalorder %s116, %s130
    %p132 = scmp.eq.s32.totalorder %s17, 0
    %p133 = por %p131, %p132
    %p134 = scmp.le.s32.totalorder 1, %s11
    %p135 = scmp.lt.s32.totalorder %s11, 5
    %p136 = pnand %p134, %p135
    %p137 = pneg %p136
    // Predicated region
    $region9: #{residual_block_forward.6} parent=5 // pred_check
      _
    $region10: #{residual_block_forward.6} parent=5 // pred_check_branch
      %139 = sbr.rel (%p136) target = $region12
    $region11: #{residual_block_forward.6} parent=5 // pred_region
      %s140 = ssub.s32 %s11, 1
      // Predicated region
      $region13: #{residual_block_forward.6} parent=11 // pred_check
        %p141 = pneg %p58
      $region14: #{residual_block_forward.6} parent=11 // pred_check_branch
        %143 = sbr.rel (%p141) target = $region16
      $region15: #{residual_block_forward.6} parent=11 // pred_region
        _
      $region16: #{residual_block_forward.6} parent=11 // pred_fallthru
        _
    $region12: #{residual_block_forward.6} parent=5 // pred_fallthru
      _
    %p144 = scmp.lt.s32.totalorder %s11, 4
    // Predicated region
    $region17: #{residual_block_forward.6} parent=5 // pred_check
      %p145 = pneg %p144
    $region18: #{residual_block_forward.6} parent=5 // pred_check_branch
      %147 = sbr.rel (%p145) target = $region20
    $region19: #{residual_block_forward.6} parent=5 // pred_region
      // Predicated region
      $region21: #{residual_block_forward.6} parent=19 // pred_check
        %p148 = pneg %p31
      $region22: #{residual_block_forward.6} parent=19 // pred_check_branch
        %150 = sbr.rel (%p148) target = $region24
      $region23: #{residual_block_forward.6} parent=19 // pred_region
        %s151 = smul.u32 16, %s11
        %p152 = scmp.lt.s32.totalorder %s151, 63
        %s153 = scalar_select %p152, %s151, 63
        %s154 = smul.addr %s153, 8
        %s155 = scalar_lea.vmem %s0, %s154
        %s156 = smul.u32 16, %s11
      $region24: #{residual_block_forward.6} parent=19 // pred_fallthru
        _
    $region20: #{residual_block_forward.6} parent=5 // pred_fallthru
      _
    %p157 = scmp.le.s32.totalorder 1, %s11
    %p158 = scmp.lt.s32.totalorder %s11, 5
    %p159 = pnand %p157, %p158
    %p160 = pneg %p159
    // Predicated region
    $region25: #{residual_block_forward.6} parent=5 // pred_check
      _
    $region26: #{residual_block_forward.6} parent=5 // pred_check_branch
      %162 = sbr.rel (%p159) target = $region28
    $region27: #{residual_block_forward.6} parent=5 // pred_region
      %s163 = ssub.s32 %s11, 1
      %s164 = smul.u32 16, %s16
      %p165 = scmp.lt.s32.totalorder %s164, 63
      %s166 = scalar_select %p165, %s164, 63
      %s167 = smul.addr %s166, 8
      %s168 = scalar_lea.vmem %s0, %s167
      %p169 = pneg %p37
      %p170 = pneg %p34
      %p171 = pneg %p58
      %p172 = pneg %p55
      %p173 = pneg %p84
      %p174 = pneg %p81
      %s175 = smul.u32 16, %s16
      %p176 = scmp.lt.s32.totalorder %s175, 63
      %s177 = scalar_select %p176, %s175, 63
      %s178 = smul.addr %s177, 8
      %s179 = scalar_lea.vmem %s2, %s178
      %p180 = pneg %p105
      %p181 = pneg %p102
      %p182 = pneg %p126
      %p183 = pneg %p123
      %s184 = smul.u32 16, %s16
      %p185 = scmp.lt.s32.totalorder %s184, 63
      %s186 = scalar_select %p185, %s184, 63
      %s187 = smul.addr %s186, 8
      %s188 = scalar_lea.vmem %s0, %s187
      %s189 = smul.u32 16, %s16
      %s190 = smul.u32 16, %s16
      %p191 = scmp.lt.s32.totalorder %s190, 63
      %s192 = scalar_select %p191, %s190, 63
      %s193 = smul.addr %s192, 8
      %s194 = scalar_lea.vmem %s2, %s193
      %s195 = smul.u32 16, %s16
      %v196 = vld [vmem:[%s188] sm:$0xff]
      %v197 = vld [vmem:[%s188 + $0x8] sm:$0xff]
      %v198 = vld [vmem:[%s188 + $0x10] sm:$0xff]
      %v199 = vld [vmem:[%s188 + $0x18] sm:$0xff]
      %v200 = vld [vmem:[%s188 + $0x20] sm:$0xff]
      %v201 = vld [vmem:[%s188 + $0x28] sm:$0xff]
      %v202 = vld [vmem:[%s188 + $0x30] sm:$0xff]
      %v203 = vld [vmem:[%s188 + $0x38] sm:$0xff]
      %v204 = vld [vmem:[%s188 + $0x40] sm:$0xff]
      %v205 = vld [vmem:[%s188 + $0x48] sm:$0xff]
      %v206 = vld [vmem:[%s188 + $0x50] sm:$0xff]
      %v207 = vld [vmem:[%s188 + $0x58] sm:$0xff]
      %v208 = vld [vmem:[%s188 + $0x60] sm:$0xff]
      %v209 = vld [vmem:[%s188 + $0x68] sm:$0xff]
      %v210 = vld [vmem:[%s188 + $0x70] sm:$0xff]
      %v211 = vld [vmem:[%s188 + $0x78] sm:$0xff]
      %v212 = vld [vmem:[%s1] sm:$0xf]
      %vm213 = vcmask 31744
      %v215 = vsel %vm213, %v196, 0
      %v218 = vsel %vm213, %v197, 0
      %v221 = vsel %vm213, %v198, 0
      %v224 = vsel %vm213, %v199, 0
      %v227 = vsel %vm213, %v200, 0
      %v230 = vsel %vm213, %v201, 0
      %v233 = vsel %vm213, %v202, 0
      %v236 = vsel %vm213, %v203, 0
      %v239 = vsel %vm213, %v204, 0
      %v242 = vsel %vm213, %v205, 0
      %v245 = vsel %vm213, %v206, 0
      %v248 = vsel %vm213, %v207, 0
      %v251 = vsel %vm213, %v208, 0
      %v254 = vsel %vm213, %v209, 0
      %v257 = vsel %vm213, %v210, 0
      %v260 = vsel %vm213, %v211, 0
      %vm262 = vcmask 1043456
      %v264 = vsel %vm262, %v212, 0
      %266 = vmatprep.subr.mxu0 0.0
      %267 = vmatpush1.msra.mxu0 %v264
      %268 = vmatprep.subr.mxu0 0.0
      %269 = vmatpush1.msra.mxu0 0.0
      %270 = vmatprep.subr.mxu0 0.0
      %271 = vmatpush1.msra.mxu0 0.0
      %272 = vmatprep.subr.mxu0 0.0
      %273 = vmatpush1.msra.mxu0 0.0
      %274 = vmatprep.subr.mxu0 0.0
      %275 = vmatpush1.msra.mxu0 0.0
      %276 = vmatprep.subr.mxu0 0.0
      %277 = vmatpush1.msra.mxu0 0.0
      %278 = vmatprep.subr.mxu0 0.0
      %279 = vmatpush1.msra.mxu0 0.0
      %280 = vmatprep.subr.mxu0 0.0
      %281 = vmatpush1.msra.mxu0 0.0
      %282 = vmatprep.subr.mxu0 0.0
      %283 = vmatpush1.msra.mxu0 0.0
      %284 = vmatprep.subr.mxu0 0.0
      %285 = vmatpush1.msra.mxu0 0.0
      %286 = vmatprep.subr.mxu0 0.0
      %287 = vmatpush1.msra.mxu0 0.0
      %288 = vmatprep.subr.mxu0 0.0
      %289 = vmatpush1.msra.mxu0 0.0
      %290 = vmatprep.subr.mxu0 0.0
      %291 = vmatpush1.msra.mxu0 0.0
      %292 = vmatprep.subr.mxu0 0.0
      %293 = vmatpush1.msra.mxu0 0.0
      %294 = vmatprep.subr.mxu0 0.0
      %295 = vmatpush1.msra.mxu0 0.0
      %296 = vmatprep.subr.mxu0 0.0
      %297 = vmatpush1.msra.mxu0 0.0
      %298 = vmatprep.subr.mxu0 0.0
      %299 = vmatpush1.msra.mxu0 0.0
      %300 = vmatprep.subr.mxu0 0.0
      %301 = vmatpush1.msra.mxu0 0.0
      %302 = vmatprep.subr.mxu0 0.0
      %303 = vmatpush1.msra.mxu0 0.0
      %304 = vmatprep.subr.mxu0 0.0
      %305 = vmatpush1.msra.mxu0 0.0
      %306 = vmatprep.subr.mxu0 0.0
      %307 = vmatpush1.msra.mxu0 0.0
      %308 = vmatprep.subr.mxu0 0.0
      %309 = vmatpush1.msra.mxu0 0.0
      %310 = vmatprep.subr.mxu0 0.0
      %311 = vmatpush1.msra.mxu0 0.0
      %312 = vmatprep.subr.mxu0 0.0
      %313 = vmatpush1.msra.mxu0 0.0
      %314 = vmatprep.subr.mxu0 0.0
      %315 = vmatpush1.msra.mxu0 0.0
      %316 = vmatprep.subr.mxu0 0.0
      %317 = vmatpush1.msra.mxu0 0.0
      %318 = vmatprep.subr.mxu0 0.0
      %319 = vmatpush1.msra.mxu0 0.0
      %320 = vmatprep.subr.mxu0 0.0
      %321 = vmatpush1.msra.mxu0 0.0
      %322 = vmatprep.subr.mxu0 0.0
      %323 = vmatpush1.msra.mxu0 0.0
      %324 = vmatprep.subr.mxu0 0.0
      %325 = vmatpush1.msra.mxu0 0.0
      %326 = vmatprep.subr.mxu0 0.0
      %327 = vmatpush1.msra.mxu0 0.0
      %328 = vmatprep.subr.mxu0 0.0
      %329 = vmatpush1.msra.mxu0 0.0
      %330 = vmatprep.mubr.f32.mxu0 0.0
      %331 = vmatmul.mubr.f32.gmra.mrb[0].mxu0 %v215
      %v332 = vpop.f32.mrb[0].mxu0
      %v333 = vadd.f32 0.0, %v332
      %v334 = vpop.f32.mrb[0].mxu0
      %335 = vmatprep.mubr.f32.mxu0 0.0
      %336 = vmatmul.mubr.f32.gmra.mrb[0].mxu0 %v218
      %v337 = vpop.f32.mrb[0].mxu0
      %v338 = vadd.f32 0.0, %v337
      %v339 = vpop.f32.mrb[0].mxu0
      %340 = vmatprep.mubr.f32.mxu0 0.0
      %341 = vmatmul.mubr.f32.gmra.mrb[0].mxu0 %v221
      %v342 = vpop.f32.mrb[0].mxu0
      %v343 = vadd.f32 0.0, %v342
      %v344 = vpop.f32.mrb[0].mxu0
      %345 = vmatprep.mubr.f32.mxu0 0.0
      %346 = vmatmul.mubr.f32.gmra.mrb[0].mxu0 %v224
      %v347 = vpop.f32.mrb[0].mxu0
      %v348 = vadd.f32 0.0, %v347
      %v349 = vpop.f32.mrb[0].mxu0
      %350 = vmatprep.mubr.f32.mxu0 0.0
      %351 = vmatmul.mubr.f32.gmra.mrb[0].mxu0 %v227
      %v352 = vpop.f32.mrb[0].mxu0
      %v353 = vadd.f32 0.0, %v352
      %v354 = vpop.f32.mrb[0].mxu0
      %355 = vmatprep.mubr.f32.mxu0 0.0
      %356 = vmatmul.mubr.f32.gmra.mrb[0].mxu0 %v230
      %v357 = vpop.f32.mrb[0].mxu0
      %v358 = vadd.f32 0.0, %v357
      %v359 = vpop.f32.mrb[0].mxu0
      %360 = vmatprep.mubr.f32.mxu0 0.0
      %361 = vmatmul.mubr.f32.gmra.mrb[0].mxu0 %v233
      %v362 = vpop.f32.mrb[0].mxu0
      %v363 = vadd.f32 0.0, %v362
      %v364 = vpop.f32.mrb[0].mxu0
      %365 = vmatprep.mubr.f32.mxu0 0.0
      %366 = vmatmul.mubr.f32.gmra.mrb[0].mxu0 %v236
      %v367 = vpop.f32.mrb[0].mxu0
      %v368 = vadd.f32 0.0, %v367
      %v369 = vpop.f32.mrb[0].mxu0
      %370 = vmatprep.mubr.f32.mxu0 0.0
      %371 = vmatmul.mubr.f32.gmra.mrb[0].mxu0 %v239
      %v372 = vpop.f32.mrb[0].mxu0
      %v373 = vadd.f32 0.0, %v372
      %v374 = vpop.f32.mrb[0].mxu0
      %375 = vmatprep.mubr.f32.mxu0 0.0
      %376 = vmatmul.mubr.f32.gmra.mrb[0].mxu0 %v242
      %v377 = vpop.f32.mrb[0].mxu0
      %v378 = vadd.f32 0.0, %v377
      %v379 = vpop.f32.mrb[0].mxu0
      %380 = vmatprep.mubr.f32.mxu0 0.0
      %381 = vmatmul.mubr.f32.gmra.mrb[0].mxu0 %v245
      %v382 = vpop.f32.mrb[0].mxu0
      %v383 = vadd.f32 0.0, %v382
      %v384 = vpop.f32.mrb[0].mxu0
      %385 = vmatprep.mubr.f32.mxu0 0.0
      %386 = vmatmul.mubr.f32.gmra.mrb[0].mxu0 %v248
      %v387 = vpop.f32.mrb[0].mxu0
      %v388 = vadd.f32 0.0, %v387
      %v389 = vpop.f32.mrb[0].mxu0
      %390 = vmatprep.mubr.f32.mxu0 0.0
      %391 = vmatmul.mubr.f32.gmra.mrb[0].mxu0 %v251
      %v392 = vpop.f32.mrb[0].mxu0
      %v393 = vadd.f32 0.0, %v392
      %v394 = vpop.f32.mrb[0].mxu0
      %395 = vmatprep.mubr.f32.mxu0 0.0
      %396 = vmatmul.mubr.f32.gmra.mrb[0].mxu0 %v254
      %v397 = vpop.f32.mrb[0].mxu0
      %v398 = vadd.f32 0.0, %v397
      %v399 = vpop.f32.mrb[0].mxu0
      %400 = vmatprep.mubr.f32.mxu0 0.0
      %401 = vmatmul.mubr.f32.gmra.mrb[0].mxu0 %v257
      %v402 = vpop.f32.mrb[0].mxu0
      %v403 = vadd.f32 0.0, %v402
      %v404 = vpop.f32.mrb[0].mxu0
      %405 = vmatprep.mubr.f32.mxu0 0.0
      %406 = vmatmul.mubr.f32.gmra.mrb[0].mxu0 %v260
      %v407 = vpop.f32.mrb[0].mxu0
      %v408 = vadd.f32 0.0, %v407
      %v409 = vpop.f32.mrb[0].mxu0
      %410 = vdwg.mxu0
      %vm411 = vcmask 15360
      %412 = vst.msk [vmem:[%s194] sm:$0xff] %vm411, %v333
      %413 = vst.msk [vmem:[%s194 + $0x8] sm:$0xff] %vm411, %v338
      %414 = vst.msk [vmem:[%s194 + $0x10] sm:$0xff] %vm411, %v343
      %415 = vst.msk [vmem:[%s194 + $0x18] sm:$0xff] %vm411, %v348
      %416 = vst.msk [vmem:[%s194 + $0x20] sm:$0xff] %vm411, %v353
      %417 = vst.msk [vmem:[%s194 + $0x28] sm:$0xff] %vm411, %v358
      %418 = vst.msk [vmem:[%s194 + $0x30] sm:$0xff] %vm411, %v363
      %419 = vst.msk [vmem:[%s194 + $0x38] sm:$0xff] %vm411, %v368
      %420 = vst.msk [vmem:[%s194 + $0x40] sm:$0xff] %vm411, %v373
      %421 = vst.msk [vmem:[%s194 + $0x48] sm:$0xff] %vm411, %v378
      %422 = vst.msk [vmem:[%s194 + $0x50] sm:$0xff] %vm411, %v383
      %423 = vst.msk [vmem:[%s194 + $0x58] sm:$0xff] %vm411, %v388
      %424 = vst.msk [vmem:[%s194 + $0x60] sm:$0xff] %vm411, %v393
      %425 = vst.msk [vmem:[%s194 + $0x68] sm:$0xff] %vm411, %v398
      %426 = vst.msk [vmem:[%s194 + $0x70] sm:$0xff] %vm411, %v403
      %427 = vst.msk [vmem:[%s194 + $0x78] sm:$0xff] %vm411, %v408
      %p428 = scmp.eq.s32.totalorder %s16, 0
      // Predicated region
      $region29: #{residual_block_forward.6} parent=27 // pred_check
        %p429 = pneg %p428
      $region30: #{residual_block_forward.6} parent=27 // pred_check_branch
        %431 = sbr.rel (%p429) target = $region32
      $region31: #{residual_block_forward.6} parent=27 // pred_region
        %vm432 = vcmask 8192
        %433 = vst.msk [vmem:[%s3] sm:$0x1] %vm432, 0.0
        %434 = vst.msk [vmem:[%s4] sm:$0x1] %vm432, 0.0
      $region32: #{residual_block_forward.6} parent=27 // pred_fallthru
        _
      %v435 = vld [vmem:[%s3] sm:$0x1]
      %v436 = vsel %vm411, %v333, 0.0
      %v437 = vsel %vm411, %v338, 0.0
      %v438 = vadd.f32 %v436, %v437
      %v439 = vsel %vm411, %v343, 0.0
      %v440 = vadd.f32 %v438, %v439
      %v441 = vsel %vm411, %v348, 0.0
      %v442 = vadd.f32 %v440, %v441
      %v443 = vsel %vm411, %v353, 0.0
      %v444 = vadd.f32 %v442, %v443
      %v445 = vsel %vm411, %v358, 0.0
      %v446 = vadd.f32 %v444, %v445
      %v447 = vsel %vm411, %v363, 0.0
      %v448 = vadd.f32 %v446, %v447
      %v449 = vsel %vm411, %v368, 0.0
      %v450 = vadd.f32 %v448, %v449
      %v451 = vsel %vm411, %v373, 0.0
      %v452 = vadd.f32 %v450, %v451
      %v453 = vsel %vm411, %v378, 0.0
      %v454 = vadd.f32 %v452, %v453
      %v455 = vsel %vm411, %v383, 0.0
      %v456 = vadd.f32 %v454, %v455
      %v457 = vsel %vm411, %v388, 0.0
      %v458 = vadd.f32 %v456, %v457
      %v459 = vsel %vm411, %v393, 0.0
      %v460 = vadd.f32 %v458, %v459
      %v461 = vsel %vm411, %v398, 0.0
      %v462 = vadd.f32 %v460, %v461
      %v463 = vsel %vm411, %v403, 0.0
      %v464 = vadd.f32 %v462, %v463
      %v465 = vsel %vm411, %v408, 0.0
      %v466 = vadd.f32 %v464, %v465
      %v467 = vrot.slane %v466, 4
      %v468 = vadd.f32 %v466, %v467
      %v469 = vrot.slane %v468, 2
      %v470 = vadd.f32 %v468, %v469
      %v471 = vrot.slane %v470, 1
      %v472 = vadd.f32 %v470, %v471
      %v473 = vadd.f32 %v435, %v472
      %vm474 = vcmask 8192
      %475 = vst.msk [vmem:[%s3] sm:$0x1] %vm474, %v473
      %v476 = vld [vmem:[%s4] sm:$0x1]
      %v477 = vmul.f32 %v333, %v333
      %v478 = vmul.f32 %v338, %v338
      %v479 = vmul.f32 %v343, %v343
      %v480 = vmul.f32 %v348, %v348
      %v481 = vmul.f32 %v353, %v353
      %v482 = vmul.f32 %v358, %v358
      %v483 = vmul.f32 %v363, %v363
      %v484 = vmul.f32 %v368, %v368
      %v485 = vmul.f32 %v373, %v373
      %v486 = vmul.f32 %v378, %v378
      %v487 = vmul.f32 %v383, %v383
      %v488 = vmul.f32 %v388, %v388
      %v489 = vmul.f32 %v393, %v393
      %v490 = vmul.f32 %v398, %v398
      %v491 = vmul.f32 %v403, %v403
      %v492 = vmul.f32 %v408, %v408
      %v493 = vsel %vm411, %v477, 0.0
      %v494 = vsel %vm411, %v478, 0.0
      %v495 = vadd.f32 %v493, %v494
      %v496 = vsel %vm411, %v479, 0.0
      %v497 = vadd.f32 %v495, %v496
      %v498 = vsel %vm411, %v480, 0.0
      %v499 = vadd.f32 %v497, %v498
      %v500 = vsel %vm411, %v481, 0.0
      %v501 = vadd.f32 %v499, %v500
      %v502 = vsel %vm411, %v482, 0.0
      %v503 = vadd.f32 %v501, %v502
      %v504 = vsel %vm411, %v483, 0.0
      %v505 = vadd.f32 %v503, %v504
      %v506 = vsel %vm411, %v484, 0.0
      %v507 = vadd.f32 %v505, %v506
      %v508 = vsel %vm411, %v485, 0.0
      %v509 = vadd.f32 %v507, %v508
      %v510 = vsel %vm411, %v486, 0.0
      %v511 = vadd.f32 %v509, %v510
      %v512 = vsel %vm411, %v487, 0.0
      %v513 = vadd.f32 %v511, %v512
      %v514 = vsel %vm411, %v488, 0.0
      %v515 = vadd.f32 %v513, %v514
      %v516 = vsel %vm411, %v489, 0.0
      %v517 = vadd.f32 %v515, %v516
      %v518 = vsel %vm411, %v490, 0.0
      %v519 = vadd.f32 %v517, %v518
      %v520 = vsel %vm411, %v491, 0.0
      %v521 = vadd.f32 %v519, %v520
      %v522 = vsel %vm411, %v492, 0.0
      %v523 = vadd.f32 %v521, %v522
      %v524 = vrot.slane %v523, 4
      %v525 = vadd.f32 %v523, %v524
      %v526 = vrot.slane %v525, 2
      %v527 = vadd.f32 %v525, %v526
      %v528 = vrot.slane %v527, 1
      %v529 = vadd.f32 %v527, %v528
      %v530 = vadd.f32 %v476, %v529
      %531 = vst.msk [vmem:[%s4] sm:$0x1] %vm474, %v530
      %s532 = smul.u32 16, %s16
      %p533 = scmp.lt.s32.totalorder %s532, 63
      %s534 = scalar_select %p533, %s532, 63
      %s535 = smul.addr %s534, 8
      %s536 = scalar_lea.vmem %s2, %s535
      // Predicated region
      $region33: #{residual_block_forward.6} parent=27 // pred_check
        %p537 = pneg %p81
      $region34: #{residual_block_forward.6} parent=27 // pred_check_branch
        %539 = sbr.rel (%p537) target = $region36
      $region35: #{residual_block_forward.6} parent=27 // pred_region
        %s540 = smul.u32 16, %s16
      $region36: #{residual_block_forward.6} parent=27 // pred_fallthru
        _
      // Predicated region
      $region37: #{residual_block_forward.6} parent=27 // pred_check
        %p541 = pneg %p102
      $region38: #{residual_block_forward.6} parent=27 // pred_check_branch
        %543 = sbr.rel (%p541) target = $region40
      $region39: #{residual_block_forward.6} parent=27 // pred_region
        _
      $region40: #{residual_block_forward.6} parent=27 // pred_fallthru
        _
      // Predicated region
      $region41: #{residual_block_forward.6} parent=27 // pred_check
        %p544 = pneg %p123
      $region42: #{residual_block_forward.6} parent=27 // pred_check_branch
        %546 = sbr.rel (%p544) target = $region44
      $region43: #{residual_block_forward.6} parent=27 // pred_region
        _
      $region44: #{residual_block_forward.6} parent=27 // pred_fallthru
        _
      // Predicated region
      $region45: #{residual_block_forward.6} parent=27 // pred_check
        %p547 = pneg %p102
      $region46: #{residual_block_forward.6} parent=27 // pred_check_branch
        %549 = sbr.rel (%p547) target = $region48
      $region47: #{residual_block_forward.6} parent=27 // pred_region
        _
      $region48: #{residual_block_forward.6} parent=27 // pred_fallthru
        _
      // Predicated region
      $region49: #{residual_block_forward.6} parent=27 // pred_check
        %p550 = pneg %p123
      $region50: #{residual_block_forward.6} parent=27 // pred_check_branch
        %552 = sbr.rel (%p550) target = $region52
      $region51: #{residual_block_forward.6} parent=27 // pred_region
        _
      $region52: #{residual_block_forward.6} parent=27 // pred_fallthru
        _
    $region28: #{residual_block_forward.6} parent=5 // pred_fallthru
      _
    %p553 = scmp.le.s32.totalorder 2, %s11
    // Predicated region
    $region53: #{residual_block_forward.6} parent=5 // pred_check
      %p554 = pneg %p553
    $region54: #{residual_block_forward.6} parent=5 // pred_check_branch
      %556 = sbr.rel (%p554) target = $region56
    $region55: #{residual_block_forward.6} parent=5 // pred_region
      %s557 = ssub.s32 %s11, 2
      // Predicated region
      $region57: #{residual_block_forward.6} parent=55 // pred_check
        %p558 = pneg %p87
      $region58: #{residual_block_forward.6} parent=55 // pred_check_branch
        %560 = sbr.rel (%p558) target = $region60
      $region59: #{residual_block_forward.6} parent=55 // pred_region
        %s561 = smul.u32 16, %s17
        %p562 = scmp.lt.s32.totalorder %s561, 63
        %s563 = scalar_select %p562, %s561, 63
        %s564 = smul.addr %s563, 8
        %s565 = scalar_lea.vmem %s2, %s564
      $region60: #{residual_block_forward.6} parent=55 // pred_fallthru
        _
    $region56: #{residual_block_forward.6} parent=5 // pred_fallthru
      _
  $region6: #{residual_block_forward.6} parent=0 // loop_footer
    %s15 = sadd.s32 1, %s11
  $region7: #{residual_block_forward.6} parent=0 // loop_footer_branch
    %10 = sbr.rel target = $region3
  $region8: #{residual_block_forward.6} parent=0 // loop_exit
    _

// kernel: residual_block_forward.8
$region0: #{residual_block_forward.8}
  #allocation0 [shape = 'u32[]', space=smem, size = 0x4, offset = 0x4, fixed_abs, tag = 'smem constant byte address 0x4 - core index']
  #allocation1 [shape = 'u32[144,128]{1,0:T(1,128)}', space=vmem, size = 0x12000, scoped, tag = 'internal scratch']
  %s0 = inlined_call_operand.vmem [shape: f32[512,4], index: 0, kind: input, shape index: {}]
  %s1 = inlined_call_operand.vmem [shape: f32[1,4], index: 1, kind: input, shape index: {}]
  %s2 = inlined_call_operand.vmem [shape: f32[1,4], index: 2, kind: input, shape index: {}]
  %s3 = inlined_call_operand.vmem [shape: f32[1,4], index: 3, kind: input, shape index: {}]
  %s4 = inlined_call_operand.vmem [shape: f32[1,4], index: 4, kind: input, shape index: {}]
  %s5 = inlined_call_operand.vmem [shape: f32[512,4], index: 5, kind: input, shape index: {}, may-alias: {5,6}]
  %s6 = inlined_call_operand.vmem [shape: f32[512,4], index: 6, kind: output, shape index: {}, may-alias: {5,6}]
  %s7 = sld [smem:[#allocation0]]
  $region57: #{residual_block_forward.8} parent=0
    _
  %s9 = ssub.s32 1, %s7
  %s10 = scalar_select 0, %s9, %s7
  loop: start=0, step=1, limit=6
  $region2: #{residual_block_forward.8} parent=0 // loop_pre_header
    _
  $region3: #{residual_block_forward.8} parent=0 // loop_header
    %s12 = sphi 0, %s16
    %p13 = scmp.ge.s32.totalorder %s12, 6
    %s22 = sphi 0, %s24
    %s25 = sphi 0, %s22
    %s26 = sphi 0, %s25
    %s42 = sphi 0, %s26
    %s46 = sphi 0, %s46
    %s48 = sphi 0, %s46
    %s49 = sphi 0, %s48
    %s63 = sphi 0, %s49
    %s67 = sphi 0, %s67
    %s69 = sphi 0, %s67
    %s70 = sphi 0, %s69
    %s84 = sphi 0, %s70
    %s88 = sphi 0, %s88
    %s90 = sphi 0, %s88
    %s91 = sphi 0, %s90
    %s105 = sphi 0, %s91
    %s109 = sphi 0, %s109
    %s111 = sphi 0, %s109
    %s112 = sphi 0, %s111
    %s126 = sphi 0, %s112
    %s132 = sphi 0, %s134
    %s135 = sphi 0, %s132
    %s136 = sphi 0, %s135
    %s152 = sphi 0, %s136
    %s158 = sphi 0, %s160
    %s161 = sphi 0, %s158
    %s162 = sphi 0, %s161
    %s178 = sphi 0, %s162
  $region4: #{residual_block_forward.8} parent=0 // loop_header_branch
    %15 = sbr.rel (%p13) target = $region8
  $region5: #{residual_block_forward.8} parent=0 // loop_body
    %s17 = ssub.s32 %s12, 1
    %s18 = ssub.s32 %s12, 2
    %s19 = sadd.s32 %s12, 1
    %s20 = ssub.s32 %s12, %s19
    %p21 = scmp.eq.s32.totalorder %s20, 0
    %s23 = sadd.s32 %s22, 1
    %s24 = scalar_select %p21, %s22, %s23
    %p27 = pneg %p21
    %p28 = scmp.eq.s32.totalorder %s12, 3
    %p29 = por %p27, %p28
    %p30 = scmp.ne.s32.totalorder %s22, %s25
    %p31 = scmp.eq.s32.totalorder %s12, 0
    %p32 = por %p30, %p31
    %p33 = scmp.ne.s32.totalorder %s22, %s25
    %p34 = scmp.eq.s32.totalorder %s17, 3
    %p35 = por %p33, %p34
    %p36 = scmp.ne.s32.totalorder %s25, %s26
    %p37 = scmp.eq.s32.totalorder %s17, 0
    %p38 = por %p36, %p37
    %p39 = scmp.ne.s32.totalorder %s25, %s26
    %p40 = scmp.eq.s32.totalorder %s18, 3
    %p41 = por %p39, %p40
    %p43 = scmp.ne.s32.totalorder %s26, %s42
    %p44 = scmp.eq.s32.totalorder %s18, 0
    %p45 = por %p43, %p44
    %s47 = sadd.s32 %s46, 1
    %p50 = scmp.eq.s32.totalorder %s12, 3
    %p51 = scmp.ne.s32.totalorder %s46, %s48
    %p52 = scmp.eq.s32.totalorder %s12, 0
    %p53 = por %p51, %p52
    %p54 = scmp.ne.s32.totalorder %s46, %s48
    %p55 = scmp.eq.s32.totalorder %s17, 3
    %p56 = por %p54, %p55
    %p57 = scmp.ne.s32.totalorder %s48, %s49
    %p58 = scmp.eq.s32.totalorder %s17, 0
    %p59 = por %p57, %p58
    %p60 = scmp.ne.s32.totalorder %s48, %s49
    %p61 = scmp.eq.s32.totalorder %s18, 3
    %p62 = por %p60, %p61
    %p64 = scmp.ne.s32.totalorder %s49, %s63
    %p65 = scmp.eq.s32.totalorder %s18, 0
    %p66 = por %p64, %p65
    %s68 = sadd.s32 %s67, 1
    %p71 = scmp.eq.s32.totalorder %s12, 3
    %p72 = scmp.ne.s32.totalorder %s67, %s69
    %p73 = scmp.eq.s32.totalorder %s12, 0
    %p74 = por %p72, %p73
    %p75 = scmp.ne.s32.totalorder %s67, %s69
    %p76 = scmp.eq.s32.totalorder %s17, 3
    %p77 = por %p75, %p76
    %p78 = scmp.ne.s32.totalorder %s69, %s70
    %p79 = scmp.eq.s32.totalorder %s17, 0
    %p80 = por %p78, %p79
    %p81 = scmp.ne.s32.totalorder %s69, %s70
    %p82 = scmp.eq.s32.totalorder %s18, 3
    %p83 = por %p81, %p82
    %p85 = scmp.ne.s32.totalorder %s70, %s84
    %p86 = scmp.eq.s32.totalorder %s18, 0
    %p87 = por %p85, %p86
    %s89 = sadd.s32 %s88, 1
    %p92 = scmp.eq.s32.totalorder %s12, 3
    %p93 = scmp.ne.s32.totalorder %s88, %s90
    %p94 = scmp.eq.s32.totalorder %s12, 0
    %p95 = por %p93, %p94
    %p96 = scmp.ne.s32.totalorder %s88, %s90
    %p97 = scmp.eq.s32.totalorder %s17, 3
    %p98 = por %p96, %p97
    %p99 = scmp.ne.s32.totalorder %s90, %s91
    %p100 = scmp.eq.s32.totalorder %s17, 0
    %p101 = por %p99, %p100
    %p102 = scmp.ne.s32.totalorder %s90, %s91
    %p103 = scmp.eq.s32.totalorder %s18, 3
    %p104 = por %p102, %p103
    %p106 = scmp.ne.s32.totalorder %s91, %s105
    %p107 = scmp.eq.s32.totalorder %s18, 0
    %p108 = por %p106, %p107
    %s110 = sadd.s32 %s109, 1
    %p113 = scmp.eq.s32.totalorder %s12, 3
    %p114 = scmp.ne.s32.totalorder %s109, %s111
    %p115 = scmp.eq.s32.totalorder %s12, 0
    %p116 = por %p114, %p115
    %p117 = scmp.ne.s32.totalorder %s109, %s111
    %p118 = scmp.eq.s32.totalorder %s17, 3
    %p119 = por %p117, %p118
    %p120 = scmp.ne.s32.totalorder %s111, %s112
    %p121 = scmp.eq.s32.totalorder %s17, 0
    %p122 = por %p120, %p121
    %p123 = scmp.ne.s32.totalorder %s111, %s112
    %p124 = scmp.eq.s32.totalorder %s18, 3
    %p125 = por %p123, %p124
    %p127 = scmp.ne.s32.totalorder %s112, %s126
    %p128 = scmp.eq.s32.totalorder %s18, 0
    %p129 = por %p127, %p128
    %s130 = ssub.s32 %s12, %s19
    %p131 = scmp.eq.s32.totalorder %s130, 0
    %s133 = sadd.s32 %s132, 1
    %s134 = scalar_select %p131, %s132, %s133
    %p137 = pneg %p131
    %p138 = scmp.eq.s32.totalorder %s12, 3
    %p139 = por %p137, %p138
    %p140 = scmp.ne.s32.totalorder %s132, %s135
    %p141 = scmp.eq.s32.totalorder %s12, 0
    %p142 = por %p140, %p141
    %p143 = scmp.ne.s32.totalorder %s132, %s135
    %p144 = scmp.eq.s32.totalorder %s17, 3
    %p145 = por %p143, %p144
    %p146 = scmp.ne.s32.totalorder %s135, %s136
    %p147 = scmp.eq.s32.totalorder %s17, 0
    %p148 = por %p146, %p147
    %p149 = scmp.ne.s32.totalorder %s135, %s136
    %p150 = scmp.eq.s32.totalorder %s18, 3
    %p151 = por %p149, %p150
    %p153 = scmp.ne.s32.totalorder %s136, %s152
    %p154 = scmp.eq.s32.totalorder %s18, 0
    %p155 = por %p153, %p154
    %s156 = ssub.s32 %s12, %s19
    %p157 = scmp.eq.s32.totalorder %s156, 0
    %s159 = sadd.s32 %s158, 1
    %s160 = scalar_select %p157, %s158, %s159
    %p163 = pneg %p157
    %p164 = scmp.eq.s32.totalorder %s12, 3
    %p165 = por %p163, %p164
    %p166 = scmp.ne.s32.totalorder %s158, %s161
    %p167 = scmp.eq.s32.totalorder %s12, 0
    %p168 = por %p166, %p167
    %p169 = scmp.ne.s32.totalorder %s158, %s161
    %p170 = scmp.eq.s32.totalorder %s17, 3
    %p171 = por %p169, %p170
    %p172 = scmp.ne.s32.totalorder %s161, %s162
    %p173 = scmp.eq.s32.totalorder %s17, 0
    %p174 = por %p172, %p173
    %p175 = scmp.ne.s32.totalorder %s161, %s162
    %p176 = scmp.eq.s32.totalorder %s18, 3
    %p177 = por %p175, %p176
    %p179 = scmp.ne.s32.totalorder %s162, %s178
    %p180 = scmp.eq.s32.totalorder %s18, 0
    %p181 = por %p179, %p180
    %p182 = scmp.le.s32.totalorder 1, %s12
    %p183 = scmp.lt.s32.totalorder %s12, 5
    %p184 = pnand %p182, %p183
    %p185 = pneg %p184
    // Predicated region
    $region9: #{residual_block_forward.8} parent=5 // pred_check
      _
    $region10: #{residual_block_forward.8} parent=5 // pred_check_branch
      %187 = sbr.rel (%p184) target = $region12
    $region11: #{residual_block_forward.8} parent=5 // pred_region
      %s188 = ssub.s32 %s12, 1
      // Predicated region
      $region13: #{residual_block_forward.8} parent=11 // pred_check
        %p189 = pneg %p59
      $region14: #{residual_block_forward.8} parent=11 // pred_check_branch
        %191 = sbr.rel (%p189) target = $region16
      $region15: #{residual_block_forward.8} parent=11 // pred_region
        _
      $region16: #{residual_block_forward.8} parent=11 // pred_fallthru
        _
      // Predicated region
      $region17: #{residual_block_forward.8} parent=11 // pred_check
        %p192 = pneg %p80
      $region18: #{residual_block_forward.8} parent=11 // pred_check_branch
        %194 = sbr.rel (%p192) target = $region20
      $region19: #{residual_block_forward.8} parent=11 // pred_region
        _
      $region20: #{residual_block_forward.8} parent=11 // pred_fallthru
        _
      // Predicated region
      $region21: #{residual_block_forward.8} parent=11 // pred_check
        %p195 = pneg %p101
      $region22: #{residual_block_forward.8} parent=11 // pred_check_branch
        %197 = sbr.rel (%p195) target = $region24
      $region23: #{residual_block_forward.8} parent=11 // pred_region
        _
      $region24: #{residual_block_forward.8} parent=11 // pred_fallthru
        _
      // Predicated region
      $region25: #{residual_block_forward.8} parent=11 // pred_check
        %p198 = pneg %p122
      $region26: #{residual_block_forward.8} parent=11 // pred_check_branch
        %200 = sbr.rel (%p198) target = $region28
      $region27: #{residual_block_forward.8} parent=11 // pred_region
        _
      $region28: #{residual_block_forward.8} parent=11 // pred_fallthru
        _
    $region12: #{residual_block_forward.8} parent=5 // pred_fallthru
      _
    %p201 = scmp.lt.s32.totalorder %s12, 4
    // Predicated region
    $region29: #{residual_block_forward.8} parent=5 // pred_check
      %p202 = pneg %p201
    $region30: #{residual_block_forward.8} parent=5 // pred_check_branch
      %204 = sbr.rel (%p202) target = $region32
    $region31: #{residual_block_forward.8} parent=5 // pred_region
      // Predicated region
      $region33: #{residual_block_forward.8} parent=31 // pred_check
        %p205 = pneg %p32
      $region34: #{residual_block_forward.8} parent=31 // pred_check_branch
        %207 = sbr.rel (%p205) target = $region36
      $region35: #{residual_block_forward.8} parent=31 // pred_region
        %s208 = smul.u32 16, %s12
        %p209 = scmp.lt.s32.totalorder %s208, 63
        %s210 = scalar_select %p209, %s208, 63
        %s211 = smul.addr %s210, 8
        %s212 = scalar_lea.vmem %s0, %s211
        %s213 = smul.u32 16, %s12
      $region36: #{residual_block_forward.8} parent=31 // pred_fallthru
        _
      // Predicated region
      $region37: #{residual_block_forward.8} parent=31 // pred_check
        %p214 = pneg %p142
      $region38: #{residual_block_forward.8} parent=31 // pred_check_branch
        %216 = sbr.rel (%p214) target = $region40
      $region39: #{residual_block_forward.8} parent=31 // pred_region
        %s217 = smul.u32 16, %s12
        %p218 = scmp.lt.s32.totalorder %s217, 63
        %s219 = scalar_select %p218, %s217, 63
        %s220 = smul.addr %s219, 8
        %s221 = scalar_lea.vmem %s5, %s220
        %s222 = smul.u32 16, %s12
      $region40: #{residual_block_forward.8} parent=31 // pred_fallthru
        _
    $region32: #{residual_block_forward.8} parent=5 // pred_fallthru
      _
    %p223 = scmp.le.s32.totalorder 1, %s12
    %p224 = scmp.lt.s32.totalorder %s12, 5
    %p225 = pnand %p223, %p224
    %p226 = pneg %p225
    // Predicated region
    $region41: #{residual_block_forward.8} parent=5 // pred_check
      _
    $region42: #{residual_block_forward.8} parent=5 // pred_check_branch
      %228 = sbr.rel (%p225) target = $region44
    $region43: #{residual_block_forward.8} parent=5 // pred_region
      %s229 = ssub.s32 %s12, 1
      %s230 = smul.u32 16, %s17
      %p231 = scmp.lt.s32.totalorder %s230, 63
      %s232 = scalar_select %p231, %s230, 63
      %s233 = smul.addr %s232, 8
      %s234 = scalar_lea.vmem %s0, %s233
      %p235 = pneg %p38
      %p236 = pneg %p35
      %p237 = pneg %p59
      %p238 = pneg %p56
      %p239 = pneg %p80
      %p240 = pneg %p77
      %p241 = pneg %p101
      %p242 = pneg %p98
      %p243 = pneg %p122
      %p244 = pneg %p119
      %s245 = smul.u32 16, %s17
      %p246 = scmp.lt.s32.totalorder %s245, 63
      %s247 = scalar_select %p246, %s245, 63
      %s248 = smul.addr %s247, 8
      %s249 = scalar_lea.vmem %s5, %s248
      %p250 = pneg %p148
      %p251 = pneg %p145
      %p252 = pneg %p174
      %p253 = pneg %p171
      %s254 = smul.u32 16, %s17
      %p255 = scmp.lt.s32.totalorder %s254, 63
      %s256 = scalar_select %p255, %s254, 63
      %s257 = smul.addr %s256, 8
      %s258 = scalar_lea.vmem %s6, %s257
      %s259 = smul.u32 16, %s17
      %p260 = scmp.lt.s32.totalorder %s259, 63
      %s261 = scalar_select %p260, %s259, 63
      %s262 = smul.addr %s261, 8
      %s263 = scalar_lea.vmem %s0, %s262
      %s264 = smul.u32 16, %s17
      %s265 = smul.u32 16, %s17
      %p266 = scmp.lt.s32.totalorder %s265, 63
      %s267 = scalar_select %p266, %s265, 63
      %s268 = smul.addr %s267, 8
      %s269 = scalar_lea.vmem %s5, %s268
      %s270 = smul.u32 16, %s17
      %s271 = smul.u32 16, %s17
      %p272 = scmp.lt.s32.totalorder %s271, 63
      %s273 = scalar_select %p272, %s271, 63
      %s274 = smul.addr %s273, 8
      %s275 = scalar_lea.vmem %s6, %s274
      %s276 = smul.u32 16, %s17
      %v277 = vld [vmem:[%s1] sm:$0x1]
      %v278 = vld [vmem:[%s2] sm:$0x1]
      %v279 = vld [vmem:[%s3] sm:$0x1]
      %v280 = vld [vmem:[%s4] sm:$0x1]
      %v281 = vmul.f32 %v277, 0.001953125
      %v282 = vmul.f32 %v278, 0.001953125
      %v283 = vmul.f32 %v281, %v281
      %v284 = vsub.f32 %v282, %v283
      %v285 = vmax.f32 %v284, 0.0
      %v286 = vadd.f32 %v285, 1e-05
      %v287 = vrsqrt.pop %v286
      %v288 = vmul.f32 %v279, %v287
      %v289 = vmul.f32 %v281, %v288
      %v290 = vsub.f32 %v280, %v289
      %v291 = vld [vmem:[%s263] sm:$0xff]
      %v292 = vld [vmem:[%s263 + $0x8] sm:$0xff]
      %v293 = vld [vmem:[%s263 + $0x10] sm:$0xff]
      %v294 = vld [vmem:[%s263 + $0x18] sm:$0xff]
      %v295 = vld [vmem:[%s263 + $0x20] sm:$0xff]
      %v296 = vld [vmem:[%s263 + $0x28] sm:$0xff]
      %v297 = vld [vmem:[%s263 + $0x30] sm:$0xff]
      %v298 = vld [vmem:[%s263 + $0x38] sm:$0xff]
      %v299 = vld [vmem:[%s263 + $0x40] sm:$0xff]
      %v300 = vld [vmem:[%s263 + $0x48] sm:$0xff]
      %v301 = vld [vmem:[%s263 + $0x50] sm:$0xff]
      %v302 = vld [vmem:[%s263 + $0x58] sm:$0xff]
      %v303 = vld [vmem:[%s263 + $0x60] sm:$0xff]
      %v304 = vld [vmem:[%s263 + $0x68] sm:$0xff]
      %v305 = vld [vmem:[%s263 + $0x70] sm:$0xff]
      %v306 = vld [vmem:[%s263 + $0x78] sm:$0xff]
      %v308 = vlaneseq
      %v309 = vshrl.u32 %v308, 7
      %v310 = vsub.s32 0, %v309
      %v311 = vrot.slane %v288, %v310
      %v313 = vmul.f32 %v291, %v311
      %v314 = vmul.f32 %v292, %v311
      %v315 = vmul.f32 %v293, %v311
      %v316 = vmul.f32 %v294, %v311
      %v317 = vmul.f32 %v295, %v311
      %v318 = vmul.f32 %v296, %v311
      %v319 = vmul.f32 %v297, %v311
      %v320 = vmul.f32 %v298, %v311
      %v321 = vmul.f32 %v299, %v311
      %v322 = vmul.f32 %v300, %v311
      %v323 = vmul.f32 %v301, %v311
      %v324 = vmul.f32 %v302, %v311
      %v325 = vmul.f32 %v303, %v311
      %v326 = vmul.f32 %v304, %v311
      %v327 = vmul.f32 %v305, %v311
      %v328 = vmul.f32 %v306, %v311
      %v330 = vlaneseq
      %v331 = vshrl.u32 %v330, 7
      %v332 = vsub.s32 0, %v331
      %v333 = vrot.slane %v290, %v332
      %v335 = vadd.f32 %v313, %v333
      %v336 = vadd.f32 %v314, %v333
      %v337 = vadd.f32 %v315, %v333
      %v338 = vadd.f32 %v316, %v333
      %v339 = vadd.f32 %v317, %v333
      %v340 = vadd.f32 %v318, %v333
      %v341 = vadd.f32 %v319, %v333
      %v342 = vadd.f32 %v320, %v333
      %v343 = vadd.f32 %v321, %v333
      %v344 = vadd.f32 %v322, %v333
      %v345 = vadd.f32 %v323, %v333
      %v346 = vadd.f32 %v324, %v333
      %v347 = vadd.f32 %v325, %v333
      %v348 = vadd.f32 %v326, %v333
      %v349 = vadd.f32 %v327, %v333
      %v350 = vadd.f32 %v328, %v333
      %vm351 = vcmp.ge.f32.partialorder %v335, 0.0
      %vm352 = vcmp.ge.f32.partialorder %v336, 0.0
      %vm353 = vcmp.ge.f32.partialorder %v337, 0.0
      %vm354 = vcmp.ge.f32.partialorder %v338, 0.0
      %vm355 = vcmp.ge.f32.partialorder %v339, 0.0
      %vm356 = vcmp.ge.f32.partialorder %v340, 0.0
      %vm357 = vcmp.ge.f32.partialorder %v341, 0.0
      %vm358 = vcmp.ge.f32.partialorder %v342, 0.0
      %vm359 = vcmp.ge.f32.partialorder %v343, 0.0
      %vm360 = vcmp.ge.f32.partialorder %v344, 0.0
      %vm361 = vcmp.ge.f32.partialorder %v345, 0.0
      %vm362 = vcmp.ge.f32.partialorder %v346, 0.0
      %vm363 = vcmp.ge.f32.partialorder %v347, 0.0
      %vm364 = vcmp.ge.f32.partialorder %v348, 0.0
      %vm365 = vcmp.ge.f32.partialorder %v349, 0.0
      %vm366 = vcmp.ge.f32.partialorder %v350, 0.0
      %v367 = vmul.f32 %v335, 0.1
      %v368 = vmul.f32 %v336, 0.1
      %v369 = vmul.f32 %v337, 0.1
      %v370 = vmul.f32 %v338, 0.1
      %v371 = vmul.f32 %v339, 0.1
      %v372 = vmul.f32 %v340, 0.1
      %v373 = vmul.f32 %v341, 0.1
      %v374 = vmul.f32 %v342, 0.1
      %v375 = vmul.f32 %v343, 0.1
      %v376 = vmul.f32 %v344, 0.1
      %v377 = vmul.f32 %v345, 0.1
      %v378 = vmul.f32 %v346, 0.1
      %v379 = vmul.f32 %v347, 0.1
      %v380 = vmul.f32 %v348, 0.1
      %v381 = vmul.f32 %v349, 0.1
      %v382 = vmul.f32 %v350, 0.1
      %v383 = vsel %vm351, %v335, %v367
      %v384 = vsel %vm352, %v336, %v368
      %v385 = vsel %vm353, %v337, %v369
      %v386 = vsel %vm354, %v338, %v370
      %v387 = vsel %vm355, %v339, %v371
      %v388 = vsel %vm356, %v340, %v372
      %v389 = vsel %vm357, %v341, %v373
      %v390 = vsel %vm358, %v342, %v374
      %v391 = vsel %vm359, %v343, %v375
      %v392 = vsel %vm360, %v344, %v376
      %v393 = vsel %vm361, %v345, %v377
      %v394 = vsel %vm362, %v346, %v378
      %v395 = vsel %vm363, %v347, %v379
      %v396 = vsel %vm364, %v348, %v380
      %v397 = vsel %vm365, %v349, %v381
      %v398 = vsel %vm366, %v350, %v382
      %v399 = vld [vmem:[%s269] sm:$0xff]
      %v400 = vld [vmem:[%s269 + $0x8] sm:$0xff]
      %v401 = vld [vmem:[%s269 + $0x10] sm:$0xff]
      %v402 = vld [vmem:[%s269 + $0x18] sm:$0xff]
      %v403 = vld [vmem:[%s269 + $0x20] sm:$0xff]
      %v404 = vld [vmem:[%s269 + $0x28] sm:$0xff]
      %v405 = vld [vmem:[%s269 + $0x30] sm:$0xff]
      %v406 = vld [vmem:[%s269 + $0x38] sm:$0xff]
      %v407 = vld [vmem:[%s269 + $0x40] sm:$0xff]
      %v408 = vld [vmem:[%s269 + $0x48] sm:$0xff]
      %v409 = vld [vmem:[%s269 + $0x50] sm:$0xff]
      %v410 = vld [vmem:[%s269 + $0x58] sm:$0xff]
      %v411 = vld [vmem:[%s269 + $0x60] sm:$0xff]
      %v412 = vld [vmem:[%s269 + $0x68] sm:$0xff]
      %v413 = vld [vmem:[%s269 + $0x70] sm:$0xff]
      %v414 = vld [vmem:[%s269 + $0x78] sm:$0xff]
      %v415 = vadd.f32 %v383, %v399
      %v416 = vadd.f32 %v384, %v400
      %v417 = vadd.f32 %v385, %v401
      %v418 = vadd.f32 %v386, %v402
      %v419 = vadd.f32 %v387, %v403
      %v420 = vadd.f32 %v388, %v404
      %v421 = vadd.f32 %v389, %v405
      %v422 = vadd.f32 %v390, %v406
      %v423 = vadd.f32 %v391, %v407
      %v424 = vadd.f32 %v392, %v408
      %v425 = vadd.f32 %v393, %v409
      %v426 = vadd.f32 %v394, %v410
      %v427 = vadd.f32 %v395, %v411
      %v428 = vadd.f32 %v396, %v412
      %v429 = vadd.f32 %v397, %v413
      %v430 = vadd.f32 %v398, %v414
      %vm431 = vcmask 31744
      %432 = vst.msk [vmem:[%s275] sm:$0xff] %vm431, %v415
      %433 = vst.msk [vmem:[%s275 + $0x8] sm:$0xff] %vm431, %v416
      %434 = vst.msk [vmem:[%s275 + $0x10] sm:$0xff] %vm431, %v417
      %435 = vst.msk [vmem:[%s275 + $0x18] sm:$0xff] %vm431, %v418
      %436 = vst.msk [vmem:[%s275 + $0x20] sm:$0xff] %vm431, %v419
      %437 = vst.msk [vmem:[%s275 + $0x28] sm:$0xff] %vm431, %v420
      %438 = vst.msk [vmem:[%s275 + $0x30] sm:$0xff] %vm431, %v421
      %439 = vst.msk [vmem:[%s275 + $0x38] sm:$0xff] %vm431, %v422
      %440 = vst.msk [vmem:[%s275 + $0x40] sm:$0xff] %vm431, %v423
      %441 = vst.msk [vmem:[%s275 + $0x48] sm:$0xff] %vm431, %v424
      %442 = vst.msk [vmem:[%s275 + $0x50] sm:$0xff] %vm431, %v425
      %443 = vst.msk [vmem:[%s275 + $0x58] sm:$0xff] %vm431, %v426
      %444 = vst.msk [vmem:[%s275 + $0x60] sm:$0xff] %vm431, %v427
      %445 = vst.msk [vmem:[%s275 + $0x68] sm:$0xff] %vm431, %v428
      %446 = vst.msk [vmem:[%s275 + $0x70] sm:$0xff] %vm431, %v429
      %447 = vst.msk [vmem:[%s275 + $0x78] sm:$0xff] %vm431, %v430
      %s448 = smul.u32 16, %s17
      %p449 = scmp.lt.s32.totalorder %s448, 63
      %s450 = scalar_select %p449, %s448, 63
      %s451 = smul.addr %s450, 8
      %s452 = scalar_lea.vmem %s6, %s451
      // Predicated region
      $region45: #{residual_block_forward.8} parent=43 // pred_check
        %p453 = pneg %p171
      $region46: #{residual_block_forward.8} parent=43 // pred_check_branch
        %455 = sbr.rel (%p453) target = $region48
      $region47: #{residual_block_forward.8} parent=43 // pred_region
        %s456 = smul.u32 16, %s17
      $region48: #{residual_block_forward.8} parent=43 // pred_fallthru
        _
    $region44: #{residual_block_forward.8} parent=5 // pred_fallthru
      _
    %p457 = scmp.le.s32.totalorder 2, %s12
    // Predicated region
    $region49: #{residual_block_forward.8} parent=5 // pred_check
      %p458 = pneg %p457
    $region50: #{residual_block_forward.8} parent=5 // pred_check_branch
      %460 = sbr.rel (%p458) target = $region52
    $region51: #{residual_block_forward.8} parent=5 // pred_region
      %s461 = ssub.s32 %s12, 2
      // Predicated region
      $region53: #{residual_block_forward.8} parent=51 // pred_check
        %p462 = pneg %p177
      $region54: #{residual_block_forward.8} parent=51 // pred_check_branch
        %464 = sbr.rel (%p462) target = $region56
      $region55: #{residual_block_forward.8} parent=51 // pred_region
        %s465 = smul.u32 16, %s18
        %p466 = scmp.lt.s32.totalorder %s465, 63
        %s467 = scalar_select %p466, %s465, 63
        %s468 = smul.addr %s467, 8
        %s469 = scalar_lea.vmem %s6, %s468
      $region56: #{residual_block_forward.8} parent=51 // pred_fallthru
        _
    $region52: #{residual_block_forward.8} parent=5 // pred_fallthru
      _
  $region6: #{residual_block_forward.8} parent=0 // loop_footer
    %s16 = sadd.s32 1, %s12
  $region7: #{residual_block_forward.8} parent=0 // loop_footer_branch
    %11 = sbr.rel target = $region3
  $region8: #{residual_block_forward.8} parent=0 // loop_exit
    _

// kernel: residual_block_forward.7
$region0: #{residual_block_forward.7}
  #allocation0 [shape = 'u32[]', space=smem, size = 0x4, offset = 0x4, fixed_abs, tag = 'smem constant byte address 0x4 - core index']
  #allocation1 [shape = 'u32[144,128]{1,0:T(1,128)}', space=vmem, size = 0x12000, scoped, tag = 'internal scratch']
  #allocation2 [shape = 'f32[184,2]{1,0:T(8,128)}', space=vmem, size = 0x17000, scoped, tag = 'scratch operand']
  %s0 = inlined_call_operand.vmem [shape: f32[2,16,16,2], index: 0, kind: input, shape index: {}, may-alias: {0,1,2}]
  %s1 = inlined_call_operand.vmem [shape: f32[2,16,16,2], index: 1, kind: input, shape index: {}, may-alias: {0,1,2}]
  %s2 = inlined_call_operand.vmem [shape: f32[2,16,16,2], index: 2, kind: input, shape index: {}, may-alias: {0,1,2}]
  %s3 = inlined_call_operand.vmem [shape: f32[1,2], index: 3, kind: input, shape index: {}]
  %s4 = inlined_call_operand.vmem [shape: f32[1,2], index: 4, kind: input, shape index: {}]
  %s5 = inlined_call_operand.vmem [shape: f32[1,2], index: 5, kind: input, shape index: {}]
  %s6 = inlined_call_operand.vmem [shape: f32[1,2], index: 6, kind: input, shape index: {}]
  %s7 = inlined_call_operand.vmem [shape: f32[9,2,4], index: 7, kind: input, shape index: {}]
  %s8 = inlined_call_operand.vmem [shape: f32[2,16,16,4], index: 8, kind: output, shape index: {0}]
  %s9 = inlined_call_operand.vmem [shape: f32[1,4], index: 9, kind: output, shape index: {1}]
  %s10 = inlined_call_operand.vmem [shape: f32[1,4], index: 10, kind: output, shape index: {2}]
  %11 = xla_tuple %s8, %s9, %s10
  %s12 = sld [smem:[#allocation0]]
  $region85: #{residual_block_forward.7} parent=0
    _
  %s14 = ssub.s32 1, %s12
  %s15 = scalar_select 0, %s14, %s12
  loop: start=0, step=1, limit=6
  $region2: #{residual_block_forward.7} parent=0 // loop_pre_header
    _
  $region3: #{residual_block_forward.7} parent=0 // loop_header
    %s17 = sphi 0, %s21
    %p18 = scmp.ge.s32.totalorder %s17, 6
    %s24 = sphi 0, %s36
    %s25 = sphi 0, %s32
    %s26 = sphi 0, %s24
    %s27 = sphi 0, %s25
    %s28 = sphi 0, %s26
    %s29 = sphi 0, %s27
    %s41 = sphi 0, %s43
    %s44 = sphi 0, %s41
    %s45 = sphi 0, %s44
    %s61 = sphi 0, %s45
    %s75 = sphi 0, %s77
    %s78 = sphi 0, %s75
    %s79 = sphi 0, %s78
    %s95 = sphi 0, %s79
    %s109 = sphi 0, %s111
    %s112 = sphi 0, %s109
    %s113 = sphi 0, %s112
    %s129 = sphi 0, %s113
    %s133 = sphi 0, %s133
    %s135 = sphi 0, %s133
    %s136 = sphi 0, %s135
    %s150 = sphi 0, %s136
    %s154 = sphi 0, %s154
    %s156 = sphi 0, %s154
    %s157 = sphi 0, %s156
    %s171 = sphi 0, %s157
    %s175 = sphi 0, %s175
    %s177 = sphi 0, %s175
    %s178 = sphi 0, %s177
    %s192 = sphi 0, %s178
    %s196 = sphi 0, %s196
    %s198 = sphi 0, %s196
    %s199 = sphi 0, %s198
    %s213 = sphi 0, %s199
    %s217 = sphi 0, %s217
    %s219 = sphi 0, %s217
    %s220 = sphi 0, %s219
    %s234 = sphi 0, %s220
    %s242 = sphi 0, %s244
    %s245 = sphi 0, %s242
    %s246 = sphi 0, %s245
    %s262 = sphi 0, %s246
    %s266 = sphi 0, %s266
    %s268 = sphi 0, %s266
    %s269 = sphi 0, %s268
    %s283 = sphi 0, %s269
    %s287 = sphi 0, %s287
    %s289 = sphi 0, %s287
    %s290 = sphi 0, %s289
    %s304 = sphi 0, %s290
  $region4: #{residual_block_forward.7} parent=0 // loop_header_branch
    %20 = sbr.rel (%p18) target = $region8
  $region5: #{residual_block_forward.7} parent=0 // loop_body
    %s22 = ssub.s32 %s17, 1
    %s23 = ssub.s32 %s17, 2
    %s30 = sadd.s32 1, %s25
    %p31 = scmp.ge.s32.totalorder %s30, 2
    %s32 = scalar_select %p31, 0, %s30
    %s33 = sadd.s32 1, %s24
    %s34 = scalar_select %p31, %s33, %s24
    %p35 = scmp.ge.s32.totalorder %s34, 2
    %s36 = scalar_select %p35, 0, %s34
    %s37 = ssub.s32 %s24, %s36
    %s38 = ssub.s32 %s25, %s32
    %s39 = sor.u32 %s37, %s38
    %p40 = scmp.eq.s32.totalorder %s39, 0
    %s42 = sadd.s32 %s41, 1
    %s43 = scalar_select %p40, %s41, %s42
    %p46 = pneg %p40
    %p47 = scmp.eq.s32.totalorder %s17, 3
    %p48 = por %p46, %p47
    %p49 = scmp.ne.s32.totalorder %s41, %s44
    %p50 = scmp.eq.s32.totalorder %s17, 0
    %p51 = por %p49, %p50
    %p52 = scmp.ne.s32.totalorder %s41, %s44
    %p53 = scmp.eq.s32.totalorder %s22, 3
    %p54 = por %p52, %p53
    %p55 = scmp.ne.s32.totalorder %s44, %s45
    %p56 = scmp.eq.s32.totalorder %s22, 0
    %p57 = por %p55, %p56
    %p58 = scmp.ne.s32.totalorder %s44, %s45
    %p59 = scmp.eq.s32.totalorder %s23, 3
    %p60 = por %p58, %p59
    %p62 = scmp.ne.s32.totalorder %s45, %s61
    %p63 = scmp.eq.s32.totalorder %s23, 0
    %p64 = por %p62, %p63
    %s65 = ssub.s32 %s25, 1
    %p66 = scmp.gt.s32.totalorder %s65, 0
    %s67 = scalar_select %p66, %s65, 0
    %s68 = ssub.s32 %s32, 1
    %p69 = scmp.gt.s32.totalorder %s68, 0
    %s70 = scalar_select %p69, %s68, 0
    %s71 = ssub.s32 %s24, %s36
    %s72 = ssub.s32 %s67, %s70
    %s73 = sor.u32 %s71, %s72
    %p74 = scmp.eq.s32.totalorder %s73, 0
    %s76 = sadd.s32 %s75, 1
    %s77 = scalar_select %p74, %s75, %s76
    %p80 = pneg %p74
    %p81 = scmp.eq.s32.totalorder %s17, 3
    %p82 = por %p80, %p81
    %p83 = scmp.ne.s32.totalorder %s75, %s78
    %p84 = scmp.eq.s32.totalorder %s17, 0
    %p85 = por %p83, %p84
    %p86 = scmp.ne.s32.totalorder %s75, %s78
    %p87 = scmp.eq.s32.totalorder %s22, 3
    %p88 = por %p86, %p87
    %p89 = scmp.ne.s32.totalorder %s78, %s79
    %p90 = scmp.eq.s32.totalorder %s22, 0
    %p91 = por %p89, %p90
    %p92 = scmp.ne.s32.totalorder %s78, %s79
    %p93 = scmp.eq.s32.totalorder %s23, 3
    %p94 = por %p92, %p93
    %p96 = scmp.ne.s32.totalorder %s79, %s95
    %p97 = scmp.eq.s32.totalorder %s23, 0
    %p98 = por %p96, %p97
    %s99 = sadd.s32 %s25, 1
    %p100 = scmp.lt.s32.totalorder %s99, 1
    %s101 = scalar_select %p100, %s99, 1
    %s102 = sadd.s32 %s32, 1
    %p103 = scmp.lt.s32.totalorder %s102, 1
    %s104 = scalar_select %p103, %s102, 1
    %s105 = ssub.s32 %s24, %s36
    %s106 = ssub.s32 %s101, %s104
    %s107 = sor.u32 %s105, %s106
    %p108 = scmp.eq.s32.totalorder %s107, 0
    %s110 = sadd.s32 %s109, 1
    %s111 = scalar_select %p108, %s109, %s110
    %p114 = pneg %p108
    %p115 = scmp.eq.s32.totalorder %s17, 3
    %p116 = por %p114, %p115
    %p117 = scmp.ne.s32.totalorder %s109, %s112
    %p118 = scmp.eq.s32.totalorder %s17, 0
    %p119 = por %p117, %p118
    %p120 = scmp.ne.s32.totalorder %s109, %s112
    %p121 = scmp.eq.s32.totalorder %s22, 3
    %p122 = por %p120, %p121
    %p123 = scmp.ne.s32.totalorder %s112, %s113
    %p124 = scmp.eq.s32.totalorder %s22, 0
    %p125 = por %p123, %p124
    %p126 = scmp.ne.s32.totalorder %s112, %s113
    %p127 = scmp.eq.s32.totalorder %s23, 3
    %p128 = por %p126, %p127
    %p130 = scmp.ne.s32.totalorder %s113, %s129
    %p131 = scmp.eq.s32.totalorder %s23, 0
    %p132 = por %p130, %p131
    %s134 = sadd.s32 %s133, 1
    %p137 = scmp.eq.s32.totalorder %s17, 3
    %p138 = scmp.ne.s32.totalorder %s133, %s135
    %p139 = scmp.eq.s32.totalorder %s17, 0
    %p140 = por %p138, %p139
    %p141 = scmp.ne.s32.totalorder %s133, %s135
    %p142 = scmp.eq.s32.totalorder %s22, 3
    %p143 = por %p141, %p142
    %p144 = scmp.ne.s32.totalorder %s135, %s136
    %p145 = scmp.eq.s32.totalorder %s22, 0
    %p146 = por %p144, %p145
    %p147 = scmp.ne.s32.totalorder %s135, %s136
    %p148 = scmp.eq.s32.totalorder %s23, 3
    %p149 = por %p147, %p148
    %p151 = scmp.ne.s32.totalorder %s136, %s150
    %p152 = scmp.eq.s32.totalorder %s23, 0
    %p153 = por %p151, %p152
    %s155 = sadd.s32 %s154, 1
    %p158 = scmp.eq.s32.totalorder %s17, 3
    %p159 = scmp.ne.s32.totalorder %s154, %s156
    %p160 = scmp.eq.s32.totalorder %s17, 0
    %p161 = por %p159, %p160
    %p162 = scmp.ne.s32.totalorder %s154, %s156
    %p163 = scmp.eq.s32.totalorder %s22, 3
    %p164 = por %p162, %p163
    %p165 = scmp.ne.s32.totalorder %s156, %s157
    %p166 = scmp.eq.s32.totalorder %s22, 0
    %p167 = por %p165, %p166
    %p168 = scmp.ne.s32.totalorder %s156, %s157
    %p169 = scmp.eq.s32.totalorder %s23, 3
    %p170 = por %p168, %p169
    %p172 = scmp.ne.s32.totalorder %s157, %s171
    %p173 = scmp.eq.s32.totalorder %s23, 0
    %p174 = por %p172, %p173
    %s176 = sadd.s32 %s175, 1
    %p179 = scmp.eq.s32.totalorder %s17, 3
    %p180 = scmp.ne.s32.totalorder %s175, %s177
    %p181 = scmp.eq.s32.totalorder %s17, 0
    %p182 = por %p180, %p181
    %p183 = scmp.ne.s32.totalorder %s175, %s177
    %p184 = scmp.eq.s32.totalorder %s22, 3
    %p185 = por %p183, %p184
    %p186 = scmp.ne.s32.totalorder %s177, %s178
    %p187 = scmp.eq.s32.totalorder %s22, 0
    %p188 = por %p186, %p187
    %p189 = scmp.ne.s32.totalorder %s177, %s178
    %p190 = scmp.eq.s32.totalorder %s23, 3
    %p191 = por %p189, %p190
    %p193 = scmp.ne.s32.totalorder %s178, %s192
    %p194 = scmp.eq.s32.totalorder %s23, 0
    %p195 = por %p193, %p194
    %s197 = sadd.s32 %s196, 1
    %p200 = scmp.eq.s32.totalorder %s17, 3
    %p201 = scmp.ne.s32.totalorder %s196, %s198
    %p202 = scmp.eq.s32.totalorder %s17, 0
    %p203 = por %p201, %p202
    %p204 = scmp.ne.s32.totalorder %s196, %s198
    %p205 = scmp.eq.s32.totalorder %s22, 3
    %p206 = por %p204, %p205
    %p207 = scmp.ne.s32.totalorder %s198, %s199
    %p208 = scmp.eq.s32.totalorder %s22, 0
    %p209 = por %p207, %p208
    %p210 = scmp.ne.s32.totalorder %s198, %s199
    %p211 = scmp.eq.s32.totalorder %s23, 3
    %p212 = por %p210, %p211
    %p214 = scmp.ne.s32.totalorder %s199, %s213
    %p215 = scmp.eq.s32.totalorder %s23, 0
    %p216 = por %p214, %p215
    %s218 = sadd.s32 %s217, 1
    %p221 = scmp.eq.s32.totalorder %s17, 3
    %p222 = scmp.ne.s32.totalorder %s217, %s219
    %p223 = scmp.eq.s32.totalorder %s17, 0
    %p224 = por %p222, %p223
    %p225 = scmp.ne.s32.totalorder %s217, %s219
    %p226 = scmp.eq.s32.totalorder %s22, 3
    %p227 = por %p225, %p226
    %p228 = scmp.ne.s32.totalorder %s219, %s220
    %p229 = scmp.eq.s32.totalorder %s22, 0
    %p230 = por %p228, %p229
    %p231 = scmp.ne.s32.totalorder %s219, %s220
    %p232 = scmp.eq.s32.totalorder %s23, 3
    %p233 = por %p231, %p232
    %p235 = scmp.ne.s32.totalorder %s220, %s234
    %p236 = scmp.eq.s32.totalorder %s23, 0
    %p237 = por %p235, %p236
    %s238 = ssub.s32 %s24, %s36
    %s239 = ssub.s32 %s25, %s32
    %s240 = sor.u32 %s238, %s239
    %p241 = scmp.eq.s32.totalorder %s240, 0
    %s243 = sadd.s32 %s242, 1
    %s244 = scalar_select %p241, %s242, %s243
    %p247 = pneg %p241
    %p248 = scmp.eq.s32.totalorder %s17, 3
    %p249 = por %p247, %p248
    %p250 = scmp.ne.s32.totalorder %s242, %s245
    %p251 = scmp.eq.s32.totalorder %s17, 0
    %p252 = por %p250, %p251
    %p253 = scmp.ne.s32.totalorder %s242, %s245
    %p254 = scmp.eq.s32.totalorder %s22, 3
    %p255 = por %p253, %p254
    %p256 = scmp.ne.s32.totalorder %s245, %s246
    %p257 = scmp.eq.s32.totalorder %s22, 0
    %p258 = por %p256, %p257
    %p259 = scmp.ne.s32.totalorder %s245, %s246
    %p260 = scmp.eq.s32.totalorder %s23, 3
    %p261 = por %p259, %p260
    %p263 = scmp.ne.s32.totalorder %s246, %s262
    %p264 = scmp.eq.s32.totalorder %s23, 0
    %p265 = por %p263, %p264
    %s267 = sadd.s32 %s266, 1
    %p270 = scmp.eq.s32.totalorder %s17, 3
    %p271 = scmp.ne.s32.totalorder %s266, %s268
    %p272 = scmp.eq.s32.totalorder %s17, 0
    %p273 = por %p271, %p272
    %p274 = scmp.ne.s32.totalorder %s266, %s268
    %p275 = scmp.eq.s32.totalorder %s22, 3
    %p276 = por %p274, %p275
    %p277 = scmp.ne.s32.totalorder %s268, %s269
    %p278 = scmp.eq.s32.totalorder %s22, 0
    %p279 = por %p277, %p278
    %p280 = scmp.ne.s32.totalorder %s268, %s269
    %p281 = scmp.eq.s32.totalorder %s23, 3
    %p282 = por %p280, %p281
    %p284 = scmp.ne.s32.totalorder %s269, %s283
    %p285 = scmp.eq.s32.totalorder %s23, 0
    %p286 = por %p284, %p285
    %s288 = sadd.s32 %s287, 1
    %p291 = scmp.eq.s32.totalorder %s17, 3
    %p292 = scmp.ne.s32.totalorder %s287, %s289
    %p293 = scmp.eq.s32.totalorder %s17, 0
    %p294 = por %p292, %p293
    %p295 = scmp.ne.s32.totalorder %s287, %s289
    %p296 = scmp.eq.s32.totalorder %s22, 3
    %p297 = por %p295, %p296
    %p298 = scmp.ne.s32.totalorder %s289, %s290
    %p299 = scmp.eq.s32.totalorder %s22, 0
    %p300 = por %p298, %p299
    %p301 = scmp.ne.s32.totalorder %s289, %s290
    %p302 = scmp.eq.s32.totalorder %s23, 3
    %p303 = por %p301, %p302
    %p305 = scmp.ne.s32.totalorder %s290, %s304
    %p306 = scmp.eq.s32.totalorder %s23, 0
    %p307 = por %p305, %p306
    %p308 = scmp.le.s32.totalorder 1, %s17
    %p309 = scmp.lt.s32.totalorder %s17, 5
    %p310 = pnand %p308, %p309
    %p311 = pneg %p310
    // Predicated region
    $region9: #{residual_block_forward.7} parent=5 // pred_check
      _
    $region10: #{residual_block_forward.7} parent=5 // pred_check_branch
      %313 = sbr.rel (%p310) target = $region12
    $region11: #{residual_block_forward.7} parent=5 // pred_region
      %s314 = ssub.s32 %s17, 1
      // Predicated region
      $region13: #{residual_block_forward.7} parent=11 // pred_check
        %p315 = pneg %p146
      $region14: #{residual_block_forward.7} parent=11 // pred_check_branch
        %317 = sbr.rel (%p315) target = $region16
      $region15: #{residual_block_forward.7} parent=11 // pred_region
        _
      $region16: #{residual_block_forward.7} parent=11 // pred_fallthru
        _
      // Predicated region
      $region17: #{residual_block_forward.7} parent=11 // pred_check
        %p318 = pneg %p167
      $region18: #{residual_block_forward.7} parent=11 // pred_check_branch
        %320 = sbr.rel (%p318) target = $region20
      $region19: #{residual_block_forward.7} parent=11 // pred_region
        _
      $region20: #{residual_block_forward.7} parent=11 // pred_fallthru
        _
      // Predicated region
      $region21: #{residual_block_forward.7} parent=11 // pred_check
        %p321 = pneg %p188
      $region22: #{residual_block_forward.7} parent=11 // pred_check_branch
        %323 = sbr.rel (%p321) target = $region24
      $region23: #{residual_block_forward.7} parent=11 // pred_region
        _
      $region24: #{residual_block_forward.7} parent=11 // pred_fallthru
        _
      // Predicated region
      $region25: #{residual_block_forward.7} parent=11 // pred_check
        %p324 = pneg %p209
      $region26: #{residual_block_forward.7} parent=11 // pred_check_branch
        %326 = sbr.rel (%p324) target = $region28
      $region27: #{residual_block_forward.7} parent=11 // pred_region
        _
      $region28: #{residual_block_forward.7} parent=11 // pred_fallthru
        _
      // Predicated region
      $region29: #{residual_block_forward.7} parent=11 // pred_check
        %p327 = pneg %p230
      $region30: #{residual_block_forward.7} parent=11 // pred_check_branch
        %329 = sbr.rel (%p327) target = $region32
      $region31: #{residual_block_forward.7} parent=11 // pred_region
        _
      $region32: #{residual_block_forward.7} parent=11 // pred_fallthru
        _
    $region12: #{residual_block_forward.7} parent=5 // pred_fallthru
      _
    %p330 = scmp.lt.s32.totalorder %s17, 4
    // Predicated region
    $region33: #{residual_block_forward.7} parent=5 // pred_check
      %p331 = pneg %p330
    $region34: #{residual_block_forward.7} parent=5 // pred_check_branch
      %333 = sbr.rel (%p331) target = $region36
    $region35: #{residual_block_forward.7} parent=5 // pred_region
      // Predicated region
      $region37: #{residual_block_forward.7} parent=35 // pred_check
        %p334 = pneg %p51
      $region38: #{residual_block_forward.7} parent=35 // pred_check_branch
        %336 = sbr.rel (%p334) target = $region40
      $region39: #{residual_block_forward.7} parent=35 // pred_region
        %s337 = smul.u32 8, %s25
        %p338 = scmp.lt.s32.totalorder %s24, 1
        %s339 = scalar_select %p338, %s24, 1
        %p340 = scmp.lt.s32.totalorder %s337, 15
        %s341 = scalar_select %p340, %s337, 15
        %s342 = smul.addr %s341, 2
        %s343 = smul.addr %s339, 32
        %s344 = sadd.s32 %s342, %s343
        %s345 = smul.addr %s344, 8
        %s346 = scalar_lea.vmem %s0, %s345
        %s347 = smul.u32 8, %s25
      $region40: #{residual_block_forward.7} parent=35 // pred_fallthru
        _
      // Predicated region
      $region41: #{residual_block_forward.7} parent=35 // pred_check
        %p348 = pneg %p85
      $region42: #{residual_block_forward.7} parent=35 // pred_check_branch
        %350 = sbr.rel (%p348) target = $region44
      $region43: #{residual_block_forward.7} parent=35 // pred_region
        %s351 = ssub.s32 %s25, 1
        %p352 = scmp.gt.s32.totalorder %s351, 0
        %s353 = scalar_select %p352, %s351, 0
        %s354 = smul.u32 8, %s353
        %p355 = scmp.lt.s32.totalorder %s24, 1
        %s356 = scalar_select %p355, %s24, 1
        %p357 = scmp.lt.s32.totalorder %s354, 15
        %s358 = scalar_select %p357, %s354, 15
        %s359 = smul.addr %s358, 2
        %s360 = smul.addr %s356, 32
        %s361 = sadd.s32 %s359, %s360
        %s362 = smul.addr %s361, 8
        %s363 = scalar_lea.vmem %s1, %s362
        %s364 = ssub.s32 %s25, 1
        %p365 = scmp.gt.s32.totalorder %s364, 0
        %s366 = scalar_select %p365, %s364, 0
        %s367 = smul.u32 8, %s366
      $region44: #{residual_block_forward.7} parent=35 // pred_fallthru
        _
      // Predicated region
      $region45: #{residual_block_forward.7} parent=35 // pred_check
        %p368 = pneg %p119
      $region46: #{residual_block_forward.7} parent=35 // pred_check_branch
        %370 = sbr.rel (%p368) target = $region48
      $region47: #{residual_block_forward.7} parent=35 // pred_region
        %s371 = sadd.s32 %s25, 1
        %p372 = scmp.lt.s32.totalorder %s371, 1
        %s373 = scalar_select %p372, %s371, 1
        %s374 = smul.u32 8, %s373
        %p375 = scmp.lt.s32.totalorder %s24, 1
        %s376 = scalar_select %p375, %s24, 1
        %p377 = scmp.lt.s32.totalorder %s374, 15
        %s378 = scalar_select %p377, %s374, 15
        %s379 = smul.addr %s378, 2
        %s380 = smul.addr %s376, 32
        %s381 = sadd.s32 %s379, %s380
        %s382 = smul.addr %s381, 8
        %s383 = scalar_lea.vmem %s2, %s382
        %s384 = sadd.s32 %s25, 1
        %p385 = scmp.lt.s32.totalorder %s384, 1
        %s386 = scalar_select %p385, %s384, 1
        %s387 = smul.u32 8, %s386
      $region48: #{residual_block_forward.7} parent=35 // pred_fallthru
        _
    $region36: #{residual_block_forward.7} parent=5 // pred_fallthru
      _
    %p388 = scmp.le.s32.totalorder 1, %s17
    %p389 = scmp.lt.s32.totalorder %s17, 5
    %p390 = pnand %p388, %p389
    %p391 = pneg %p390
    // Predicated region
    $region49: #{residual_block_forward.7} parent=5 // pred_check
      _
    $region50: #{residual_block_forward.7} parent=5 // pred_check_branch
      %393 = sbr.rel (%p390) target = $region52
    $region51: #{residual_block_forward.7} parent=5 // pred_region
      %s394 = ssub.s32 %s17, 1
      %s395 = smul.u32 8, %s27
      %p396 = scmp.lt.s32.totalorder %s26, 1
      %s397 = scalar_select %p396, %s26, 1
      %p398 = scmp.lt.s32.totalorder %s395, 15
      %s399 = scalar_select %p398, %s395, 15
      %s400 = smul.addr %s399, 2
      %s401 = smul.addr %s397, 32
      %s402 = sadd.s32 %s400, %s401
      %s403 = smul.addr %s402, 8
      %s404 = scalar_lea.vmem %s0, %s403
      %p405 = pneg %p57
      %p406 = pneg %p54
      %s407 = ssub.s32 %s27, 1
      %p408 = scmp.gt.s32.totalorder %s407, 0
      %s409 = scalar_select %p408, %s407, 0
      %s410 = smul.u32 8, %s409
      %p411 = scmp.lt.s32.totalorder %s26, 1
      %s412 = scalar_select %p411, %s26, 1
      %p413 = scmp.lt.s32.totalorder %s410, 15
      %s414 = scalar_select %p413, %s410, 15
      %s415 = smul.addr %s414, 2
      %s416 = smul.addr %s412, 32
      %s417 = sadd.s32 %s415, %s416
      %s418 = smul.addr %s417, 8
      %s419 = scalar_lea.vmem %s1, %s418
      %p420 = pneg %p91
      %p421 = pneg %p88
      %s422 = sadd.s32 %s27, 1
      %p423 = scmp.lt.s32.totalorder %s422, 1
      %s424 = scalar_select %p423, %s422, 1
      %s425 = smul.u32 8, %s424
      %p426 = scmp.lt.s32.totalorder %s26, 1
      %s427 = scalar_select %p426, %s26, 1
      %p428 = scmp.lt.s32.totalorder %s425, 15
      %s429 = scalar_select %p428, %s425, 15
      %s430 = smul.addr %s429, 2
      %s431 = smul.addr %s427, 32
      %s432 = sadd.s32 %s430, %s431
      %s433 = smul.addr %s432, 8
      %s434 = scalar_lea.vmem %s2, %s433
      %p435 = pneg %p125
      %p436 = pneg %p122
      %p437 = pneg %p146
      %p438 = pneg %p143
      %p439 = pneg %p167
      %p440 = pneg %p164
      %p441 = pneg %p188
      %p442 = pneg %p185
      %p443 = pneg %p209
      %p444 = pneg %p206
      %p445 = pneg %p230
      %p446 = pneg %p227
      %p447 = pneg %p258
      %p448 = pneg %p255
      %s449 = smul.u32 8, %s27
      %p450 = scmp.lt.s32.totalorder %s26, 1
      %s451 = scalar_select %p450, %s26, 1
      %p452 = scmp.lt.s32.totalorder %s449, 15
      %s453 = scalar_select %p452, %s449, 15
      %s454 = smul.addr %s453, 2
      %s455 = smul.addr %s451, 32
      %s456 = sadd.s32 %s454, %s455
      %s457 = smul.addr %s456, 8
      %s458 = scalar_lea.vmem %s8, %s457
      %p459 = pneg %p279
      %p460 = pneg %p276
      %p461 = pneg %p300
      %p462 = pneg %p297
      %s463 = smul.u32 8, %s27
      %p464 = scmp.lt.s32.totalorder %s26, 1
      %s465 = scalar_select %p464, %s26, 1
      %p466 = scmp.lt.s32.totalorder %s463, 15
      %s467 = scalar_select %p466, %s463, 15
      %s468 = smul.addr %s467, 2
      %s469 = smul.addr %s465, 32
      %s470 = sadd.s32 %s468, %s469
      %s471 = smul.addr %s470, 8
      %s472 = scalar_lea.vmem %s0, %s471
      %s473 = smul.u32 8, %s27
      %s474 = ssub.s32 %s27, 1
      %p475 = scmp.gt.s32.totalorder %s474, 0
      %s476 = scalar_select %p475, %s474, 0
      %s477 = smul.u32 8, %s476
      %p478 = scmp.lt.s32.totalorder %s26, 1
      %s479 = scalar_select %p478, %s26, 1
      %p480 = scmp.lt.s32.totalorder %s477, 15
      %s481 = scalar_select %p480, %s477, 15
      %s482 = smul.addr %s481, 2
      %s483 = smul.addr %s479, 32
      %s484 = sadd.s32 %s482, %s483
      %s485 = smul.addr %s484, 8
      %s486 = scalar_lea.vmem %s1, %s485
      %s487 = ssub.s32 %s27, 1
      %p488 = scmp.gt.s32.totalorder %s487, 0
      %s489 = scalar_select %p488, %s487, 0
      %s490 = smul.u32 8, %s489
      %s491 = sadd.s32 %s27, 1
      %p492 = scmp.lt.s32.totalorder %s491, 1
      %s493 = scalar_select %p492, %s491, 1
      %s494 = smul.u32 8, %s493
      %p495 = scmp.lt.s32.totalorder %s26, 1
      %s496 = scalar_select %p495, %s26, 1
      %p497 = scmp.lt.s32.totalorder %s494, 15
      %s498 = scalar_select %p497, %s494, 15
      %s499 = smul.addr %s498, 2
      %s500 = smul.addr %s496, 32
      %s501 = sadd.s32 %s499, %s500
      %s502 = smul.addr %s501, 8
      %s503 = scalar_lea.vmem %s2, %s502
      %s504 = sadd.s32 %s27, 1
      %p505 = scmp.lt.s32.totalorder %s504, 1
      %s506 = scalar_select %p505, %s504, 1
      %s507 = smul.u32 8, %s506
      %s508 = smul.u32 8, %s27
      %p509 = scmp.lt.s32.totalorder %s26, 1
      %s510 = scalar_select %p509, %s26, 1
      %p511 = scmp.lt.s32.totalorder %s508, 15
      %s512 = scalar_select %p511, %s508, 15
      %s513 = smul.addr %s512, 2
      %s514 = smul.addr %s510, 32
      %s515 = sadd.s32 %s513, %s514
      %s516 = smul.addr %s515, 8
      %s517 = scalar_lea.vmem %s8, %s516
      %s518 = smul.u32 8, %s27
      %p519 = scmp.eq.s32.totalorder %s26, 0
      %p520 = scmp.eq.s32.totalorder %s27, 0
      %p521 = pnand %p519, %p520
      %p522 = pneg %p521
      // Predicated region
      $region53: #{residual_block_forward.7} parent=51 // pred_check
        _
      $region54: #{residual_block_forward.7} parent=51 // pred_check_branch
        %524 = sbr.rel (%p521) target = $region56
      $region55: #{residual_block_forward.7} parent=51 // pred_region
        %vm525 = vcmask 15360
        %526 = vst.msk [vmem:[#allocation2] sm:$0xff] %vm525, 0.0
        %527 = vst.msk [vmem:[#allocation2 + $0x8] sm:$0xff] %vm525, 0.0
        %528 = vst.msk [vmem:[#allocation2 + $0x10] sm:$0xff] %vm525, 0.0
        %529 = vst.msk [vmem:[#allocation2 + $0x18] sm:$0xff] %vm525, 0.0
        %530 = vst.msk [vmem:[#allocation2 + $0x20] sm:$0xff] %vm525, 0.0
        %531 = vst.msk [vmem:[#allocation2 + $0x28] sm:$0xff] %vm525, 0.0
        %532 = vst.msk [vmem:[#allocation2 + $0x30] sm:$0xff] %vm525, 0.0
        %533 = vst.msk [vmem:[#allocation2 + $0x38] sm:$0xff] %vm525, 0.0
        %534 = vst.msk [vmem:[#allocation2 + $0x40] sm:$0xff] %vm525, 0.0
        %535 = vst.msk [vmem:[#allocation2 + $0x48] sm:$0xff] %vm525, 0.0
        %536 = vst.msk [vmem:[#allocation2 + $0x50] sm:$0xff] %vm525, 0.0
        %537 = vst.msk [vmem:[#allocation2 + $0x58] sm:$0xff] %vm525, 0.0
        %538 = vst.msk [vmem:[#allocation2 + $0x60] sm:$0xff] %vm525, 0.0
        %539 = vst.msk [vmem:[#allocation2 + $0x68] sm:$0xff] %vm525, 0.0
        %540 = vst.msk [vmem:[#allocation2 + $0x70] sm:$0xff] %vm525, 0.0
        %541 = vst.msk [vmem:[#allocation2 + $0x78] sm:$0xff] %vm525, 0.0
        %542 = vst.msk [vmem:[#allocation2 + $0x80] sm:$0xff] %vm525, 0.0
        %543 = vst.msk [vmem:[#allocation2 + $0x88] sm:$0xff] %vm525, 0.0
        %544 = vst.msk [vmem:[#allocation2 + $0x90] sm:$0xff] %vm525, 0.0
        %545 = vst.msk [vmem:[#allocation2 + $0x98] sm:$0xff] %vm525, 0.0
        %546 = vst.msk [vmem:[#allocation2 + $0xa0] sm:$0xff] %vm525, 0.0
        %547 = vst.msk [vmem:[#allocation2 + $0xa8] sm:$0xff] %vm525, 0.0
        %548 = vst.msk [vmem:[#allocation2 + $0xb0] sm:$0xff] %vm525, 0.0
        %vm549 = vcmask 24576
        %550 = vst.msk [vmem:[%s9] sm:$0x1] %vm549, 0.0
        %551 = vst.msk [vmem:[%s10] sm:$0x1] %vm549, 0.0
      $region56: #{residual_block_forward.7} parent=51 // pred_fallthru
        _
      %v552 = vld [vmem:[%s3] sm:$0x1]
      %v553 = vld [vmem:[%s4] sm:$0x1]
      %v554 = vld [vmem:[%s5] sm:$0x1]
      %v555 = vld [vmem:[%s6] sm:$0x1]
      %v556 = vmul.f32 %v552, 0.001953125
      %v557 = vmul.f32 %v553, 0.001953125
      %v558 = vmul.f32 %v556, %v556
      %v559 = vsub.f32 %v557, %v558
      %v560 = vmax.f32 %v559, 0.0
      %v561 = vadd.f32 %v560, 1e-05
      %v562 = vrsqrt.pop %v561
      %v563 = vmul.f32 %v554, %v562
      %v564 = vmul.f32 %v556, %v563
      %v565 = vsub.f32 %v555, %v564
      %v566 = vld [vmem:[%s472] sm:$0xff]
      %v567 = vld [vmem:[%s472 + $0x8] sm:$0xff]
      %v568 = vld [vmem:[%s472 + $0x10] sm:$0xff]
      %v569 = vld [vmem:[%s472 + $0x18] sm:$0xff]
      %v570 = vld [vmem:[%s472 + $0x20] sm:$0xff]
      %v571 = vld [vmem:[%s472 + $0x28] sm:$0xff]
      %v572 = vld [vmem:[%s472 + $0x30] sm:$0xff]
      %v573 = vld [vmem:[%s472 + $0x38] sm:$0xff]
      %v574 = vld [vmem:[%s472 + $0x40] sm:$0xff]
      %v575 = vld [vmem:[%s472 + $0x48] sm:$0xff]
      %v576 = vld [vmem:[%s472 + $0x50] sm:$0xff]
      %v577 = vld [vmem:[%s472 + $0x58] sm:$0xff]
      %v578 = vld [vmem:[%s472 + $0x60] sm:$0xff]
      %v579 = vld [vmem:[%s472 + $0x68] sm:$0xff]
      %v580 = vld [vmem:[%s472 + $0x70] sm:$0xff]
      %v581 = vld [vmem:[%s472 + $0x78] sm:$0xff]
      %v583 = vlaneseq
      %v584 = vshrl.u32 %v583, 7
      %v585 = vsub.s32 0, %v584
      %v586 = vrot.slane %v563, %v585
      %v588 = vmul.f32 %v566, %v586
      %v589 = vmul.f32 %v567, %v586
      %v590 = vmul.f32 %v568, %v586
      %v591 = vmul.f32 %v569, %v586
      %v592 = vmul.f32 %v570, %v586
      %v593 = vmul.f32 %v571, %v586
      %v594 = vmul.f32 %v572, %v586
      %v595 = vmul.f32 %v573, %v586
      %v596 = vmul.f32 %v574, %v586
      %v597 = vmul.f32 %v575, %v586
      %v598 = vmul.f32 %v576, %v586
      %v599 = vmul.f32 %v577, %v586
      %v600 = vmul.f32 %v578, %v586
      %v601 = vmul.f32 %v579, %v586
      %v602 = vmul.f32 %v580, %v586
      %v603 = vmul.f32 %v581, %v586
      %v605 = vlaneseq
      %v606 = vshrl.u32 %v605, 7
      %v607 = vsub.s32 0, %v606
      %v608 = vrot.slane %v565, %v607
      %v610 = vadd.f32 %v588, %v608
      %v611 = vadd.f32 %v589, %v608
      %v612 = vadd.f32 %v590, %v608
      %v613 = vadd.f32 %v591, %v608
      %v614 = vadd.f32 %v592, %v608
      %v615 = vadd.f32 %v593, %v608
      %v616 = vadd.f32 %v594, %v608
      %v617 = vadd.f32 %v595, %v608
      %v618 = vadd.f32 %v596, %v608
      %v619 = vadd.f32 %v597, %v608
      %v620 = vadd.f32 %v598, %v608
      %v621 = vadd.f32 %v599, %v608
      %v622 = vadd.f32 %v600, %v608
      %v623 = vadd.f32 %v601, %v608
      %v624 = vadd.f32 %v602, %v608
      %v625 = vadd.f32 %v603, %v608
      %vm626 = vcmp.ge.f32.partialorder %v610, 0.0
      %vm627 = vcmp.ge.f32.partialorder %v611, 0.0
      %vm628 = vcmp.ge.f32.partialorder %v612, 0.0
      %vm629 = vcmp.ge.f32.partialorder %v613, 0.0
      %vm630 = vcmp.ge.f32.partialorder %v614, 0.0
      %vm631 = vcmp.ge.f32.partialorder %v615, 0.0
      %vm632 = vcmp.ge.f32.partialorder %v616, 0.0
      %vm633 = vcmp.ge.f32.partialorder %v617, 0.0
      %vm634 = vcmp.ge.f32.partialorder %v618, 0.0
      %vm635 = vcmp.ge.f32.partialorder %v619, 0.0
      %vm636 = vcmp.ge.f32.partialorder %v620, 0.0
      %vm637 = vcmp.ge.f32.partialorder %v621, 0.0
      %vm638 = vcmp.ge.f32.partialorder %v622, 0.0
      %vm639 = vcmp.ge.f32.partialorder %v623, 0.0
      %vm640 = vcmp.ge.f32.partialorder %v624, 0.0
      %vm641 = vcmp.ge.f32.partialorder %v625, 0.0
      %v642 = vmul.f32 %v610, 0.1
      %v643 = vmul.f32 %v611, 0.1
      %v644 = vmul.f32 %v612, 0.1
      %v645 = vmul.f32 %v613, 0.1
      %v646 = vmul.f32 %v614, 0.1
      %v647 = vmul.f32 %v615, 0.1
      %v648 = vmul.f32 %v616, 0.1
      %v649 = vmul.f32 %v617, 0.1
      %v650 = vmul.f32 %v618, 0.1
      %v651 = vmul.f32 %v619, 0.1
      %v652 = vmul.f32 %v620, 0.1
      %v653 = vmul.f32 %v621, 0.1
      %v654 = vmul.f32 %v622, 0.1
      %v655 = vmul.f32 %v623, 0.1
      %v656 = vmul.f32 %v624, 0.1
      %v657 = vmul.f32 %v625, 0.1
      %v658 = vsel %vm626, %v610, %v642
      %v659 = vsel %vm627, %v611, %v643
      %v660 = vsel %vm628, %v612, %v644
      %v661 = vsel %vm629, %v613, %v645
      %v662 = vsel %vm630, %v614, %v646
      %v663 = vsel %vm631, %v615, %v647
      %v664 = vsel %vm632, %v616, %v648
      %v665 = vsel %vm633, %v617, %v649
      %v666 = vsel %vm634, %v618, %v650
      %v667 = vsel %vm635, %v619, %v651
      %v668 = vsel %vm636, %v620, %v652
      %v669 = vsel %vm637, %v621, %v653
      %v670 = vsel %vm638, %v622, %v654
      %v671 = vsel %vm639, %v623, %v655
      %v672 = vsel %vm640, %v624, %v656
      %v673 = vsel %vm641, %v625, %v657
      %vm674 = vcmask 15360
      %675 = vst.msk [vmem:[#allocation2 + $0x13] sm:$0xff] %vm674, %v658
      %676 = vst.msk [vmem:[#allocation2 + $0x1b] sm:$0xff] %vm674, %v659
      %677 = vst.msk [vmem:[#allocation2 + $0x25] sm:$0xff] %vm674, %v660
      %678 = vst.msk [vmem:[#allocation2 + $0x2d] sm:$0xff] %vm674, %v661
      %679 = vst.msk [vmem:[#allocation2 + $0x37] sm:$0xff] %vm674, %v662
      %680 = vst.msk [vmem:[#allocation2 + $0x3f] sm:$0xff] %vm674, %v663
      %681 = vst.msk [vmem:[#allocation2 + $0x49] sm:$0xff] %vm674, %v664
      %682 = vst.msk [vmem:[#allocation2 + $0x51] sm:$0xff] %vm674, %v665
      %683 = vst.msk [vmem:[#allocation2 + $0x5b] sm:$0xff] %vm674, %v666
      %684 = vst.msk [vmem:[#allocation2 + $0x63] sm:$0xff] %vm674, %v667
      %685 = vst.msk [vmem:[#allocation2 + $0x6d] sm:$0xff] %vm674, %v668
      %686 = vst.msk [vmem:[#allocation2 + $0x75] sm:$0xff] %vm674, %v669
      %687 = vst.msk [vmem:[#allocation2 + $0x7f] sm:$0xff] %vm674, %v670
      %688 = vst.msk [vmem:[#allocation2 + $0x87] sm:$0xff] %vm674, %v671
      %689 = vst.msk [vmem:[#allocation2 + $0x91] sm:$0xff] %vm674, %v672
      %690 = vst.msk [vmem:[#allocation2 + $0x99] sm:$0xff] %vm674, %v673
      %p691 = scmp.gt.s32.totalorder %s27, 0
      %s692 = scalar_lea.vmem %s486, 112
      %v693 = vld [vmem:[%s692] sm:$0xff]
      %v694 = vld [vmem:[%s692 + $0x8] sm:$0xff]
      %v695 = vmul.f32 %v693, %v586
      %v696 = vmul.f32 %v694, %v586
      %v697 = vadd.f32 %v695, %v608
      %v698 = vadd.f32 %v696, %v608
      %vm699 = vcmp.ge.f32.partialorder %v697, 0.0
      %vm700 = vcmp.ge.f32.partialorder %v698, 0.0
      %v701 = vmul.f32 %v697, 0.1
      %v702 = vmul.f32 %v698, 0.1
      %v703 = vsel %vm699, %v697, %v701
      %v704 = vsel %vm700, %v698, %v702
      %s705 = scalar_select %p691, 1, 0
      %v706 = vstv %s705
      %vm707 = vcmp.eq.s32.totalorder %v706, 1
      %v708 = vsel %vm707, %v703, 0.0
      %v709 = vsel %vm707, %v704, 0.0
      %710 = vst.msk [vmem:[#allocation2 + $0x1] sm:$0xff] %vm674, %v708
      %711 = vst.msk [vmem:[#allocation2 + $0x9] sm:$0xff] %vm674, %v709
      %p712 = scmp.lt.s32.totalorder %s27, 1
      %v713 = vld [vmem:[%s503] sm:$0xff]
      %v714 = vld [vmem:[%s503 + $0x8] sm:$0xff]
      %v715 = vmul.f32 %v713, %v586
      %v716 = vmul.f32 %v714, %v586
      %v717 = vadd.f32 %v715, %v608
      %v718 = vadd.f32 %v716, %v608
      %vm719 = vcmp.ge.f32.partialorder %v717, 0.0
      %vm720 = vcmp.ge.f32.partialorder %v718, 0.0
      %v721 = vmul.f32 %v717, 0.1
      %v722 = vmul.f32 %v718, 0.1
      %v723 = vsel %vm719, %v717, %v721
      %v724 = vsel %vm720, %v718, %v722
      %s725 = scalar_select %p712, 1, 0
      %v726 = vstv %s725
      %vm727 = vcmp.eq.s32.totalorder %v726, 1
      %v728 = vsel %vm727, %v723, 0.0
      %v729 = vsel %vm727, %v724, 0.0
      %730 = vst.msk [vmem:[#allocation2 + $0xa3] sm:$0xff] %vm674, %v728
      %731 = vst.msk [vmem:[#allocation2 + $0xab] sm:$0xff] %vm674, %v729
      %v732 = vld [vmem:[#allocation2] sm:$0xff]
      %v733 = vld [vmem:[#allocation2 + $0x8] sm:$0xff]
      %v734 = vld [vmem:[#allocation2 + $0x10] sm:$0xff]
      %v735 = vld [vmem:[#allocation2 + $0x18] sm:$0xff]
      %v736 = vld [vmem:[#allocation2 + $0x20] sm:$0xff]
      %v737 = vld [vmem:[#allocation2 + $0x28] sm:$0xff]
      %v738 = vld [vmem:[#allocation2 + $0x30] sm:$0xff]
      %v739 = vld [vmem:[#allocation2 + $0x38] sm:$0xff]
      %v740 = vld [vmem:[#allocation2 + $0x40] sm:$0xff]
      %v741 = vld [vmem:[#allocation2 + $0x48] sm:$0xff]
      %v742 = vld [vmem:[#allocation2 + $0x50] sm:$0xff]
      %v743 = vld [vmem:[#allocation2 + $0x58] sm:$0xff]
      %v744 = vld [vmem:[#allocation2 + $0x60] sm:$0xff]
      %v745 = vld [vmem:[#allocation2 + $0x68] sm:$0xff]
      %v746 = vld [vmem:[#allocation2 + $0x70] sm:$0xff]
      %v747 = vld [vmem:[#allocation2 + $0x78] sm:$0xff]
      %v748 = vld [vmem:[#allocation2 + $0x80] sm:$0xff]
      %v749 = vld [vmem:[#allocation2 + $0x88] sm:$0xff]
      %v750 = vld [vmem:[%s7] sm:$0x3]
      %v751 = vld [vmem:[#allocation2 + $0x1] sm:$0xff]
      %v752 = vld [vmem:[#allocation2 + $0x9] sm:$0xff]
      %v753 = vld [vmem:[#allocation2 + $0x11] sm:$0xff]
      %v754 = vld [vmem:[#allocation2 + $0x19] sm:$0xff]
      %v755 = vld [vmem:[#allocation2 + $0x21] sm:$0xff]
      %v756 = vld [vmem:[#allocation2 + $0x29] sm:$0xff]
      %v757 = vld [vmem:[#allocation2 + $0x31] sm:$0xff]
      %v758 = vld [vmem:[#allocation2 + $0x39] sm:$0xff]
      %v759 = vld [vmem:[#allocation2 + $0x41] sm:$0xff]
      %v760 = vld [vmem:[#allocation2 + $0x49] sm:$0xff]
      %v761 = vld [vmem:[#allocation2 + $0x51] sm:$0xff]
      %v762 = vld [vmem:[#allocation2 + $0x59] sm:$0xff]
      %v763 = vld [vmem:[#allocation2 + $0x61] sm:$0xff]
      %v764 = vld [vmem:[#allocation2 + $0x69] sm:$0xff]
      %v765 = vld [vmem:[#allocation2 + $0x71] sm:$0xff]
      %v766 = vld [vmem:[#allocation2 + $0x79] sm:$0xff]
      %v767 = vld [vmem:[#allocation2 + $0x81] sm:$0xff]
      %v768 = vld [vmem:[#allocation2 + $0x89] sm:$0xff]
      %s769 = scalar_lea.vmem %s7, 2
      %v770 = vld [vmem:[%s769] sm:$0x3]
      %v772 = vsel %vm674, %v751, 0
      %v775 = vsel %vm674, %v752, 0
      %v778 = vsel %vm674, %v753, 0
      %v781 = vsel %vm674, %v754, 0
      %v784 = vsel %vm674, %v755, 0
      %v787 = vsel %vm674, %v756, 0
      %v790 = vsel %vm674, %v757, 0
      %v793 = vsel %vm674, %v758, 0
      %v796 = vsel %vm674, %v759, 0
      %v799 = vsel %vm674, %v760, 0
      %v802 = vsel %vm674, %v761, 0
      %v805 = vsel %vm674, %v762, 0
      %v808 = vsel %vm674, %v763, 0
      %v811 = vsel %vm674, %v764, 0
      %v814 = vsel %vm674, %v765, 0
      %v817 = vsel %vm674, %v766, 0
      %v820 = vsel %vm674, %v767, 0
      %v823 = vsel %vm674, %v768, 0
      %vm825 = vcmask 1041408
      %v827 = vsel %vm825, %v770, 0
      %829 = vmatprep.subr.mxu0 0.0
      %830 = vmatpush1.msra.mxu0 %v827
      %831 = vmatprep.subr.mxu0 0.0
      %832 = vmatpush1.msra.mxu0 0.0
      %833 = vmatprep.subr.mxu0 0.0
      %834 = vmatpush1.msra.mxu0 0.0
      %835 = vmatprep.subr.mxu0 0.0
      %836 = vmatpush1.msra.mxu0 0.0
      %837 = vmatprep.subr.mxu0 0.0
      %838 = vmatpush1.msra.mxu0 0.0
      %839 = vmatprep.subr.mxu0 0.0
      %840 = vmatpush1.msra.mxu0 0.0
      %841 = vmatprep.subr.mxu0 0.0
      %842 = vmatpush1.msra.mxu0 0.0
      %843 = vmatprep.subr.mxu0 0.0
      %844 = vmatpush1.msra.mxu0 0.0
      %845 = vmatprep.subr.mxu0 0.0
      %846 = vmatpush1.msra.mxu0 0.0
      %847 = vmatprep.subr.mxu0 0.0
      %848 = vmatpush1.msra.mxu0 0.0
      %849 = vmatprep.subr.mxu0 0.0
      %850 = vmatpush1.msra.mxu0 0.0
      %851 = vmatprep.subr.mxu0 0.0
      %852 = vmatpush1.msra.mxu0 0.0
      %853 = vmatprep.subr.mxu0 0.0
      %854 = vmatpush1.msra.mxu0 0.0
      %855 = vmatprep.subr.mxu0 0.0
      %856 = vmatpush1.msra.mxu0 0.0
      %857 = vmatprep.subr.mxu0 0.0
      %858 = vmatpush1.msra.mxu0 0.0
      %859 = vmatprep.subr.mxu0 0.0
      %860 = vmatpush1.msra.mxu0 0.0
      %861 = vmatprep.subr.mxu0 0.0
      %862 = vmatpush1.msra.mxu0 0.0
      %863 = vmatprep.subr.mxu0 0.0
      %864 = vmatpush1.msra.mxu0 0.0
      %865 = vmatprep.subr.mxu0 0.0
      %866 = vmatpush1.msra.mxu0 0.0
      %867 = vmatprep.subr.mxu0 0.0
      %868 = vmatpush1.msra.mxu0 0.0
      %869 = vmatprep.subr.mxu0 0.0
      %870 = vmatpush1.msra.mxu0 0.0
      %871 = vmatprep.subr.mxu0 0.0
      %872 = vmatpush1.msra.mxu0 0.0
      %873 = vmatprep.subr.mxu0 0.0
      %874 = vmatpush1.msra.mxu0 0.0
      %875 = vmatprep.subr.mxu0 0.0
      %876 = vmatpush1.msra.mxu0 0.0
      %877 = vmatprep.subr.mxu0 0.0
      %878 = vmatpush1.msra.mxu0 0.0
      %879 = vmatprep.subr.mxu0 0.0
      %880 = vmatpush1.msra.mxu0 0.0
      %881 = vmatprep.subr.mxu0 0.0
      %882 = vmatpush1.msra.mxu0 0.0
      %883 = vmatprep.subr.mxu0 0.0
      %884 = vmatpush1.msra.mxu0 0.0
      %885 = vmatprep.subr.mxu0 0.0
      %886 = vmatpush1.msra.mxu0 0.0
      %887 = vmatprep.subr.mxu0 0.0
      %888 = vmatpush1.msra.mxu0 0.0
      %889 = vmatprep.subr.mxu0 0.0
      %890 = vmatpush1.msra.mxu0 0.0
      %891 = vmatprep.subr.mxu0 0.0
      %892 = vmatpush1.msra.mxu0 0.0
      %893 = vmatprep.mubr.f32.mxu0 0.0
      %894 = vmatmul.mubr.f32.gmra.mrb[0].mxu0 %v772
      %v895 = vpop.f32.mrb[0].mxu0
      %v896 = vadd.f32 0.0, %v895
      %v897 = vpop.f32.mrb[0].mxu0
      %898 = vmatprep.mubr.f32.mxu0 0.0
      %899 = vmatmul.mubr.f32.gmra.mrb[0].mxu0 %v775
      %v900 = vpop.f32.mrb[0].mxu0
      %v901 = vadd.f32 0.0, %v900
      %v902 = vpop.f32.mrb[0].mxu0
      %903 = vmatprep.mubr.f32.mxu0 0.0
      %904 = vmatmul.mubr.f32.gmra.mrb[0].mxu0 %v778
      %v905 = vpop.f32.mrb[0].mxu0
      %v906 = vadd.f32 0.0, %v905
      %v907 = vpop.f32.mrb[0].mxu0
      %908 = vmatprep.mubr.f32.mxu0 0.0
      %909 = vmatmul.mubr.f32.gmra.mrb[0].mxu0 %v781
      %v910 = vpop.f32.mrb[0].mxu0
      %v911 = vadd.f32 0.0, %v910
      %v912 = vpop.f32.mrb[0].mxu0
      %913 = vmatprep.mubr.f32.mxu0 0.0
      %914 = vmatmul.mubr.f32.gmra.mrb[0].mxu0 %v784
      %v915 = vpop.f32.mrb[0].mxu0
      %v916 = vadd.f32 0.0, %v915
      %v917 = vpop.f32.mrb[0].mxu0
      %918 = vmatprep.mubr.f32.mxu0 0.0
      %919 = vmatmul.mubr.f32.gmra.mrb[0].mxu0 %v787
      %v920 = vpop.f32.mrb[0].mxu0
      %v921 = vadd.f32 0.0, %v920
      %v922 = vpop.f32.mrb[0].mxu0
      %923 = vmatprep.mubr.f32.mxu0 0.0
      %924 = vmatmul.mubr.f32.gmra.mrb[0].mxu0 %v790
      %v925 = vpop.f32.mrb[0].mxu0
      %v926 = vadd.f32 0.0, %v925
      %v927 = vpop.f32.mrb[0].mxu0
      %928 = vmatprep.mubr.f32.mxu0 0.0
      %929 = vmatmul.mubr.f32.gmra.mrb[0].mxu0 %v793
      %v930 = vpop.f32.mrb[0].mxu0
      %v931 = vadd.f32 0.0, %v930
      %v932 = vpop.f32.mrb[0].mxu0
      %933 = vmatprep.mubr.f32.mxu0 0.0
      %934 = vmatmul.mubr.f32.gmra.mrb[0].mxu0 %v796
      %v935 = vpop.f32.mrb[0].mxu0
      %v936 = vadd.f32 0.0, %v935
      %v937 = vpop.f32.mrb[0].mxu0
      %938 = vmatprep.mubr.f32.mxu0 0.0
      %939 = vmatmul.mubr.f32.gmra.mrb[0].mxu0 %v799
      %v940 = vpop.f32.mrb[0].mxu0
      %v941 = vadd.f32 0.0, %v940
      %v942 = vpop.f32.mrb[0].mxu0
      %943 = vmatprep.mubr.f32.mxu0 0.0
      %944 = vmatmul.mubr.f32.gmra.mrb[0].mxu0 %v802
      %v945 = vpop.f32.mrb[0].mxu0
      %v946 = vadd.f32 0.0, %v945
      %v947 = vpop.f32.mrb[0].mxu0
      %948 = vmatprep.mubr.f32.mxu0 0.0
      %949 = vmatmul.mubr.f32.gmra.mrb[0].mxu0 %v805
      %v950 = vpop.f32.mrb[0].mxu0
      %v951 = vadd.f32 0.0, %v950
      %v952 = vpop.f32.mrb[0].mxu0
      %953 = vmatprep.mubr.f32.mxu0 0.0
      %954 = vmatmul.mubr.f32.gmra.mrb[0].mxu0 %v808
      %v955 = vpop.f32.mrb[0].mxu0
      %v956 = vadd.f32 0.0, %v955
      %v957 = vpop.f32.mrb[0].mxu0
      %958 = vmatprep.mubr.f32.mxu0 0.0
      %959 = vmatmul.mubr.f32.gmra.mrb[0].mxu0 %v811
      %v960 = vpop.f32.mrb[0].mxu0
      %v961 = vadd.f32 0.0, %v960
      %v962 = vpop.f32.mrb[0].mxu0
      %963 = vmatprep.mubr.f32.mxu0 0.0
      %964 = vmatmul.mubr.f32.gmra.mrb[0].mxu0 %v814
      %v965 = vpop.f32.mrb[0].mxu0
      %v966 = vadd.f32 0.0, %v965
      %v967 = vpop.f32.mrb[0].mxu0
      %968 = vmatprep.mubr.f32.mxu0 0.0
      %969 = vmatmul.mubr.f32.gmra.mrb[0].mxu0 %v817
      %v970 = vpop.f32.mrb[0].mxu0
      %v971 = vadd.f32 0.0, %v970
      %v972 = vpop.f32.mrb[0].mxu0
      %973 = vmatprep.mubr.f32.mxu0 0.0
      %974 = vmatmul.mubr.f32.gmra.mrb[0].mxu0 %v820
      %v975 = vpop.f32.mrb[0].mxu0
      %v976 = vadd.f32 0.0, %v975
      %v977 = vpop.f32.mrb[0].mxu0
      %978 = vmatprep.mubr.f32.mxu0 0.0
      %979 = vmatmul.mubr.f32.gmra.mrb[0].mxu0 %v823
      %v980 = vpop.f32.mrb[0].mxu0
      %v981 = vadd.f32 0.0, %v980
      %v982 = vpop.f32.mrb[0].mxu0
      %983 = vdwg.mxu0
      %v985 = vsel %vm674, %v732, 0
      %v988 = vsel %vm674, %v733, 0
      %v991 = vsel %vm674, %v734, 0
      %v994 = vsel %vm674, %v735, 0
      %v997 = vsel %vm674, %v736, 0
      %v1000 = vsel %vm674, %v737, 0
      %v1003 = vsel %vm674, %v738, 0
      %v1006 = vsel %vm674, %v739, 0
      %v1009 = vsel %vm674, %v740, 0
      %v1012 = vsel %vm674, %v741, 0
      %v1015 = vsel %vm674, %v742, 0
      %v1018 = vsel %vm674, %v743, 0
      %v1021 = vsel %vm674, %v744, 0
      %v1024 = vsel %vm674, %v745, 0
      %v1027 = vsel %vm674, %v746, 0
      %v1030 = vsel %vm674, %v747, 0
      %v1033 = vsel %vm674, %v748, 0
      %v1036 = vsel %vm674, %v749, 0
      %v1039 = vsel %vm825, %v750, 0
      %1041 = vmatprep.subr.mxu0 0.0
      %1042 = vmatpush1.msra.mxu0 %v1039
      %1043 = vmatprep.subr.mxu0 0.0
      %1044 = vmatpush1.msra.mxu0 0.0
      %1045 = vmatprep.subr.mxu0 0.0
      %1046 = vmatpush1.msra.mxu0 0.0
      %1047 = vmatprep.subr.mxu0 0.0
      %1048 = vmatpush1.msra.mxu0 0.0
      %1049 = vmatprep.subr.mxu0 0.0
      %1050 = vmatpush1.msra.mxu0 0.0
      %1051 = vmatprep.subr.mxu0 0.0
      %1052 = vmatpush1.msra.mxu0 0.0
      %1053 = vmatprep.subr.mxu0 0.0
      %1054 = vmatpush1.msra.mxu0 0.0
      %1055 = vmatprep.subr.mxu0 0.0
      %1056 = vmatpush1.msra.mxu0 0.0
      %1057 = vmatprep.subr.mxu0 0.0
      %1058 = vmatpush1.msra.mxu0 0.0
      %1059 = vmatprep.subr.mxu0 0.0
      %1060 = vmatpush1.msra.mxu0 0.0
      %1061 = vmatprep.subr.mxu0 0.0
      %1062 = vmatpush1.msra.mxu0 0.0
      %1063 = vmatprep.subr.mxu0 0.0
      %1064 = vmatpush1.msra.mxu0 0.0
      %1065 = vmatprep.subr.mxu0 0.0
      %1066 = vmatpush1.msra.mxu0 0.0
      %1067 = vmatprep.subr.mxu0 0.0
      %1068 = vmatpush1.msra.mxu0 0.0
      %1069 = vmatprep.subr.mxu0 0.0
      %1070 = vmatpush1.msra.mxu0 0.0
      %1071 = vmatprep.subr.mxu0 0.0
      %1072 = vmatpush1.msra.mxu0 0.0
      %1073 = vmatprep.subr.mxu0 0.0
      %1074 = vmatpush1.msra.mxu0 0.0
      %1075 = vmatprep.subr.mxu0 0.0
      %1076 = vmatpush1.msra.mxu0 0.0
      %1077 = vmatprep.subr.mxu0 0.0
      %1078 = vmatpush1.msra.mxu0 0.0
      %1079 = vmatprep.subr.mxu0 0.0
      %1080 = vmatpush1.msra.mxu0 0.0
      %1081 = vmatprep.subr.mxu0 0.0
      %1082 = vmatpush1.msra.mxu0 0.0
      %1083 = vmatprep.subr.mxu0 0.0
      %1084 = vmatpush1.msra.mxu0 0.0
      %1085 = vmatprep.subr.mxu0 0.0
      %1086 = vmatpush1.msra.mxu0 0.0
      %1087 = vmatprep.subr.mxu0 0.0
      %1088 = vmatpush1.msra.mxu0 0.0
      %1089 = vmatprep.subr.mxu0 0.0
      %1090 = vmatpush1.msra.mxu0 0.0
      %1091 = vmatprep.subr.mxu0 0.0
      %1092 = vmatpush1.msra.mxu0 0.0
      %1093 = vmatprep.subr.mxu0 0.0
      %1094 = vmatpush1.msra.mxu0 0.0
      %1095 = vmatprep.subr.mxu0 0.0
      %1096 = vmatpush1.msra.mxu0 0.0
      %1097 = vmatprep.subr.mxu0 0.0
      %1098 = vmatpush1.msra.mxu0 0.0
      %1099 = vmatprep.subr.mxu0 0.0
      %1100 = vmatpush1.msra.mxu0 0.0
      %1101 = vmatprep.subr.mxu0 0.0
      %1102 = vmatpush1.msra.mxu0 0.0
      %1103 = vmatprep.subr.mxu0 0.0
      %1104 = vmatpush1.msra.mxu0 0.0
      %1105 = vmatprep.mubr.f32.mxu0 0.0
      %1106 = vmatmul.mubr.f32.gmra.mrb[0].mxu0 %v985
      %v1107 = vpop.f32.mrb[0].mxu0
      %v1108 = vadd.f32 %v896, %v1107
      %v1109 = vpop.f32.mrb[0].mxu0
      %1110 = vmatprep.mubr.f32.mxu0 0.0
      %1111 = vmatmul.mubr.f32.gmra.mrb[0].mxu0 %v988
      %v1112 = vpop.f32.mrb[0].mxu0
      %v1113 = vadd.f32 %v901, %v1112
      %v1114 = vpop.f32.mrb[0].mxu0
      %1115 = vmatprep.mubr.f32.mxu0 0.0
      %1116 = vmatmul.mubr.f32.gmra.mrb[0].mxu0 %v991
      %v1117 = vpop.f32.mrb[0].mxu0
      %v1118 = vadd.f32 %v906, %v1117
      %v1119 = vpop.f32.mrb[0].mxu0
      %1120 = vmatprep.mubr.f32.mxu0 0.0
      %1121 = vmatmul.mubr.f32.gmra.mrb[0].mxu0 %v994
      %v1122 = vpop.f32.mrb[0].mxu0
      %v1123 = vadd.f32 %v911, %v1122
      %v1124 = vpop.f32.mrb[0].mxu0
      %1125 = vmatprep.mubr.f32.mxu0 0.0
      %1126 = vmatmul.mubr.f32.gmra.mrb[0].mxu0 %v997
      %v1127 = vpop.f32.mrb[0].mxu0
      %v1128 = vadd.f32 %v916, %v1127
      %v1129 = vpop.f32.mrb[0].mxu0
      %1130 = vmatprep.mubr.f32.mxu0 0.0
      %1131 = vmatmul.mubr.f32.gmra.mrb[0].mxu0 %v1000
      %v1132 = vpop.f32.mrb[0].mxu0
      %v1133 = vadd.f32 %v921, %v1132
      %v1134 = vpop.f32.mrb[0].mxu0
      %1135 = vmatprep.mubr.f32.mxu0 0.0
      %1136 = vmatmul.mubr.f32.gmra.mrb[0].mxu0 %v1003
      %v1137 = vpop.f32.mrb[0].mxu0
      %v1138 = vadd.f32 %v926, %v1137
      %v1139 = vpop.f32.mrb[0].mxu0
      %1140 = vmatprep.mubr.f32.mxu0 0.0
      %1141 = vmatmul.mubr.f32.gmra.mrb[0].mxu0 %v1006
      %v1142 = vpop.f32.mrb[0].mxu0
      %v1143 = vadd.f32 %v931, %v1142
      %v1144 = vpop.f32.mrb[0].mxu0
      %1145 = vmatprep.mubr.f32.mxu0 0.0
      %1146 = vmatmul.mubr.f32.gmra.mrb[0].mxu0 %v1009
      %v1147 = vpop.f32.mrb[0].mxu0
      %v1148 = vadd.f32 %v936, %v1147
      %v1149 = vpop.f32.mrb[0].mxu0
      %1150 = vmatprep.mubr.f32.mxu0 0.0
      %1151 = vmatmul.mubr.f32.gmra.mrb[0].mxu0 %v1012
      %v1152 = vpop.f32.mrb[0].mxu0
      %v1153 = vadd.f32 %v941, %v1152
      %v1154 = vpop.f32.mrb[0].mxu0
      %1155 = vmatprep.mubr.f32.mxu0 0.0
      %1156 = vmatmul.mubr.f32.gmra.mrb[0].mxu0 %v1015
      %v1157 = vpop.f32.mrb[0].mxu0
      %v1158 = vadd.f32 %v946, %v1157
      %v1159 = vpop.f32.mrb[0].mxu0
      %1160 = vmatprep.mubr.f32.mxu0 0.0
      %1161 = vmatmul.mubr.f32.gmra.mrb[0].mxu0 %v1018
      %v1162 = vpop.f32.mrb[0].mxu0
      %v1163 = vadd.f32 %v951, %v1162
      %v1164 = vpop.f32.mrb[0].mxu0
      %1165 = vmatprep.mubr.f32.mxu0 0.0
      %1166 = vmatmul.mubr.f32.gmra.mrb[0].mxu0 %v1021
      %v1167 = vpop.f32.mrb[0].mxu0
      %v1168 = vadd.f32 %v956, %v1167
      %v1169 = vpop.f32.mrb[0].mxu0
      %1170 = vmatprep.mubr.f32.mxu0 0.0
      %1171 = vmatmul.mubr.f32.gmra.mrb[0].mxu0 %v1024
      %v1172 = vpop.f32.mrb[0].mxu0
      %v1173 = vadd.f32 %v961, %v1172
      %v1174 = vpop.f32.mrb[0].mxu0
      %1175 = vmatprep.mubr.f32.mxu0 0.0
      %1176 = vmatmul.mubr.f32.gmra.mrb[0].mxu0 %v1027
      %v1177 = vpop.f32.mrb[0].mxu0
      %v1178 = vadd.f32 %v966, %v1177
      %v1179 = vpop.f32.mrb[0].mxu0
      %1180 = vmatprep.mubr.f32.mxu0 0.0
      %1181 = vmatmul.mubr.f32.gmra.mrb[0].mxu0 %v1030
      %v1182 = vpop.f32.mrb[0].mxu0
      %v1183 = vadd.f32 %v971, %v1182
      %v1184 = vpop.f32.mrb[0].mxu0
      %1185 = vmatprep.mubr.f32.mxu0 0.0
      %1186 = vmatmul.mubr.f32.gmra.mrb[0].mxu0 %v1033
      %v1187 = vpop.f32.mrb[0].mxu0
      %v1188 = vadd.f32 %v976, %v1187
      %v1189 = vpop.f32.mrb[0].mxu0
      %1190 = vmatprep.mubr.f32.mxu0 0.0
      %1191 = vmatmul.mubr.f32.gmra.mrb[0].mxu0 %v1036
      %v1192 = vpop.f32.mrb[0].mxu0
      %v1193 = vadd.f32 %v981, %v1192
      %v1194 = vpop.f32.mrb[0].mxu0
      %1195 = vdwg.mxu0
      %v1196 = vld [vmem:[#allocation2 + $0x2] sm:$0xff]
      %v1197 = vld [vmem:[#allocation2 + $0xa] sm:$0xff]
      %v1198 = vld [vmem:[#allocation2 + $0x12] sm:$0xff]
      %v1199 = vld [vmem:[#allocation2 + $0x1a] sm:$0xff]
      %v1200 = vld [vmem:[#allocation2 + $0x22] sm:$0xff]
      %v1201 = vld [vmem:[#allocation2 + $0x2a] sm:$0xff]
      %v1202 = vld [vmem:[#allocation2 + $0x32] sm:$0xff]
      %v1203 = vld [vmem:[#allocation2 + $0x3a] sm:$0xff]
      %v1204 = vld [vmem:[#allocation2 + $0x42] sm:$0xff]
      %v1205 = vld [vmem:[#allocation2 + $0x4a] sm:$0xff]
      %v1206 = vld [vmem:[#allocation2 + $0x52] sm:$0xff]
      %v1207 = vld [vmem:[#allocation2 + $0x5a] sm:$0xff]
      %v1208 = vld [vmem:[#allocation2 + $0x62] sm:$0xff]
      %v1209 = vld [vmem:[#allocation2 + $0x6a] sm:$0xff]
      %v1210 = vld [vmem:[#allocation2 + $0x72] sm:$0xff]
      %v1211 = vld [vmem:[#allocation2 + $0x7a] sm:$0xff]
      %v1212 = vld [vmem:[#allocation2 + $0x82] sm:$0xff]
      %v1213 = vld [vmem:[#allocation2 + $0x8a] sm:$0xff]
      %s1214 = scalar_lea.vmem %s7, 4
      %v1215 = vld [vmem:[%s1214] sm:$0x3]
      %v1217 = vsel %vm674, %v1196, 0
      %v1220 = vsel %vm674, %v1197, 0
      %v1223 = vsel %vm674, %v1198, 0
      %v1226 = vsel %vm674, %v1199, 0
      %v1229 = vsel %vm674, %v1200, 0
      %v1232 = vsel %vm674, %v1201, 0
      %v1235 = vsel %vm674, %v1202, 0
      %v1238 = vsel %vm674, %v1203, 0
      %v1241 = vsel %vm674, %v1204, 0
      %v1244 = vsel %vm674, %v1205, 0
      %v1247 = vsel %vm674, %v1206, 0
      %v1250 = vsel %vm674, %v1207, 0
      %v1253 = vsel %vm674, %v1208, 0
      %v1256 = vsel %vm674, %v1209, 0
      %v1259 = vsel %vm674, %v1210, 0
      %v1262 = vsel %vm674, %v1211, 0
      %v1265 = vsel %vm674, %v1212, 0
      %v1268 = vsel %vm674, %v1213, 0
      %v1271 = vsel %vm825, %v1215, 0
      %1273 = vmatprep.subr.mxu0 0.0
      %1274 = vmatpush1.msra.mxu0 %v1271
      %1275 = vmatprep.subr.mxu0 0.0
      %1276 = vmatpush1.msra.mxu0 0.0
      %1277 = vmatprep.subr.mxu0 0.0
      %1278 = vmatpush1.msra.mxu0 0.0
      %1279 = vmatprep.subr.mxu0 0.0
      %1280 = vmatpush1.msra.mxu0 0.0
      %1281 = vmatprep.subr.mxu0 0.0
      %1282 = vmatpush1.msra.mxu0 0.0
      %1283 = vmatprep.subr.mxu0 0.0
      %1284 = vmatpush1.msra.mxu0 0.0
      %1285 = vmatprep.subr.mxu0 0.0
      %1286 = vmatpush1.msra.mxu0 0.0
      %1287 = vmatprep.subr.mxu0 0.0
      %1288 = vmatpush1.msra.mxu0 0.0
      %1289 = vmatprep.subr.mxu0 0.0
      %1290 = vmatpush1.msra.mxu0 0.0
      %1291 = vmatprep.subr.mxu0 0.0
      %1292 = vmatpush1.msra.mxu0 0.0
      %1293 = vmatprep.subr.mxu0 0.0
      %1294 = vmatpush1.msra.mxu0 0.0
      %1295 = vmatprep.subr.mxu0 0.0
      %1296 = vmatpush1.msra.mxu0 0.0
      %1297 = vmatprep.subr.mxu0 0.0
      %1298 = vmatpush1.msra.mxu0 0.0
      %1299 = vmatprep.subr.mxu0 0.0
      %1300 = vmatpush1.msra.mxu0 0.0
      %1301 = vmatprep.subr.mxu0 0.0
      %1302 = vmatpush1.msra.mxu0 0.0
      %1303 = vmatprep.subr.mxu0 0.0
      %1304 = vmatpush1.msra.mxu0 0.0
      %1305 = vmatprep.subr.mxu0 0.0
      %1306 = vmatpush1.msra.mxu0 0.0
      %1307 = vmatprep.subr.mxu0 0.0
      %1308 = vmatpush1.msra.mxu0 0.0
      %1309 = vmatprep.subr.mxu0 0.0
      %1310 = vmatpush1.msra.mxu0 0.0
      %1311 = vmatprep.subr.mxu0 0.0
      %1312 = vmatpush1.msra.mxu0 0.0
      %1313 = vmatprep.subr.mxu0 0.0
      %1314 = vmatpush1.msra.mxu0 0.0
      %1315 = vmatprep.subr.mxu0 0.0
      %1316 = vmatpush1.msra.mxu0 0.0
      %1317 = vmatprep.subr.mxu0 0.0
      %1318 = vmatpush1.msra.mxu0 0.0
      %1319 = vmatprep.subr.mxu0 0.0
      %1320 = vmatpush1.msra.mxu0 0.0
      %1321 = vmatprep.subr.mxu0 0.0
      %1322 = vmatpush1.msra.mxu0 0.0
      %1323 = vmatprep.subr.mxu0 0.0
      %1324 = vmatpush1.msra.mxu0 0.0
      %1325 = vmatprep.subr.mxu0 0.0
      %1326 = vmatpush1.msra.mxu0 0.0
      %1327 = vmatprep.subr.mxu0 0.0
      %1328 = vmatpush1.msra.mxu0 0.0
      %1329 = vmatprep.subr.mxu0 0.0
      %1330 = vmatpush1.msra.mxu0 0.0
      %1331 = vmatprep.subr.mxu0 0.0
      %1332 = vmatpush1.msra.mxu0 0.0
      %1333 = vmatprep.subr.mxu0 0.0
      %1334 = vmatpush1.msra.mxu0 0.0
      %1335 = vmatprep.subr.mxu0 0.0
      %1336 = vmatpush1.msra.mxu0 0.0
      %1337 = vmatprep.mubr.f32.mxu0 0.0
      %1338 = vmatmul.mubr.f32.gmra.mrb[0].mxu0 %v1217
      %v1339 = vpop.f32.mrb[0].mxu0
      %v1340 = vadd.f32 0.0, %v1339
      %v1341 = vpop.f32.mrb[0].mxu0
      %1342 = vmatprep.mubr.f32.mxu0 0.0
      %1343 = vmatmul.mubr.f32.gmra.mrb[0].mxu0 %v1220
      %v1344 = vpop.f32.mrb[0].mxu0
      %v1345 = vadd.f32 0.0, %v1344
      %v1346 = vpop.f32.mrb[0].mxu0
      %1347 = vmatprep.mubr.f32.mxu0 0.0
      %1348 = vmatmul.mubr.f32.gmra.mrb[0].mxu0 %v1223
      %v1349 = vpop.f32.mrb[0].mxu0
      %v1350 = vadd.f32 0.0, %v1349
      %v1351 = vpop.f32.mrb[0].mxu0
      %1352 = vmatprep.mubr.f32.mxu0 0.0
      %1353 = vmatmul.mubr.f32.gmra.mrb[0].mxu0 %v1226
      %v1354 = vpop.f32.mrb[0].mxu0
      %v1355 = vadd.f32 0.0, %v1354
      %v1356 = vpop.f32.mrb[0].mxu0
      %1357 = vmatprep.mubr.f32.mxu0 0.0
      %1358 = vmatmul.mubr.f32.gmra.mrb[0].mxu0 %v1229
      %v1359 = vpop.f32.mrb[0].mxu0
      %v1360 = vadd.f32 0.0, %v1359
      %v1361 = vpop.f32.mrb[0].mxu0
      %1362 = vmatprep.mubr.f32.mxu0 0.0
      %1363 = vmatmul.mubr.f32.gmra.mrb[0].mxu0 %v1232
      %v1364 = vpop.f32.mrb[0].mxu0
      %v1365 = vadd.f32 0.0, %v1364
      %v1366 = vpop.f32.mrb[0].mxu0
      %1367 = vmatprep.mubr.f32.mxu0 0.0
      %1368 = vmatmul.mubr.f32.gmra.mrb[0].mxu0 %v1235
      %v1369 = vpop.f32.mrb[0].mxu0
      %v1370 = vadd.f32 0.0, %v1369
      %v1371 = vpop.f32.mrb[0].mxu0
      %1372 = vmatprep.mubr.f32.mxu0 0.0
      %1373 = vmatmul.mubr.f32.gmra.mrb[0].mxu0 %v1238
      %v1374 = vpop.f32.mrb[0].mxu0
      %v1375 = vadd.f32 0.0, %v1374
      %v1376 = vpop.f32.mrb[0].mxu0
      %1377 = vmatprep.mubr.f32.mxu0 0.0
      %1378 = vmatmul.mubr.f32.gmra.mrb[0].mxu0 %v1241
      %v1379 = vpop.f32.mrb[0].mxu0
      %v1380 = vadd.f32 0.0, %v1379
      %v1381 = vpop.f32.mrb[0].mxu0
      %1382 = vmatprep.mubr.f32.mxu0 0.0
      %1383 = vmatmul.mubr.f32.gmra.mrb[0].mxu0 %v1244
      %v1384 = vpop.f32.mrb[0].mxu0
      %v1385 = vadd.f32 0.0, %v1384
      %v1386 = vpop.f32.mrb[0].mxu0
      %1387 = vmatprep.mubr.f32.mxu0 0.0
      %1388 = vmatmul.mubr.f32.gmra.mrb[0].mxu0 %v1247
      %v1389 = vpop.f32.mrb[0].mxu0
      %v1390 = vadd.f32 0.0, %v1389
      %v1391 = vpop.f32.mrb[0].mxu0
      %1392 = vmatprep.mubr.f32.mxu0 0.0
      %1393 = vmatmul.mubr.f32.gmra.mrb[0].mxu0 %v1250
      %v1394 = vpop.f32.mrb[0].mxu0
      %v1395 = vadd.f32 0.0, %v1394
      %v1396 = vpop.f32.mrb[0].mxu0
      %1397 = vmatprep.mubr.f32.mxu0 0.0
      %1398 = vmatmul.mubr.f32.gmra.mrb[0].mxu0 %v1253
      %v1399 = vpop.f32.mrb[0].mxu0
      %v1400 = vadd.f32 0.0, %v1399
      %v1401 = vpop.f32.mrb[0].mxu0
      %1402 = vmatprep.mubr.f32.mxu0 0.0
      %1403 = vmatmul.mubr.f32.gmra.mrb[0].mxu0 %v1256
      %v1404 = vpop.f32.mrb[0].mxu0
      %v1405 = vadd.f32 0.0, %v1404
      %v1406 = vpop.f32.mrb[0].mxu0
      %1407 = vmatprep.mubr.f32.mxu0 0.0
      %1408 = vmatmul.mubr.f32.gmra.mrb[0].mxu0 %v1259
      %v1409 = vpop.f32.mrb[0].mxu0
      %v1410 = vadd.f32 0.0, %v1409
      %v1411 = vpop.f32.mrb[0].mxu0
      %1412 = vmatprep.mubr.f32.mxu0 0.0
      %1413 = vmatmul.mubr.f32.gmra.mrb[0].mxu0 %v1262
      %v1414 = vpop.f32.mrb[0].mxu0
      %v1415 = vadd.f32 0.0, %v1414
      %v1416 = vpop.f32.mrb[0].mxu0
      %1417 = vmatprep.mubr.f32.mxu0 0.0
      %1418 = vmatmul.mubr.f32.gmra.mrb[0].mxu0 %v1265
      %v1419 = vpop.f32.mrb[0].mxu0
      %v1420 = vadd.f32 0.0, %v1419
      %v1421 = vpop.f32.mrb[0].mxu0
      %1422 = vmatprep.mubr.f32.mxu0 0.0
      %1423 = vmatmul.mubr.f32.gmra.mrb[0].mxu0 %v1268
      %v1424 = vpop.f32.mrb[0].mxu0
      %v1425 = vadd.f32 0.0, %v1424
      %v1426 = vpop.f32.mrb[0].mxu0
      %1427 = vdwg.mxu0
      %v1428 = vadd.f32 %v1108, %v1340
      %v1429 = vadd.f32 %v1113, %v1345
      %v1430 = vadd.f32 %v1118, %v1350
      %v1431 = vadd.f32 %v1123, %v1355
      %v1432 = vadd.f32 %v1128, %v1360
      %v1433 = vadd.f32 %v1133, %v1365
      %v1434 = vadd.f32 %v1138, %v1370
      %v1435 = vadd.f32 %v1143, %v1375
      %v1436 = vadd.f32 %v1148, %v1380
      %v1437 = vadd.f32 %v1153, %v1385
      %v1438 = vadd.f32 %v1158, %v1390
      %v1439 = vadd.f32 %v1163, %v1395
      %v1440 = vadd.f32 %v1168, %v1400
      %v1441 = vadd.f32 %v1173, %v1405
      %v1442 = vadd.f32 %v1178, %v1410
      %v1443 = vadd.f32 %v1183, %v1415
      %v1444 = vadd.f32 %v1188, %v1420
      %v1445 = vadd.f32 %v1193, %v1425
      %v1446 = vld [vmem:[#allocation2 + $0x12] sm:$0xff]
      %v1447 = vld [vmem:[#allocation2 + $0x1a] sm:$0xff]
      %v1448 = vld [vmem:[#allocation2 + $0x22] sm:$0xff]
      %v1449 = vld [vmem:[#allocation2 + $0x2a] sm:$0xff]
      %v1450 = vld [vmem:[#allocation2 + $0x32] sm:$0xff]
      %v1451 = vld [vmem:[#allocation2 + $0x3a] sm:$0xff]
      %v1452 = vld [vmem:[#allocation2 + $0x42] sm:$0xff]
      %v1453 = vld [vmem:[#allocation2 + $0x4a] sm:$0xff]
      %v1454 = vld [vmem:[#allocation2 + $0x52] sm:$0xff]
      %v1455 = vld [vmem:[#allocation2 + $0x5a] sm:$0xff]
      %v1456 = vld [vmem:[#allocation2 + $0x62] sm:$0xff]
      %v1457 = vld [vmem:[#allocation2 + $0x6a] sm:$0xff]
      %v1458 = vld [vmem:[#allocation2 + $0x72] sm:$0xff]
      %v1459 = vld [vmem:[#allocation2 + $0x7a] sm:$0xff]
      %v1460 = vld [vmem:[#allocation2 + $0x82] sm:$0xff]
      %v1461 = vld [vmem:[#allocation2 + $0x8a] sm:$0xff]
      %v1462 = vld [vmem:[#allocation2 + $0x92] sm:$0xff]
      %v1463 = vld [vmem:[#allocation2 + $0x9a] sm:$0xff]
      %s1464 = scalar_lea.vmem %s7, 6
      %v1465 = vld [vmem:[%s1464] sm:$0x3]
      %v1467 = vsel %vm674, %v1446, 0
      %v1470 = vsel %vm674, %v1447, 0
      %v1473 = vsel %vm674, %v1448, 0
      %v1476 = vsel %vm674, %v1449, 0
      %v1479 = vsel %vm674, %v1450, 0
      %v1482 = vsel %vm674, %v1451, 0
      %v1485 = vsel %vm674, %v1452, 0
      %v1488 = vsel %vm674, %v1453, 0
      %v1491 = vsel %vm674, %v1454, 0
      %v1494 = vsel %vm674, %v1455, 0
      %v1497 = vsel %vm674, %v1456, 0
      %v1500 = vsel %vm674, %v1457, 0
      %v1503 = vsel %vm674, %v1458, 0
      %v1506 = vsel %vm674, %v1459, 0
      %v1509 = vsel %vm674, %v1460, 0
      %v1512 = vsel %vm674, %v1461, 0
      %v1515 = vsel %vm674, %v1462, 0
      %v1518 = vsel %vm674, %v1463, 0
      %v1521 = vsel %vm825, %v1465, 0
      %1523 = vmatprep.subr.mxu0 0.0
      %1524 = vmatpush1.msra.mxu0 %v1521
      %1525 = vmatprep.subr.mxu0 0.0
      %1526 = vmatpush1.msra.mxu0 0.0
      %1527 = vmatprep.subr.mxu0 0.0
      %1528 = vmatpush1.msra.mxu0 0.0
      %1529 = vmatprep.subr.mxu0 0.0
      %1530 = vmatpush1.msra.mxu0 0.0
      %1531 = vmatprep.subr.mxu0 0.0
      %1532 = vmatpush1.msra.mxu0 0.0
      %1533 = vmatprep.subr.mxu0 0.0
      %1534 = vmatpush1.msra.mxu0 0.0
      %1535 = vmatprep.subr.mxu0 0.0
      %1536 = vmatpush1.msra.mxu0 0.0
      %1537 = vmatprep.subr.mxu0 0.0
      %1538 = vmatpush1.msra.mxu0 0.0
      %1539 = vmatprep.subr.mxu0 0.0
      %1540 = vmatpush1.msra.mxu0 0.0
      %1541 = vmatprep.subr.mxu0 0.0
      %1542 = vmatpush1.msra.mxu0 0.0
      %1543 = vmatprep.subr.mxu0 0.0
      %1544 = vmatpush1.msra.mxu0 0.0
      %1545 = vmatprep.subr.mxu0 0.0
      %1546 = vmatpush1.msra.mxu0 0.0
      %1547 = vmatprep.subr.mxu0 0.0
      %1548 = vmatpush1.msra.mxu0 0.0
      %1549 = vmatprep.subr.mxu0 0.0
      %1550 = vmatpush1.msra.mxu0 0.0
      %1551 = vmatprep.subr.mxu0 0.0
      %1552 = vmatpush1.msra.mxu0 0.0
      %1553 = vmatprep.subr.mxu0 0.0
      %1554 = vmatpush1.msra.mxu0 0.0
      %1555 = vmatprep.subr.mxu0 0.0
      %1556 = vmatpush1.msra.mxu0 0.0
      %1557 = vmatprep.subr.mxu0 0.0
      %1558 = vmatpush1.msra.mxu0 0.0
      %1559 = vmatprep.subr.mxu0 0.0
      %1560 = vmatpush1.msra.mxu0 0.0
      %1561 = vmatprep.subr.mxu0 0.0
      %1562 = vmatpush1.msra.mxu0 0.0
      %1563 = vmatprep.subr.mxu0 0.0
      %1564 = vmatpush1.msra.mxu0 0.0
      %1565 = vmatprep.subr.mxu0 0.0
      %1566 = vmatpush1.msra.mxu0 0.0
      %1567 = vmatprep.subr.mxu0 0.0
      %1568 = vmatpush1.msra.mxu0 0.0
      %1569 = vmatprep.subr.mxu0 0.0
      %1570 = vmatpush1.msra.mxu0 0.0
      %1571 = vmatprep.subr.mxu0 0.0
      %1572 = vmatpush1.msra.mxu0 0.0
      %1573 = vmatprep.subr.mxu0 0.0
      %1574 = vmatpush1.msra.mxu0 0.0
      %1575 = vmatprep.subr.mxu0 0.0
      %1576 = vmatpush1.msra.mxu0 0.0
      %1577 = vmatprep.subr.mxu0 0.0
      %1578 = vmatpush1.msra.mxu0 0.0
      %1579 = vmatprep.subr.mxu0 0.0
      %1580 = vmatpush1.msra.mxu0 0.0
      %1581 = vmatprep.subr.mxu0 0.0
      %1582 = vmatpush1.msra.mxu0 0.0
      %1583 = vmatprep.subr.mxu0 0.0
      %1584 = vmatpush1.msra.mxu0 0.0
      %1585 = vmatprep.subr.mxu0 0.0
      %1586 = vmatpush1.msra.mxu0 0.0
      %1587 = vmatprep.mubr.f32.mxu0 0.0
      %1588 = vmatmul.mubr.f32.gmra.mrb[0].mxu0 %v1467
      %v1589 = vpop.f32.mrb[0].mxu0
      %v1590 = vadd.f32 0.0, %v1589
      %v1591 = vpop.f32.mrb[0].mxu0
      %1592 = vmatprep.mubr.f32.mxu0 0.0
      %1593 = vmatmul.mubr.f32.gmra.mrb[0].mxu0 %v1470
      %v1594 = vpop.f32.mrb[0].mxu0
      %v1595 = vadd.f32 0.0, %v1594
      %v1596 = vpop.f32.mrb[0].mxu0
      %1597 = vmatprep.mubr.f32.mxu0 0.0
      %1598 = vmatmul.mubr.f32.gmra.mrb[0].mxu0 %v1473
      %v1599 = vpop.f32.mrb[0].mxu0
      %v1600 = vadd.f32 0.0, %v1599
      %v1601 = vpop.f32.mrb[0].mxu0
      %1602 = vmatprep.mubr.f32.mxu0 0.0
      %1603 = vmatmul.mubr.f32.gmra.mrb[0].mxu0 %v1476
      %v1604 = vpop.f32.mrb[0].mxu0
      %v1605 = vadd.f32 0.0, %v1604
      %v1606 = vpop.f32.mrb[0].mxu0
      %1607 = vmatprep.mubr.f32.mxu0 0.0
      %1608 = vmatmul.mubr.f32.gmra.mrb[0].mxu0 %v1479
      %v1609 = vpop.f32.mrb[0].mxu0
      %v1610 = vadd.f32 0.0, %v1609
      %v1611 = vpop.f32.mrb[0].mxu0
      %1612 = vmatprep.mubr.f32.mxu0 0.0
      %1613 = vmatmul.mubr.f32.gmra.mrb[0].mxu0 %v1482
      %v1614 = vpop.f32.mrb[0].mxu0
      %v1615 = vadd.f32 0.0, %v1614
      %v1616 = vpop.f32.mrb[0].mxu0
      %1617 = vmatprep.mubr.f32.mxu0 0.0
      %1618 = vmatmul.mubr.f32.gmra.mrb[0].mxu0 %v1485
      %v1619 = vpop.f32.mrb[0].mxu0
      %v1620 = vadd.f32 0.0, %v1619
      %v1621 = vpop.f32.mrb[0].mxu0
      %1622 = vmatprep.mubr.f32.mxu0 0.0
      %1623 = vmatmul.mubr.f32.gmra.mrb[0].mxu0 %v1488
      %v1624 = vpop.f32.mrb[0].mxu0
      %v1625 = vadd.f32 0.0, %v1624
      %v1626 = vpop.f32.mrb[0].mxu0
      %1627 = vmatprep.mubr.f32.mxu0 0.0
      %1628 = vmatmul.mubr.f32.gmra.mrb[0].mxu0 %v1491
      %v1629 = vpop.f32.mrb[0].mxu0
      %v1630 = vadd.f32 0.0, %v1629
      %v1631 = vpop.f32.mrb[0].mxu0
      %1632 = vmatprep.mubr.f32.mxu0 0.0
      %1633 = vmatmul.mubr.f32.gmra.mrb[0].mxu0 %v1494
      %v1634 = vpop.f32.mrb[0].mxu0
      %v1635 = vadd.f32 0.0, %v1634
      %v1636 = vpop.f32.mrb[0].mxu0
      %1637 = vmatprep.mubr.f32.mxu0 0.0
      %1638 = vmatmul.mubr.f32.gmra.mrb[0].mxu0 %v1497
      %v1639 = vpop.f32.mrb[0].mxu0
      %v1640 = vadd.f32 0.0, %v1639
      %v1641 = vpop.f32.mrb[0].mxu0
      %1642 = vmatprep.mubr.f32.mxu0 0.0
      %1643 = vmatmul.mubr.f32.gmra.mrb[0].mxu0 %v1500
      %v1644 = vpop.f32.mrb[0].mxu0
      %v1645 = vadd.f32 0.0, %v1644
      %v1646 = vpop.f32.mrb[0].mxu0
      %1647 = vmatprep.mubr.f32.mxu0 0.0
      %1648 = vmatmul.mubr.f32.gmra.mrb[0].mxu0 %v1503
      %v1649 = vpop.f32.mrb[0].mxu0
      %v1650 = vadd.f32 0.0, %v1649
      %v1651 = vpop.f32.mrb[0].mxu0
      %1652 = vmatprep.mubr.f32.mxu0 0.0
      %1653 = vmatmul.mubr.f32.gmra.mrb[0].mxu0 %v1506
      %v1654 = vpop.f32.mrb[0].mxu0
      %v1655 = vadd.f32 0.0, %v1654
      %v1656 = vpop.f32.mrb[0].mxu0
      %1657 = vmatprep.mubr.f32.mxu0 0.0
      %1658 = vmatmul.mubr.f32.gmra.mrb[0].mxu0 %v1509
      %v1659 = vpop.f32.mrb[0].mxu0
      %v1660 = vadd.f32 0.0, %v1659
      %v1661 = vpop.f32.mrb[0].mxu0
      %1662 = vmatprep.mubr.f32.mxu0 0.0
      %1663 = vmatmul.mubr.f32.gmra.mrb[0].mxu0 %v1512
      %v1664 = vpop.f32.mrb[0].mxu0
      %v1665 = vadd.f32 0.0, %v1664
      %v1666 = vpop.f32.mrb[0].mxu0
      %1667 = vmatprep.mubr.f32.mxu0 0.0
      %1668 = vmatmul.mubr.f32.gmra.mrb[0].mxu0 %v1515
      %v1669 = vpop.f32.mrb[0].mxu0
      %v1670 = vadd.f32 0.0, %v1669
      %v1671 = vpop.f32.mrb[0].mxu0
      %1672 = vmatprep.mubr.f32.mxu0 0.0
      %1673 = vmatmul.mubr.f32.gmra.mrb[0].mxu0 %v1518
      %v1674 = vpop.f32.mrb[0].mxu0
      %v1675 = vadd.f32 0.0, %v1674
      %v1676 = vpop.f32.mrb[0].mxu0
      %1677 = vdwg.mxu0
      %v1678 = vadd.f32 %v1428, %v1590
      %v1679 = vadd.f32 %v1429, %v1595
      %v1680 = vadd.f32 %v1430, %v1600
      %v1681 = vadd.f32 %v1431, %v1605
      %v1682 = vadd.f32 %v1432, %v1610
      %v1683 = vadd.f32 %v1433, %v1615
      %v1684 = vadd.f32 %v1434, %v1620
      %v1685 = vadd.f32 %v1435, %v1625
      %v1686 = vadd.f32 %v1436, %v1630
      %v1687 = vadd.f32 %v1437, %v1635
      %v1688 = vadd.f32 %v1438, %v1640
      %v1689 = vadd.f32 %v1439, %v1645
      %v1690 = vadd.f32 %v1440, %v1650
      %v1691 = vadd.f32 %v1441, %v1655
      %v1692 = vadd.f32 %v1442, %v1660
      %v1693 = vadd.f32 %v1443, %v1665
      %v1694 = vadd.f32 %v1444, %v1670
      %v1695 = vadd.f32 %v1445, %v1675
      %v1696 = vld [vmem:[#allocation2 + $0x13] sm:$0xff]
      %v1697 = vld [vmem:[#allocation2 + $0x1b] sm:$0xff]
      %v1698 = vld [vmem:[#allocation2 + $0x23] sm:$0xff]
      %v1699 = vld [vmem:[#allocation2 + $0x2b] sm:$0xff]
      %v1700 = vld [vmem:[#allocation2 + $0x33] sm:$0xff]
      %v1701 = vld [vmem:[#allocation2 + $0x3b] sm:$0xff]
      %v1702 = vld [vmem:[#allocation2 + $0x43] sm:$0xff]
      %v1703 = vld [vmem:[#allocation2 + $0x4b] sm:$0xff]
      %v1704 = vld [vmem:[#allocation2 + $0x53] sm:$0xff]
      %v1705 = vld [vmem:[#allocation2 + $0x5b] sm:$0xff]
      %v1706 = vld [vmem:[#allocation2 + $0x63] sm:$0xff]
      %v1707 = vld [vmem:[#allocation2 + $0x6b] sm:$0xff]
      %v1708 = vld [vmem:[#allocation2 + $0x73] sm:$0xff]
      %v1709 = vld [vmem:[#allocation2 + $0x7b] sm:$0xff]
      %v1710 = vld [vmem:[#allocation2 + $0x83] sm:$0xff]
      %v1711 = vld [vmem:[#allocation2 + $0x8b] sm:$0xff]
      %v1712 = vld [vmem:[#allocation2 + $0x93] sm:$0xff]
      %v1713 = vld [vmem:[#allocation2 + $0x9b] sm:$0xff]
      %s1714 = scalar_lea.vmem %s7, 8
      %v1715 = vld [vmem:[%s1714] sm:$0x3]
      %v1717 = vsel %vm674, %v1696, 0
      %v1720 = vsel %vm674, %v1697, 0
      %v1723 = vsel %vm674, %v1698, 0
      %v1726 = vsel %vm674, %v1699, 0
      %v1729 = vsel %vm674, %v1700, 0
      %v1732 = vsel %vm674, %v1701, 0
      %v1735 = vsel %vm674, %v1702, 0
      %v1738 = vsel %vm674, %v1703, 0
      %v1741 = vsel %vm674, %v1704, 0
      %v1744 = vsel %vm674, %v1705, 0
      %v1747 = vsel %vm674, %v1706, 0
      %v1750 = vsel %vm674, %v1707, 0
      %v1753 = vsel %vm674, %v1708, 0
      %v1756 = vsel %vm674, %v1709, 0
      %v1759 = vsel %vm674, %v1710, 0
      %v1762 = vsel %vm674, %v1711, 0
      %v1765 = vsel %vm674, %v1712, 0
      %v1768 = vsel %vm674, %v1713, 0
      %v1771 = vsel %vm825, %v1715, 0
      %1773 = vmatprep.subr.mxu0 0.0
      %1774 = vmatpush1.msra.mxu0 %v1771
      %1775 = vmatprep.subr.mxu0 0.0
      %1776 = vmatpush1.msra.mxu0 0.0
      %1777 = vmatprep.subr.mxu0 0.0
      %1778 = vmatpush1.msra.mxu0 0.0
      %1779 = vmatprep.subr.mxu0 0.0
      %1780 = vmatpush1.msra.mxu0 0.0
      %1781 = vmatprep.subr.mxu0 0.0
      %1782 = vmatpush1.msra.mxu0 0.0
      %1783 = vmatprep.subr.mxu0 0.0
      %1784 = vmatpush1.msra.mxu0 0.0
      %1785 = vmatprep.subr.mxu0 0.0
      %1786 = vmatpush1.msra.mxu0 0.0
      %1787 = vmatprep.subr.mxu0 0.0
      %1788 = vmatpush1.msra.mxu0 0.0
      %1789 = vmatprep.subr.mxu0 0.0
      %1790 = vmatpush1.msra.mxu0 0.0
      %1791 = vmatprep.subr.mxu0 0.0
      %1792 = vmatpush1.msra.mxu0 0.0
      %1793 = vmatprep.subr.mxu0 0.0
      %1794 = vmatpush1.msra.mxu0 0.0
      %1795 = vmatprep.subr.mxu0 0.0
      %1796 = vmatpush1.msra.mxu0 0.0
      %1797 = vmatprep.subr.mxu0 0.0
      %1798 = vmatpush1.msra.mxu0 0.0
      %1799 = vmatprep.subr.mxu0 0.0
      %1800 = vmatpush1.msra.mxu0 0.0
      %1801 = vmatprep.subr.mxu0 0.0
      %1802 = vmatpush1.msra.mxu0 0.0
      %1803 = vmatprep.subr.mxu0 0.0
      %1804 = vmatpush1.msra.mxu0 0.0
      %1805 = vmatprep.subr.mxu0 0.0
      %1806 = vmatpush1.msra.mxu0 0.0
      %1807 = vmatprep.subr.mxu0 0.0
      %1808 = vmatpush1.msra.mxu0 0.0
      %1809 = vmatprep.subr.mxu0 0.0
      %1810 = vmatpush1.msra.mxu0 0.0
      %1811 = vmatprep.subr.mxu0 0.0
      %1812 = vmatpush1.msra.mxu0 0.0
      %1813 = vmatprep.subr.mxu0 0.0
      %1814 = vmatpush1.msra.mxu0 0.0
      %1815 = vmatprep.subr.mxu0 0.0
      %1816 = vmatpush1.msra.mxu0 0.0
      %1817 = vmatprep.subr.mxu0 0.0
      %1818 = vmatpush1.msra.mxu0 0.0
      %1819 = vmatprep.subr.mxu0 0.0
      %1820 = vmatpush1.msra.mxu0 0.0
      %1821 = vmatprep.subr.mxu0 0.0
      %1822 = vmatpush1.msra.mxu0 0.0
      %1823 = vmatprep.subr.mxu0 0.0
      %1824 = vmatpush1.msra.mxu0 0.0
      %1825 = vmatprep.subr.mxu0 0.0
      %1826 = vmatpush1.msra.mxu0 0.0
      %1827 = vmatprep.subr.mxu0 0.0
      %1828 = vmatpush1.msra.mxu0 0.0
      %1829 = vmatprep.subr.mxu0 0.0
      %1830 = vmatpush1.msra.mxu0 0.0
      %1831 = vmatprep.subr.mxu0 0.0
      %1832 = vmatpush1.msra.mxu0 0.0
      %1833 = vmatprep.subr.mxu0 0.0
      %1834 = vmatpush1.msra.mxu0 0.0
      %1835 = vmatprep.subr.mxu0 0.0
      %1836 = vmatpush1.msra.mxu0 0.0
      %1837 = vmatprep.mubr.f32.mxu0 0.0
      %1838 = vmatmul.mubr.f32.gmra.mrb[0].mxu0 %v1717
      %v1839 = vpop.f32.mrb[0].mxu0
      %v1840 = vadd.f32 0.0, %v1839
      %v1841 = vpop.f32.mrb[0].mxu0
      %1842 = vmatprep.mubr.f32.mxu0 0.0
      %1843 = vmatmul.mubr.f32.gmra.mrb[0].mxu0 %v1720
      %v1844 = vpop.f32.mrb[0].mxu0
      %v1845 = vadd.f32 0.0, %v1844
      %v1846 = vpop.f32.mrb[0].mxu0
      %1847 = vmatprep.mubr.f32.mxu0 0.0
      %1848 = vmatmul.mubr.f32.gmra.mrb[0].mxu0 %v1723
      %v1849 = vpop.f32.mrb[0].mxu0
      %v1850 = vadd.f32 0.0, %v1849
      %v1851 = vpop.f32.mrb[0].mxu0
      %1852 = vmatprep.mubr.f32.mxu0 0.0
      %1853 = vmatmul.mubr.f32.gmra.mrb[0].mxu0 %v1726
      %v1854 = vpop.f32.mrb[0].mxu0
      %v1855 = vadd.f32 0.0, %v1854
      %v1856 = vpop.f32.mrb[0].mxu0
      %1857 = vmatprep.mubr.f32.mxu0 0.0
      %1858 = vmatmul.mubr.f32.gmra.mrb[0].mxu0 %v1729
      %v1859 = vpop.f32.mrb[0].mxu0
      %v1860 = vadd.f32 0.0, %v1859
      %v1861 = vpop.f32.mrb[0].mxu0
      %1862 = vmatprep.mubr.f32.mxu0 0.0
      %1863 = vmatmul.mubr.f32.gmra.mrb[0].mxu0 %v1732
      %v1864 = vpop.f32.mrb[0].mxu0
      %v1865 = vadd.f32 0.0, %v1864
      %v1866 = vpop.f32.mrb[0].mxu0
      %1867 = vmatprep.mubr.f32.mxu0 0.0
      %1868 = vmatmul.mubr.f32.gmra.mrb[0].mxu0 %v1735
      %v1869 = vpop.f32.mrb[0].mxu0
      %v1870 = vadd.f32 0.0, %v1869
      %v1871 = vpop.f32.mrb[0].mxu0
      %1872 = vmatprep.mubr.f32.mxu0 0.0
      %1873 = vmatmul.mubr.f32.gmra.mrb[0].mxu0 %v1738
      %v1874 = vpop.f32.mrb[0].mxu0
      %v1875 = vadd.f32 0.0, %v1874
      %v1876 = vpop.f32.mrb[0].mxu0
      %1877 = vmatprep.mubr.f32.mxu0 0.0
      %1878 = vmatmul.mubr.f32.gmra.mrb[0].mxu0 %v1741
      %v1879 = vpop.f32.mrb[0].mxu0
      %v1880 = vadd.f32 0.0, %v1879
      %v1881 = vpop.f32.mrb[0].mxu0
      %1882 = vmatprep.mubr.f32.mxu0 0.0
      %1883 = vmatmul.mubr.f32.gmra.mrb[0].mxu0 %v1744
      %v1884 = vpop.f32.mrb[0].mxu0
      %v1885 = vadd.f32 0.0, %v1884
      %v1886 = vpop.f32.mrb[0].mxu0
      %1887 = vmatprep.mubr.f32.mxu0 0.0
      %1888 = vmatmul.mubr.f32.gmra.mrb[0].mxu0 %v1747
      %v1889 = vpop.f32.mrb[0].mxu0
      %v1890 = vadd.f32 0.0, %v1889
      %v1891 = vpop.f32.mrb[0].mxu0
      %1892 = vmatprep.mubr.f32.mxu0 0.0
      %1893 = vmatmul.mubr.f32.gmra.mrb[0].mxu0 %v1750
      %v1894 = vpop.f32.mrb[0].mxu0
      %v1895 = vadd.f32 0.0, %v1894
      %v1896 = vpop.f32.mrb[0].mxu0
      %1897 = vmatprep.mubr.f32.mxu0 0.0
      %1898 = vmatmul.mubr.f32.gmra.mrb[0].mxu0 %v1753
      %v1899 = vpop.f32.mrb[0].mxu0
      %v1900 = vadd.f32 0.0, %v1899
      %v1901 = vpop.f32.mrb[0].mxu0
      %1902 = vmatprep.mubr.f32.mxu0 0.0
      %1903 = vmatmul.mubr.f32.gmra.mrb[0].mxu0 %v1756
      %v1904 = vpop.f32.mrb[0].mxu0
      %v1905 = vadd.f32 0.0, %v1904
      %v1906 = vpop.f32.mrb[0].mxu0
      %1907 = vmatprep.mubr.f32.mxu0 0.0
      %1908 = vmatmul.mubr.f32.gmra.mrb[0].mxu0 %v1759
      %v1909 = vpop.f32.mrb[0].mxu0
      %v1910 = vadd.f32 0.0, %v1909
      %v1911 = vpop.f32.mrb[0].mxu0
      %1912 = vmatprep.mubr.f32.mxu0 0.0
      %1913 = vmatmul.mubr.f32.gmra.mrb[0].mxu0 %v1762
      %v1914 = vpop.f32.mrb[0].mxu0
      %v1915 = vadd.f32 0.0, %v1914
      %v1916 = vpop.f32.mrb[0].mxu0
      %1917 = vmatprep.mubr.f32.mxu0 0.0
      %1918 = vmatmul.mubr.f32.gmra.mrb[0].mxu0 %v1765
      %v1919 = vpop.f32.mrb[0].mxu0
      %v1920 = vadd.f32 0.0, %v1919
      %v1921 = vpop.f32.mrb[0].mxu0
      %1922 = vmatprep.mubr.f32.mxu0 0.0
      %1923 = vmatmul.mubr.f32.gmra.mrb[0].mxu0 %v1768
      %v1924 = vpop.f32.mrb[0].mxu0
      %v1925 = vadd.f32 0.0, %v1924
      %v1926 = vpop.f32.mrb[0].mxu0
      %1927 = vdwg.mxu0
      %v1928 = vadd.f32 %v1678, %v1840
      %v1929 = vadd.f32 %v1679, %v1845
      %v1930 = vadd.f32 %v1680, %v1850
      %v1931 = vadd.f32 %v1681, %v1855
      %v1932 = vadd.f32 %v1682, %v1860
      %v1933 = vadd.f32 %v1683, %v1865
      %v1934 = vadd.f32 %v1684, %v1870
      %v1935 = vadd.f32 %v1685, %v1875
      %v1936 = vadd.f32 %v1686, %v1880
      %v1937 = vadd.f32 %v1687, %v1885
      %v1938 = vadd.f32 %v1688, %v1890
      %v1939 = vadd.f32 %v1689, %v1895
      %v1940 = vadd.f32 %v1690, %v1900
      %v1941 = vadd.f32 %v1691, %v1905
      %v1942 = vadd.f32 %v1692, %v1910
      %v1943 = vadd.f32 %v1693, %v1915
      %v1944 = vadd.f32 %v1694, %v1920
      %v1945 = vadd.f32 %v1695, %v1925
      %v1946 = vld [vmem:[#allocation2 + $0x14] sm:$0xff]
      %v1947 = vld [vmem:[#allocation2 + $0x1c] sm:$0xff]
      %v1948 = vld [vmem:[#allocation2 + $0x24] sm:$0xff]
      %v1949 = vld [vmem:[#allocation2 + $0x2c] sm:$0xff]
      %v1950 = vld [vmem:[#allocation2 + $0x34] sm:$0xff]
      %v1951 = vld [vmem:[#allocation2 + $0x3c] sm:$0xff]
      %v1952 = vld [vmem:[#allocation2 + $0x44] sm:$0xff]
      %v1953 = vld [vmem:[#allocation2 + $0x4c] sm:$0xff]
      %v1954 = vld [vmem:[#allocation2 + $0x54] sm:$0xff]
      %v1955 = vld [vmem:[#allocation2 + $0x5c] sm:$0xff]
      %v1956 = vld [vmem:[#allocation2 + $0x64] sm:$0xff]
      %v1957 = vld [vmem:[#allocation2 + $0x6c] sm:$0xff]
      %v1958 = vld [vmem:[#allocation2 + $0x74] sm:$0xff]
      %v1959 = vld [vmem:[#allocation2 + $0x7c] sm:$0xff]
      %v1960 = vld [vmem:[#allocation2 + $0x84] sm:$0xff]
      %v1961 = vld [vmem:[#allocation2 + $0x8c] sm:$0xff]
      %v1962 = vld [vmem:[#allocation2 + $0x94] sm:$0xff]
      %v1963 = vld [vmem:[#allocation2 + $0x9c] sm:$0xff]
      %s1964 = scalar_lea.vmem %s7, 10
      %v1965 = vld [vmem:[%s1964] sm:$0x3]
      %v1967 = vsel %vm674, %v1946, 0
      %v1970 = vsel %vm674, %v1947, 0
      %v1973 = vsel %vm674, %v1948, 0
      %v1976 = vsel %vm674, %v1949, 0
      %v1979 = vsel %vm674, %v1950, 0
      %v1982 = vsel %vm674, %v1951, 0
      %v1985 = vsel %vm674, %v1952, 0
      %v1988 = vsel %vm674, %v1953, 0
      %v1991 = vsel %vm674, %v1954, 0
      %v1994 = vsel %vm674, %v1955, 0
      %v1997 = vsel %vm674, %v1956, 0
      %v2000 = vsel %vm674, %v1957, 0
      %v2003 = vsel %vm674, %v1958, 0
      %v2006 = vsel %vm674, %v1959, 0
      %v2009 = vsel %vm674, %v1960, 0
      %v2012 = vsel %vm674, %v1961, 0
      %v2015 = vsel %vm674, %v1962, 0
      %v2018 = vsel %vm674, %v1963, 0
      %v2021 = vsel %vm825, %v1965, 0
      %2023 = vmatprep.subr.mxu0 0.0
      %2024 = vmatpush1.msra.mxu0 %v2021
      %2025 = vmatprep.subr.mxu0 0.0
      %2026 = vmatpush1.msra.mxu0 0.0
      %2027 = vmatprep.subr.mxu0 0.0
      %2028 = vmatpush1.msra.mxu0 0.0
      %2029 = vmatprep.subr.mxu0 0.0
      %2030 = vmatpush1.msra.mxu0 0.0
      %2031 = vmatprep.subr.mxu0 0.0
      %2032 = vmatpush1.msra.mxu0 0.0
      %2033 = vmatprep.subr.mxu0 0.0
      %2034 = vmatpush1.msra.mxu0 0.0
      %2035 = vmatprep.subr.mxu0 0.0
      %2036 = vmatpush1.msra.mxu0 0.0
      %2037 = vmatprep.subr.mxu0 0.0
      %2038 = vmatpush1.msra.mxu0 0.0
      %2039 = vmatprep.subr.mxu0 0.0
      %2040 = vmatpush1.msra.mxu0 0.0
      %2041 = vmatprep.subr.mxu0 0.0
      %2042 = vmatpush1.msra.mxu0 0.0
      %2043 = vmatprep.subr.mxu0 0.0
      %2044 = vmatpush1.msra.mxu0 0.0
      %2045 = vmatprep.subr.mxu0 0.0
      %2046 = vmatpush1.msra.mxu0 0.0
      %2047 = vmatprep.subr.mxu0 0.0
      %2048 = vmatpush1.msra.mxu0 0.0
      %2049 = vmatprep.subr.mxu0 0.0
      %2050 = vmatpush1.msra.mxu0 0.0
      %2051 = vmatprep.subr.mxu0 0.0
      %2052 = vmatpush1.msra.mxu0 0.0
      %2053 = vmatprep.subr.mxu0 0.0
      %2054 = vmatpush1.msra.mxu0 0.0
      %2055 = vmatprep.subr.mxu0 0.0
      %2056 = vmatpush1.msra.mxu0 0.0
      %2057 = vmatprep.subr.mxu0 0.0
      %2058 = vmatpush1.msra.mxu0 0.0
      %2059 = vmatprep.subr.mxu0 0.0
      %2060 = vmatpush1.msra.mxu0 0.0
      %2061 = vmatprep.subr.mxu0 0.0
      %2062 = vmatpush1.msra.mxu0 0.0
      %2063 = vmatprep.subr.mxu0 0.0
      %2064 = vmatpush1.msra.mxu0 0.0
      %2065 = vmatprep.subr.mxu0 0.0
      %2066 = vmatpush1.msra.mxu0 0.0
      %2067 = vmatprep.subr.mxu0 0.0
      %2068 = vmatpush1.msra.mxu0 0.0
      %2069 = vmatprep.subr.mxu0 0.0
      %2070 = vmatpush1.msra.mxu0 0.0
      %2071 = vmatprep.subr.mxu0 0.0
      %2072 = vmatpush1.msra.mxu0 0.0
      %2073 = vmatprep.subr.mxu0 0.0
      %2074 = vmatpush1.msra.mxu0 0.0
      %2075 = vmatprep.subr.mxu0 0.0
      %2076 = vmatpush1.msra.mxu0 0.0
      %2077 = vmatprep.subr.mxu0 0.0
      %2078 = vmatpush1.msra.mxu0 0.0
      %2079 = vmatprep.subr.mxu0 0.0
      %2080 = vmatpush1.msra.mxu0 0.0
      %2081 = vmatprep.subr.mxu0 0.0
      %2082 = vmatpush1.msra.mxu0 0.0
      %2083 = vmatprep.subr.mxu0 0.0
      %2084 = vmatpush1.msra.mxu0 0.0
      %2085 = vmatprep.subr.mxu0 0.0
      %2086 = vmatpush1.msra.mxu0 0.0
      %2087 = vmatprep.mubr.f32.mxu0 0.0
      %2088 = vmatmul.mubr.f32.gmra.mrb[0].mxu0 %v1967
      %v2089 = vpop.f32.mrb[0].mxu0
      %v2090 = vadd.f32 0.0, %v2089
      %v2091 = vpop.f32.mrb[0].mxu0
      %2092 = vmatprep.mubr.f32.mxu0 0.0
      %2093 = vmatmul.mubr.f32.gmra.mrb[0].mxu0 %v1970
      %v2094 = vpop.f32.mrb[0].mxu0
      %v2095 = vadd.f32 0.0, %v2094
      %v2096 = vpop.f32.mrb[0].mxu0
      %2097 = vmatprep.mubr.f32.mxu0 0.0
      %2098 = vmatmul.mubr.f32.gmra.mrb[0].mxu0 %v1973
      %v2099 = vpop.f32.mrb[0].mxu0
      %v2100 = vadd.f32 0.0, %v2099
      %v2101 = vpop.f32.mrb[0].mxu0
      %2102 = vmatprep.mubr.f32.mxu0 0.0
      %2103 = vmatmul.mubr.f32.gmra.mrb[0].mxu0 %v1976
      %v2104 = vpop.f32.mrb[0].mxu0
      %v2105 = vadd.f32 0.0, %v2104
      %v2106 = vpop.f32.mrb[0].mxu0
      %2107 = vmatprep.mubr.f32.mxu0 0.0
      %2108 = vmatmul.mubr.f32.gmra.mrb[0].mxu0 %v1979
      %v2109 = vpop.f32.mrb[0].mxu0
      %v2110 = vadd.f32 0.0, %v2109
      %v2111 = vpop.f32.mrb[0].mxu0
      %2112 = vmatprep.mubr.f32.mxu0 0.0
      %2113 = vmatmul.mubr.f32.gmra.mrb[0].mxu0 %v1982
      %v2114 = vpop.f32.mrb[0].mxu0
      %v2115 = vadd.f32 0.0, %v2114
      %v2116 = vpop.f32.mrb[0].mxu0
      %2117 = vmatprep.mubr.f32.mxu0 0.0
      %2118 = vmatmul.mubr.f32.gmra.mrb[0].mxu0 %v1985
      %v2119 = vpop.f32.mrb[0].mxu0
      %v2120 = vadd.f32 0.0, %v2119
      %v2121 = vpop.f32.mrb[0].mxu0
      %2122 = vmatprep.mubr.f32.mxu0 0.0
      %2123 = vmatmul.mubr.f32.gmra.mrb[0].mxu0 %v1988
      %v2124 = vpop.f32.mrb[0].mxu0
      %v2125 = vadd.f32 0.0, %v2124
      %v2126 = vpop.f32.mrb[0].mxu0
      %2127 = vmatprep.mubr.f32.mxu0 0.0
      %2128 = vmatmul.mubr.f32.gmra.mrb[0].mxu0 %v1991
      %v2129 = vpop.f32.mrb[0].mxu0
      %v2130 = vadd.f32 0.0, %v2129
      %v2131 = vpop.f32.mrb[0].mxu0
      %2132 = vmatprep.mubr.f32.mxu0 0.0
      %2133 = vmatmul.mubr.f32.gmra.mrb[0].mxu0 %v1994
      %v2134 = vpop.f32.mrb[0].mxu0
      %v2135 = vadd.f32 0.0, %v2134
      %v2136 = vpop.f32.mrb[0].mxu0
      %2137 = vmatprep.mubr.f32.mxu0 0.0
      %2138 = vmatmul.mubr.f32.gmra.mrb[0].mxu0 %v1997
      %v2139 = vpop.f32.mrb[0].mxu0
      %v2140 = vadd.f32 0.0, %v2139
      %v2141 = vpop.f32.mrb[0].mxu0
      %2142 = vmatprep.mubr.f32.mxu0 0.0
      %2143 = vmatmul.mubr.f32.gmra.mrb[0].mxu0 %v2000
      %v2144 = vpop.f32.mrb[0].mxu0
      %v2145 = vadd.f32 0.0, %v2144
      %v2146 = vpop.f32.mrb[0].mxu0
      %2147 = vmatprep.mubr.f32.mxu0 0.0
      %2148 = vmatmul.mubr.f32.gmra.mrb[0].mxu0 %v2003
      %v2149 = vpop.f32.mrb[0].mxu0
      %v2150 = vadd.f32 0.0, %v2149
      %v2151 = vpop.f32.mrb[0].mxu0
      %2152 = vmatprep.mubr.f32.mxu0 0.0
      %2153 = vmatmul.mubr.f32.gmra.mrb[0].mxu0 %v2006
      %v2154 = vpop.f32.mrb[0].mxu0
      %v2155 = vadd.f32 0.0, %v2154
      %v2156 = vpop.f32.mrb[0].mxu0
      %2157 = vmatprep.mubr.f32.mxu0 0.0
      %2158 = vmatmul.mubr.f32.gmra.mrb[0].mxu0 %v2009
      %v2159 = vpop.f32.mrb[0].mxu0
      %v2160 = vadd.f32 0.0, %v2159
      %v2161 = vpop.f32.mrb[0].mxu0
      %2162 = vmatprep.mubr.f32.mxu0 0.0
      %2163 = vmatmul.mubr.f32.gmra.mrb[0].mxu0 %v2012
      %v2164 = vpop.f32.mrb[0].mxu0
      %v2165 = vadd.f32 0.0, %v2164
      %v2166 = vpop.f32.mrb[0].mxu0
      %2167 = vmatprep.mubr.f32.mxu0 0.0
      %2168 = vmatmul.mubr.f32.gmra.mrb[0].mxu0 %v2015
      %v2169 = vpop.f32.mrb[0].mxu0
      %v2170 = vadd.f32 0.0, %v2169
      %v2171 = vpop.f32.mrb[0].mxu0
      %2172 = vmatprep.mubr.f32.mxu0 0.0
      %2173 = vmatmul.mubr.f32.gmra.mrb[0].mxu0 %v2018
      %v2174 = vpop.f32.mrb[0].mxu0
      %v2175 = vadd.f32 0.0, %v2174
      %v2176 = vpop.f32.mrb[0].mxu0
      %2177 = vdwg.mxu0
      %v2178 = vadd.f32 %v1928, %v2090
      %v2179 = vadd.f32 %v1929, %v2095
      %v2180 = vadd.f32 %v1930, %v2100
      %v2181 = vadd.f32 %v1931, %v2105
      %v2182 = vadd.f32 %v1932, %v2110
      %v2183 = vadd.f32 %v1933, %v2115
      %v2184 = vadd.f32 %v1934, %v2120
      %v2185 = vadd.f32 %v1935, %v2125
      %v2186 = vadd.f32 %v1936, %v2130
      %v2187 = vadd.f32 %v1937, %v2135
      %v2188 = vadd.f32 %v1938, %v2140
      %v2189 = vadd.f32 %v1939, %v2145
      %v2190 = vadd.f32 %v1940, %v2150
      %v2191 = vadd.f32 %v1941, %v2155
      %v2192 = vadd.f32 %v1942, %v2160
      %v2193 = vadd.f32 %v1943, %v2165
      %v2194 = vadd.f32 %v1944, %v2170
      %v2195 = vadd.f32 %v1945, %v2175
      %v2196 = vld [vmem:[#allocation2 + $0x24] sm:$0xff]
      %v2197 = vld [vmem:[#allocation2 + $0x2c] sm:$0xff]
      %v2198 = vld [vmem:[#allocation2 + $0x34] sm:$0xff]
      %v2199 = vld [vmem:[#allocation2 + $0x3c] sm:$0xff]
      %v2200 = vld [vmem:[#allocation2 + $0x44] sm:$0xff]
      %v2201 = vld [vmem:[#allocation2 + $0x4c] sm:$0xff]
      %v2202 = vld [vmem:[#allocation2 + $0x54] sm:$0xff]
      %v2203 = vld [vmem:[#allocation2 + $0x5c] sm:$0xff]
      %v2204 = vld [vmem:[#allocation2 + $0x64] sm:$0xff]
      %v2205 = vld [vmem:[#allocation2 + $0x6c] sm:$0xff]
      %v2206 = vld [vmem:[#allocation2 + $0x74] sm:$0xff]
      %v2207 = vld [vmem:[#allocation2 + $0x7c] sm:$0xff]
      %v2208 = vld [vmem:[#allocation2 + $0x84] sm:$0xff]
      %v2209 = vld [vmem:[#allocation2 + $0x8c] sm:$0xff]
      %v2210 = vld [vmem:[#allocation2 + $0x94] sm:$0xff]
      %v2211 = vld [vmem:[#allocation2 + $0x9c] sm:$0xff]
      %v2212 = vld [vmem:[#allocation2 + $0xa4] sm:$0xff]
      %v2213 = vld [vmem:[#allocation2 + $0xac] sm:$0xff]
      %s2214 = scalar_lea.vmem %s7, 12
      %v2215 = vld [vmem:[%s2214] sm:$0x3]
      %v2217 = vsel %vm674, %v2196, 0
      %v2220 = vsel %vm674, %v2197, 0
      %v2223 = vsel %vm674, %v2198, 0
      %v2226 = vsel %vm674, %v2199, 0
      %v2229 = vsel %vm674, %v2200, 0
      %v2232 = vsel %vm674, %v2201, 0
      %v2235 = vsel %vm674, %v2202, 0
      %v2238 = vsel %vm674, %v2203, 0
      %v2241 = vsel %vm674, %v2204, 0
      %v2244 = vsel %vm674, %v2205, 0
      %v2247 = vsel %vm674, %v2206, 0
      %v2250 = vsel %vm674, %v2207, 0
      %v2253 = vsel %vm674, %v2208, 0
      %v2256 = vsel %vm674, %v2209, 0
      %v2259 = vsel %vm674, %v2210, 0
      %v2262 = vsel %vm674, %v2211, 0
      %v2265 = vsel %vm674, %v2212, 0
      %v2268 = vsel %vm674, %v2213, 0
      %v2271 = vsel %vm825, %v2215, 0
      %2273 = vmatprep.subr.mxu0 0.0
      %2274 = vmatpush1.msra.mxu0 %v2271
      %2275 = vmatprep.subr.mxu0 0.0
      %2276 = vmatpush1.msra.mxu0 0.0
      %2277 = vmatprep.subr.mxu0 0.0
      %2278 = vmatpush1.msra.mxu0 0.0
      %2279 = vmatprep.subr.mxu0 0.0
      %2280 = vmatpush1.msra.mxu0 0.0
      %2281 = vmatprep.subr.mxu0 0.0
      %2282 = vmatpush1.msra.mxu0 0.0
      %2283 = vmatprep.subr.mxu0 0.0
      %2284 = vmatpush1.msra.mxu0 0.0
      %2285 = vmatprep.subr.mxu0 0.0
      %2286 = vmatpush1.msra.mxu0 0.0
      %2287 = vmatprep.subr.mxu0 0.0
      %2288 = vmatpush1.msra.mxu0 0.0
      %2289 = vmatprep.subr.mxu0 0.0
      %2290 = vmatpush1.msra.mxu0 0.0
      %2291 = vmatprep.subr.mxu0 0.0
      %2292 = vmatpush1.msra.mxu0 0.0
      %2293 = vmatprep.subr.mxu0 0.0
      %2294 = vmatpush1.msra.mxu0 0.0
      %2295 = vmatprep.subr.mxu0 0.0
      %2296 = vmatpush1.msra.mxu0 0.0
      %2297 = vmatprep.subr.mxu0 0.0
      %2298 = vmatpush1.msra.mxu0 0.0
      %2299 = vmatprep.subr.mxu0 0.0
      %2300 = vmatpush1.msra.mxu0 0.0
      %2301 = vmatprep.subr.mxu0 0.0
      %2302 = vmatpush1.msra.mxu0 0.0
      %2303 = vmatprep.subr.mxu0 0.0
      %2304 = vmatpush1.msra.mxu0 0.0
      %2305 = vmatprep.subr.mxu0 0.0
      %2306 = vmatpush1.msra.mxu0 0.0
      %2307 = vmatprep.subr.mxu0 0.0
      %2308 = vmatpush1.msra.mxu0 0.0
      %2309 = vmatprep.subr.mxu0 0.0
      %2310 = vmatpush1.msra.mxu0 0.0
      %2311 = vmatprep.subr.mxu0 0.0
      %2312 = vmatpush1.msra.mxu0 0.0
      %2313 = vmatprep.subr.mxu0 0.0
      %2314 = vmatpush1.msra.mxu0 0.0
      %2315 = vmatprep.subr.mxu0 0.0
      %2316 = vmatpush1.msra.mxu0 0.0
      %2317 = vmatprep.subr.mxu0 0.0
      %2318 = vmatpush1.msra.mxu0 0.0
      %2319 = vmatprep.subr.mxu0 0.0
      %2320 = vmatpush1.msra.mxu0 0.0
      %2321 = vmatprep.subr.mxu0 0.0
      %2322 = vmatpush1.msra.mxu0 0.0
      %2323 = vmatprep.subr.mxu0 0.0
      %2324 = vmatpush1.msra.mxu0 0.0
      %2325 = vmatprep.subr.mxu0 0.0
      %2326 = vmatpush1.msra.mxu0 0.0
      %2327 = vmatprep.subr.mxu0 0.0
      %2328 = vmatpush1.msra.mxu0 0.0
      %2329 = vmatprep.subr.mxu0 0.0
      %2330 = vmatpush1.msra.mxu0 0.0
      %2331 = vmatprep.subr.mxu0 0.0
      %2332 = vmatpush1.msra.mxu0 0.0
      %2333 = vmatprep.subr.mxu0 0.0
      %2334 = vmatpush1.msra.mxu0 0.0
      %2335 = vmatprep.subr.mxu0 0.0
      %2336 = vmatpush1.msra.mxu0 0.0
      %2337 = vmatprep.mubr.f32.mxu0 0.0
      %2338 = vmatmul.mubr.f32.gmra.mrb[0].mxu0 %v2217
      %v2339 = vpop.f32.mrb[0].mxu0
      %v2340 = vadd.f32 0.0, %v2339
      %v2341 = vpop.f32.mrb[0].mxu0
      %2342 = vmatprep.mubr.f32.mxu0 0.0
      %2343 = vmatmul.mubr.f32.gmra.mrb[0].mxu0 %v2220
      %v2344 = vpop.f32.mrb[0].mxu0
      %v2345 = vadd.f32 0.0, %v2344
      %v2346 = vpop.f32.mrb[0].mxu0
      %2347 = vmatprep.mubr.f32.mxu0 0.0
      %2348 = vmatmul.mubr.f32.gmra.mrb[0].mxu0 %v2223
      %v2349 = vpop.f32.mrb[0].mxu0
      %v2350 = vadd.f32 0.0, %v2349
      %v2351 = vpop.f32.mrb[0].mxu0
      %2352 = vmatprep.mubr.f32.mxu0 0.0
      %2353 = vmatmul.mubr.f32.gmra.mrb[0].mxu0 %v2226
      %v2354 = vpop.f32.mrb[0].mxu0
      %v2355 = vadd.f32 0.0, %v2354
      %v2356 = vpop.f32.mrb[0].mxu0
      %2357 = vmatprep.mubr.f32.mxu0 0.0
      %2358 = vmatmul.mubr.f32.gmra.mrb[0].mxu0 %v2229
      %v2359 = vpop.f32.mrb[0].mxu0
      %v2360 = vadd.f32 0.0, %v2359
      %v2361 = vpop.f32.mrb[0].mxu0
      %2362 = vmatprep.mubr.f32.mxu0 0.0
      %2363 = vmatmul.mubr.f32.gmra.mrb[0].mxu0 %v2232
      %v2364 = vpop.f32.mrb[0].mxu0
      %v2365 = vadd.f32 0.0, %v2364
      %v2366 = vpop.f32.mrb[0].mxu0
      %2367 = vmatprep.mubr.f32.mxu0 0.0
      %2368 = vmatmul.mubr.f32.gmra.mrb[0].mxu0 %v2235
      %v2369 = vpop.f32.mrb[0].mxu0
      %v2370 = vadd.f32 0.0, %v2369
      %v2371 = vpop.f32.mrb[0].mxu0
      %2372 = vmatprep.mubr.f32.mxu0 0.0
      %2373 = vmatmul.mubr.f32.gmra.mrb[0].mxu0 %v2238
      %v2374 = vpop.f32.mrb[0].mxu0
      %v2375 = vadd.f32 0.0, %v2374
      %v2376 = vpop.f32.mrb[0].mxu0
      %2377 = vmatprep.mubr.f32.mxu0 0.0
      %2378 = vmatmul.mubr.f32.gmra.mrb[0].mxu0 %v2241
      %v2379 = vpop.f32.mrb[0].mxu0
      %v2380 = vadd.f32 0.0, %v2379
      %v2381 = vpop.f32.mrb[0].mxu0
      %2382 = vmatprep.mubr.f32.mxu0 0.0
      %2383 = vmatmul.mubr.f32.gmra.mrb[0].mxu0 %v2244
      %v2384 = vpop.f32.mrb[0].mxu0
      %v2385 = vadd.f32 0.0, %v2384
      %v2386 = vpop.f32.mrb[0].mxu0
      %2387 = vmatprep.mubr.f32.mxu0 0.0
      %2388 = vmatmul.mubr.f32.gmra.mrb[0].mxu0 %v2247
      %v2389 = vpop.f32.mrb[0].mxu0
      %v2390 = vadd.f32 0.0, %v2389
      %v2391 = vpop.f32.mrb[0].mxu0
      %2392 = vmatprep.mubr.f32.mxu0 0.0
      %2393 = vmatmul.mubr.f32.gmra.mrb[0].mxu0 %v2250
      %v2394 = vpop.f32.mrb[0].mxu0
      %v2395 = vadd.f32 0.0, %v2394
      %v2396 = vpop.f32.mrb[0].mxu0
      %2397 = vmatprep.mubr.f32.mxu0 0.0
      %2398 = vmatmul.mubr.f32.gmra.mrb[0].mxu0 %v2253
      %v2399 = vpop.f32.mrb[0].mxu0
      %v2400 = vadd.f32 0.0, %v2399
      %v2401 = vpop.f32.mrb[0].mxu0
      %2402 = vmatprep.mubr.f32.mxu0 0.0
      %2403 = vmatmul.mubr.f32.gmra.mrb[0].mxu0 %v2256
      %v2404 = vpop.f32.mrb[0].mxu0
      %v2405 = vadd.f32 0.0, %v2404
      %v2406 = vpop.f32.mrb[0].mxu0
      %2407 = vmatprep.mubr.f32.mxu0 0.0
      %2408 = vmatmul.mubr.f32.gmra.mrb[0].mxu0 %v2259
      %v2409 = vpop.f32.mrb[0].mxu0
      %v2410 = vadd.f32 0.0, %v2409
      %v2411 = vpop.f32.mrb[0].mxu0
      %2412 = vmatprep.mubr.f32.mxu0 0.0
      %2413 = vmatmul.mubr.f32.gmra.mrb[0].mxu0 %v2262
      %v2414 = vpop.f32.mrb[0].mxu0
      %v2415 = vadd.f32 0.0, %v2414
      %v2416 = vpop.f32.mrb[0].mxu0
      %2417 = vmatprep.mubr.f32.mxu0 0.0
      %2418 = vmatmul.mubr.f32.gmra.mrb[0].mxu0 %v2265
      %v2419 = vpop.f32.mrb[0].mxu0
      %v2420 = vadd.f32 0.0, %v2419
      %v2421 = vpop.f32.mrb[0].mxu0
      %2422 = vmatprep.mubr.f32.mxu0 0.0
      %2423 = vmatmul.mubr.f32.gmra.mrb[0].mxu0 %v2268
      %v2424 = vpop.f32.mrb[0].mxu0
      %v2425 = vadd.f32 0.0, %v2424
      %v2426 = vpop.f32.mrb[0].mxu0
      %2427 = vdwg.mxu0
      %v2428 = vadd.f32 %v2178, %v2340
      %v2429 = vadd.f32 %v2179, %v2345
      %v2430 = vadd.f32 %v2180, %v2350
      %v2431 = vadd.f32 %v2181, %v2355
      %v2432 = vadd.f32 %v2182, %v2360
      %v2433 = vadd.f32 %v2183, %v2365
      %v2434 = vadd.f32 %v2184, %v2370
      %v2435 = vadd.f32 %v2185, %v2375
      %v2436 = vadd.f32 %v2186, %v2380
      %v2437 = vadd.f32 %v2187, %v2385
      %v2438 = vadd.f32 %v2188, %v2390
      %v2439 = vadd.f32 %v2189, %v2395
      %v2440 = vadd.f32 %v2190, %v2400
      %v2441 = vadd.f32 %v2191, %v2405
      %v2442 = vadd.f32 %v2192, %v2410
      %v2443 = vadd.f32 %v2193, %v2415
      %v2444 = vadd.f32 %v2194, %v2420
      %v2445 = vadd.f32 %v2195, %v2425
      %v2446 = vld [vmem:[#allocation2 + $0x25] sm:$0xff]
      %v2447 = vld [vmem:[#allocation2 + $0x2d] sm:$0xff]
      %v2448 = vld [vmem:[#allocation2 + $0x35] sm:$0xff]
      %v2449 = vld [vmem:[#allocation2 + $0x3d] sm:$0xff]
      %v2450 = vld [vmem:[#allocation2 + $0x45] sm:$0xff]
      %v2451 = vld [vmem:[#allocation2 + $0x4d] sm:$0xff]
      %v2452 = vld [vmem:[#allocation2 + $0x55] sm:$0xff]
      %v2453 = vld [vmem:[#allocation2 + $0x5d] sm:$0xff]
      %v2454 = vld [vmem:[#allocation2 + $0x65] sm:$0xff]
      %v2455 = vld [vmem:[#allocation2 + $0x6d] sm:$0xff]
      %v2456 = vld [vmem:[#allocation2 + $0x75] sm:$0xff]
      %v2457 = vld [vmem:[#allocation2 + $0x7d] sm:$0xff]
      %v2458 = vld [vmem:[#allocation2 + $0x85] sm:$0xff]
      %v2459 = vld [vmem:[#allocation2 + $0x8d] sm:$0xff]
      %v2460 = vld [vmem:[#allocation2 + $0x95] sm:$0xff]
      %v2461 = vld [vmem:[#allocation2 + $0x9d] sm:$0xff]
      %v2462 = vld [vmem:[#allocation2 + $0xa5] sm:$0xff]
      %v2463 = vld [vmem:[#allocation2 + $0xad] sm:$0xff]
      %s2464 = scalar_lea.vmem %s7, 14
      %v2465 = vld [vmem:[%s2464] sm:$0x3]
      %v2467 = vsel %vm674, %v2446, 0
      %v2470 = vsel %vm674, %v2447, 0
      %v2473 = vsel %vm674, %v2448, 0
      %v2476 = vsel %vm674, %v2449, 0
      %v2479 = vsel %vm674, %v2450, 0
      %v2482 = vsel %vm674, %v2451, 0
      %v2485 = vsel %vm674, %v2452, 0
      %v2488 = vsel %vm674, %v2453, 0
      %v2491 = vsel %vm674, %v2454, 0
      %v2494 = vsel %vm674, %v2455, 0
      %v2497 = vsel %vm674, %v2456, 0
      %v2500 = vsel %vm674, %v2457, 0
      %v2503 = vsel %vm674, %v2458, 0
      %v2506 = vsel %vm674, %v2459, 0
      %v2509 = vsel %vm674, %v2460, 0
      %v2512 = vsel %vm674, %v2461, 0
      %v2515 = vsel %vm674, %v2462, 0
      %v2518 = vsel %vm674, %v2463, 0
      %v2521 = vsel %vm825, %v2465, 0
      %2523 = vmatprep.subr.mxu0 0.0
      %2524 = vmatpush1.msra.mxu0 %v2521
      %2525 = vmatprep.subr.mxu0 0.0
      %2526 = vmatpush1.msra.mxu0 0.0
      %2527 = vmatprep.subr.mxu0 0.0
      %2528 = vmatpush1.msra.mxu0 0.0
      %2529 = vmatprep.subr.mxu0 0.0
      %2530 = vmatpush1.msra.mxu0 0.0
      %2531 = vmatprep.subr.mxu0 0.0
      %2532 = vmatpush1.msra.mxu0 0.0
      %2533 = vmatprep.subr.mxu0 0.0
      %2534 = vmatpush1.msra.mxu0 0.0
      %2535 = vmatprep.subr.mxu0 0.0
      %2536 = vmatpush1.msra.mxu0 0.0
      %2537 = vmatprep.subr.mxu0 0.0
      %2538 = vmatpush1.msra.mxu0 0.0
      %2539 = vmatprep.subr.mxu0 0.0
      %2540 = vmatpush1.msra.mxu0 0.0
      %2541 = vmatprep.subr.mxu0 0.0
      %2542 = vmatpush1.msra.mxu0 0.0
      %2543 = vmatprep.subr.mxu0 0.0
      %2544 = vmatpush1.msra.mxu0 0.0
      %2545 = vmatprep.subr.mxu0 0.0
      %2546 = vmatpush1.msra.mxu0 0.0
      %2547 = vmatprep.subr.mxu0 0.0
      %2548 = vmatpush1.msra.mxu0 0.0
      %2549 = vmatprep.subr.mxu0 0.0
      %2550 = vmatpush1.msra.mxu0 0.0
      %2551 = vmatprep.subr.mxu0 0.0
      %2552 = vmatpush1.msra.mxu0 0.0
      %2553 = vmatprep.subr.mxu0 0.0
      %2554 = vmatpush1.msra.mxu0 0.0
      %2555 = vmatprep.subr.mxu0 0.0
      %2556 = vmatpush1.msra.mxu0 0.0
      %2557 = vmatprep.subr.mxu0 0.0
      %2558 = vmatpush1.msra.mxu0 0.0
      %2559 = vmatprep.subr.mxu0 0.0
      %2560 = vmatpush1.msra.mxu0 0.0
      %2561 = vmatprep.subr.mxu0 0.0
      %2562 = vmatpush1.msra.mxu0 0.0
      %2563 = vmatprep.subr.mxu0 0.0
      %2564 = vmatpush1.msra.mxu0 0.0
      %2565 = vmatprep.subr.mxu0 0.0
      %2566 = vmatpush1.msra.mxu0 0.0
      %2567 = vmatprep.subr.mxu0 0.0
      %2568 = vmatpush1.msra.mxu0 0.0
      %2569 = vmatprep.subr.mxu0 0.0
      %2570 = vmatpush1.msra.mxu0 0.0
      %2571 = vmatprep.subr.mxu0 0.0
      %2572 = vmatpush1.msra.mxu0 0.0
      %2573 = vmatprep.subr.mxu0 0.0
      %2574 = vmatpush1.msra.mxu0 0.0
      %2575 = vmatprep.subr.mxu0 0.0
      %2576 = vmatpush1.msra.mxu0 0.0
      %2577 = vmatprep.subr.mxu0 0.0
      %2578 = vmatpush1.msra.mxu0 0.0
      %2579 = vmatprep.subr.mxu0 0.0
      %2580 = vmatpush1.msra.mxu0 0.0
      %2581 = vmatprep.subr.mxu0 0.0
      %2582 = vmatpush1.msra.mxu0 0.0
      %2583 = vmatprep.subr.mxu0 0.0
      %2584 = vmatpush1.msra.mxu0 0.0
      %2585 = vmatprep.subr.mxu0 0.0
      %2586 = vmatpush1.msra.mxu0 0.0
      %2587 = vmatprep.mubr.f32.mxu0 0.0
      %2588 = vmatmul.mubr.f32.gmra.mrb[0].mxu0 %v2467
      %v2589 = vpop.f32.mrb[0].mxu0
      %v2590 = vadd.f32 0.0, %v2589
      %v2591 = vpop.f32.mrb[0].mxu0
      %2592 = vmatprep.mubr.f32.mxu0 0.0
      %2593 = vmatmul.mubr.f32.gmra.mrb[0].mxu0 %v2470
      %v2594 = vpop.f32.mrb[0].mxu0
      %v2595 = vadd.f32 0.0, %v2594
      %v2596 = vpop.f32.mrb[0].mxu0
      %2597 = vmatprep.mubr.f32.mxu0 0.0
      %2598 = vmatmul.mubr.f32.gmra.mrb[0].mxu0 %v2473
      %v2599 = vpop.f32.mrb[0].mxu0
      %v2600 = vadd.f32 0.0, %v2599
      %v2601 = vpop.f32.mrb[0].mxu0
      %2602 = vmatprep.mubr.f32.mxu0 0.0
      %2603 = vmatmul.mubr.f32.gmra.mrb[0].mxu0 %v2476
      %v2604 = vpop.f32.mrb[0].mxu0
      %v2605 = vadd.f32 0.0, %v2604
      %v2606 = vpop.f32.mrb[0].mxu0
      %2607 = vmatprep.mubr.f32.mxu0 0.0
      %2608 = vmatmul.mubr.f32.gmra.mrb[0].mxu0 %v2479
      %v2609 = vpop.f32.mrb[0].mxu0
      %v2610 = vadd.f32 0.0, %v2609
      %v2611 = vpop.f32.mrb[0].mxu0
      %2612 = vmatprep.mubr.f32.mxu0 0.0
      %2613 = vmatmul.mubr.f32.gmra.mrb[0].mxu0 %v2482
      %v2614 = vpop.f32.mrb[0].mxu0
      %v2615 = vadd.f32 0.0, %v2614
      %v2616 = vpop.f32.mrb[0].mxu0
      %2617 = vmatprep.mubr.f32.mxu0 0.0
      %2618 = vmatmul.mubr.f32.gmra.mrb[0].mxu0 %v2485
      %v2619 = vpop.f32.mrb[0].mxu0
      %v2620 = vadd.f32 0.0, %v2619
      %v2621 = vpop.f32.mrb[0].mxu0
      %2622 = vmatprep.mubr.f32.mxu0 0.0
      %2623 = vmatmul.mubr.f32.gmra.mrb[0].mxu0 %v2488
      %v2624 = vpop.f32.mrb[0].mxu0
      %v2625 = vadd.f32 0.0, %v2624
      %v2626 = vpop.f32.mrb[0].mxu0
      %2627 = vmatprep.mubr.f32.mxu0 0.0
      %2628 = vmatmul.mubr.f32.gmra.mrb[0].mxu0 %v2491
      %v2629 = vpop.f32.mrb[0].mxu0
      %v2630 = vadd.f32 0.0, %v2629
      %v2631 = vpop.f32.mrb[0].mxu0
      %2632 = vmatprep.mubr.f32.mxu0 0.0
      %2633 = vmatmul.mubr.f32.gmra.mrb[0].mxu0 %v2494
      %v2634 = vpop.f32.mrb[0].mxu0
      %v2635 = vadd.f32 0.0, %v2634
      %v2636 = vpop.f32.mrb[0].mxu0
      %2637 = vmatprep.mubr.f32.mxu0 0.0
      %2638 = vmatmul.mubr.f32.gmra.mrb[0].mxu0 %v2497
      %v2639 = vpop.f32.mrb[0].mxu0
      %v2640 = vadd.f32 0.0, %v2639
      %v2641 = vpop.f32.mrb[0].mxu0
      %2642 = vmatprep.mubr.f32.mxu0 0.0
      %2643 = vmatmul.mubr.f32.gmra.mrb[0].mxu0 %v2500
      %v2644 = vpop.f32.mrb[0].mxu0
      %v2645 = vadd.f32 0.0, %v2644
      %v2646 = vpop.f32.mrb[0].mxu0
      %2647 = vmatprep.mubr.f32.mxu0 0.0
      %2648 = vmatmul.mubr.f32.gmra.mrb[0].mxu0 %v2503
      %v2649 = vpop.f32.mrb[0].mxu0
      %v2650 = vadd.f32 0.0, %v2649
      %v2651 = vpop.f32.mrb[0].mxu0
      %2652 = vmatprep.mubr.f32.mxu0 0.0
      %2653 = vmatmul.mubr.f32.gmra.mrb[0].mxu0 %v2506
      %v2654 = vpop.f32.mrb[0].mxu0
      %v2655 = vadd.f32 0.0, %v2654
      %v2656 = vpop.f32.mrb[0].mxu0
      %2657 = vmatprep.mubr.f32.mxu0 0.0
      %2658 = vmatmul.mubr.f32.gmra.mrb[0].mxu0 %v2509
      %v2659 = vpop.f32.mrb[0].mxu0
      %v2660 = vadd.f32 0.0, %v2659
      %v2661 = vpop.f32.mrb[0].mxu0
      %2662 = vmatprep.mubr.f32.mxu0 0.0
      %2663 = vmatmul.mubr.f32.gmra.mrb[0].mxu0 %v2512
      %v2664 = vpop.f32.mrb[0].mxu0
      %v2665 = vadd.f32 0.0, %v2664
      %v2666 = vpop.f32.mrb[0].mxu0
      %2667 = vmatprep.mubr.f32.mxu0 0.0
      %2668 = vmatmul.mubr.f32.gmra.mrb[0].mxu0 %v2515
      %v2669 = vpop.f32.mrb[0].mxu0
      %v2670 = vadd.f32 0.0, %v2669
      %v2671 = vpop.f32.mrb[0].mxu0
      %2672 = vmatprep.mubr.f32.mxu0 0.0
      %2673 = vmatmul.mubr.f32.gmra.mrb[0].mxu0 %v2518
      %v2674 = vpop.f32.mrb[0].mxu0
      %v2675 = vadd.f32 0.0, %v2674
      %v2676 = vpop.f32.mrb[0].mxu0
      %2677 = vdwg.mxu0
      %v2678 = vadd.f32 %v2428, %v2590
      %v2679 = vadd.f32 %v2429, %v2595
      %v2680 = vadd.f32 %v2430, %v2600
      %v2681 = vadd.f32 %v2431, %v2605
      %v2682 = vadd.f32 %v2432, %v2610
      %v2683 = vadd.f32 %v2433, %v2615
      %v2684 = vadd.f32 %v2434, %v2620
      %v2685 = vadd.f32 %v2435, %v2625
      %v2686 = vadd.f32 %v2436, %v2630
      %v2687 = vadd.f32 %v2437, %v2635
      %v2688 = vadd.f32 %v2438, %v2640
      %v2689 = vadd.f32 %v2439, %v2645
      %v2690 = vadd.f32 %v2440, %v2650
      %v2691 = vadd.f32 %v2441, %v2655
      %v2692 = vadd.f32 %v2442, %v2660
      %v2693 = vadd.f32 %v2443, %v2665
      %v2694 = vadd.f32 %v2444, %v2670
      %v2695 = vadd.f32 %v2445, %v2675
      %v2696 = vld [vmem:[#allocation2 + $0x26] sm:$0xff]
      %v2697 = vld [vmem:[#allocation2 + $0x2e] sm:$0xff]
      %v2698 = vld [vmem:[#allocation2 + $0x36] sm:$0xff]
      %v2699 = vld [vmem:[#allocation2 + $0x3e] sm:$0xff]
      %v2700 = vld [vmem:[#allocation2 + $0x46] sm:$0xff]
      %v2701 = vld [vmem:[#allocation2 + $0x4e] sm:$0xff]
      %v2702 = vld [vmem:[#allocation2 + $0x56] sm:$0xff]
      %v2703 = vld [vmem:[#allocation2 + $0x5e] sm:$0xff]
      %v2704 = vld [vmem:[#allocation2 + $0x66] sm:$0xff]
      %v2705 = vld [vmem:[#allocation2 + $0x6e] sm:$0xff]
      %v2706 = vld [vmem:[#allocation2 + $0x76] sm:$0xff]
      %v2707 = vld [vmem:[#allocation2 + $0x7e] sm:$0xff]
      %v2708 = vld [vmem:[#allocation2 + $0x86] sm:$0xff]
      %v2709 = vld [vmem:[#allocation2 + $0x8e] sm:$0xff]
      %v2710 = vld [vmem:[#allocation2 + $0x96] sm:$0xff]
      %v2711 = vld [vmem:[#allocation2 + $0x9e] sm:$0xff]
      %v2712 = vld [vmem:[#allocation2 + $0xa6] sm:$0xff]
      %v2713 = vld [vmem:[#allocation2 + $0xae] sm:$0xff]
      %s2714 = scalar_lea.vmem %s7, 16
      %v2715 = vld [vmem:[%s2714] sm:$0x3]
      %v2717 = vsel %vm674, %v2696, 0
      %v2720 = vsel %vm674, %v2697, 0
      %v2723 = vsel %vm674, %v2698, 0
      %v2726 = vsel %vm674, %v2699, 0
      %v2729 = vsel %vm674, %v2700, 0
      %v2732 = vsel %vm674, %v2701, 0
      %v2735 = vsel %vm674, %v2702, 0
      %v2738 = vsel %vm674, %v2703, 0
      %v2741 = vsel %vm674, %v2704, 0
      %v2744 = vsel %vm674, %v2705, 0
      %v2747 = vsel %vm674, %v2706, 0
      %v2750 = vsel %vm674, %v2707, 0
      %v2753 = vsel %vm674, %v2708, 0
      %v2756 = vsel %vm674, %v2709, 0
      %v2759 = vsel %vm674, %v2710, 0
      %v2762 = vsel %vm674, %v2711, 0
      %v2765 = vsel %vm674, %v2712, 0
      %v2768 = vsel %vm674, %v2713, 0
      %v2771 = vsel %vm825, %v2715, 0
      %2773 = vmatprep.subr.mxu0 0.0
      %2774 = vmatpush1.msra.mxu0 %v2771
      %2775 = vmatprep.subr.mxu0 0.0
      %2776 = vmatpush1.msra.mxu0 0.0
      %2777 = vmatprep.subr.mxu0 0.0
      %2778 = vmatpush1.msra.mxu0 0.0
      %2779 = vmatprep.subr.mxu0 0.0
      %2780 = vmatpush1.msra.mxu0 0.0
      %2781 = vmatprep.subr.mxu0 0.0
      %2782 = vmatpush1.msra.mxu0 0.0
      %2783 = vmatprep.subr.mxu0 0.0
      %2784 = vmatpush1.msra.mxu0 0.0
      %2785 = vmatprep.subr.mxu0 0.0
      %2786 = vmatpush1.msra.mxu0 0.0
      %2787 = vmatprep.subr.mxu0 0.0
      %2788 = vmatpush1.msra.mxu0 0.0
      %2789 = vmatprep.subr.mxu0 0.0
      %2790 = vmatpush1.msra.mxu0 0.0
      %2791 = vmatprep.subr.mxu0 0.0
      %2792 = vmatpush1.msra.mxu0 0.0
      %2793 = vmatprep.subr.mxu0 0.0
      %2794 = vmatpush1.msra.mxu0 0.0
      %2795 = vmatprep.subr.mxu0 0.0
      %2796 = vmatpush1.msra.mxu0 0.0
      %2797 = vmatprep.subr.mxu0 0.0
      %2798 = vmatpush1.msra.mxu0 0.0
      %2799 = vmatprep.subr.mxu0 0.0
      %2800 = vmatpush1.msra.mxu0 0.0
      %2801 = vmatprep.subr.mxu0 0.0
      %2802 = vmatpush1.msra.mxu0 0.0
      %2803 = vmatprep.subr.mxu0 0.0
      %2804 = vmatpush1.msra.mxu0 0.0
      %2805 = vmatprep.subr.mxu0 0.0
      %2806 = vmatpush1.msra.mxu0 0.0
      %2807 = vmatprep.subr.mxu0 0.0
      %2808 = vmatpush1.msra.mxu0 0.0
      %2809 = vmatprep.subr.mxu0 0.0
      %2810 = vmatpush1.msra.mxu0 0.0
      %2811 = vmatprep.subr.mxu0 0.0
      %2812 = vmatpush1.msra.mxu0 0.0
      %2813 = vmatprep.subr.mxu0 0.0
      %2814 = vmatpush1.msra.mxu0 0.0
      %2815 = vmatprep.subr.mxu0 0.0
      %2816 = vmatpush1.msra.mxu0 0.0
      %2817 = vmatprep.subr.mxu0 0.0
      %2818 = vmatpush1.msra.mxu0 0.0
      %2819 = vmatprep.subr.mxu0 0.0
      %2820 = vmatpush1.msra.mxu0 0.0
      %2821 = vmatprep.subr.mxu0 0.0
      %2822 = vmatpush1.msra.mxu0 0.0
      %2823 = vmatprep.subr.mxu0 0.0
      %2824 = vmatpush1.msra.mxu0 0.0
      %2825 = vmatprep.subr.mxu0 0.0
      %2826 = vmatpush1.msra.mxu0 0.0
      %2827 = vmatprep.subr.mxu0 0.0
      %2828 = vmatpush1.msra.mxu0 0.0
      %2829 = vmatprep.subr.mxu0 0.0
      %2830 = vmatpush1.msra.mxu0 0.0
      %2831 = vmatprep.subr.mxu0 0.0
      %2832 = vmatpush1.msra.mxu0 0.0
      %2833 = vmatprep.subr.mxu0 0.0
      %2834 = vmatpush1.msra.mxu0 0.0
      %2835 = vmatprep.subr.mxu0 0.0
      %2836 = vmatpush1.msra.mxu0 0.0
      %2837 = vmatprep.mubr.f32.mxu0 0.0
      %2838 = vmatmul.mubr.f32.gmra.mrb[0].mxu0 %v2717
      %v2839 = vpop.f32.mrb[0].mxu0
      %v2840 = vadd.f32 0.0, %v2839
      %v2841 = vpop.f32.mrb[0].mxu0
      %2842 = vmatprep.mubr.f32.mxu0 0.0
      %2843 = vmatmul.mubr.f32.gmra.mrb[0].mxu0 %v2720
      %v2844 = vpop.f32.mrb[0].mxu0
      %v2845 = vadd.f32 0.0, %v2844
      %v2846 = vpop.f32.mrb[0].mxu0
      %2847 = vmatprep.mubr.f32.mxu0 0.0
      %2848 = vmatmul.mubr.f32.gmra.mrb[0].mxu0 %v2723
      %v2849 = vpop.f32.mrb[0].mxu0
      %v2850 = vadd.f32 0.0, %v2849
      %v2851 = vpop.f32.mrb[0].mxu0
      %2852 = vmatprep.mubr.f32.mxu0 0.0
      %2853 = vmatmul.mubr.f32.gmra.mrb[0].mxu0 %v2726
      %v2854 = vpop.f32.mrb[0].mxu0
      %v2855 = vadd.f32 0.0, %v2854
      %v2856 = vpop.f32.mrb[0].mxu0
      %2857 = vmatprep.mubr.f32.mxu0 0.0
      %2858 = vmatmul.mubr.f32.gmra.mrb[0].mxu0 %v2729
      %v2859 = vpop.f32.mrb[0].mxu0
      %v2860 = vadd.f32 0.0, %v2859
      %v2861 = vpop.f32.mrb[0].mxu0
      %2862 = vmatprep.mubr.f32.mxu0 0.0
      %2863 = vmatmul.mubr.f32.gmra.mrb[0].mxu0 %v2732
      %v2864 = vpop.f32.mrb[0].mxu0
      %v2865 = vadd.f32 0.0, %v2864
      %v2866 = vpop.f32.mrb[0].mxu0
      %2867 = vmatprep.mubr.f32.mxu0 0.0
      %2868 = vmatmul.mubr.f32.gmra.mrb[0].mxu0 %v2735
      %v2869 = vpop.f32.mrb[0].mxu0
      %v2870 = vadd.f32 0.0, %v2869
      %v2871 = vpop.f32.mrb[0].mxu0
      %2872 = vmatprep.mubr.f32.mxu0 0.0
      %2873 = vmatmul.mubr.f32.gmra.mrb[0].mxu0 %v2738
      %v2874 = vpop.f32.mrb[0].mxu0
      %v2875 = vadd.f32 0.0, %v2874
      %v2876 = vpop.f32.mrb[0].mxu0
      %2877 = vmatprep.mubr.f32.mxu0 0.0
      %2878 = vmatmul.mubr.f32.gmra.mrb[0].mxu0 %v2741
      %v2879 = vpop.f32.mrb[0].mxu0
      %v2880 = vadd.f32 0.0, %v2879
      %v2881 = vpop.f32.mrb[0].mxu0
      %2882 = vmatprep.mubr.f32.mxu0 0.0
      %2883 = vmatmul.mubr.f32.gmra.mrb[0].mxu0 %v2744
      %v2884 = vpop.f32.mrb[0].mxu0
      %v2885 = vadd.f32 0.0, %v2884
      %v2886 = vpop.f32.mrb[0].mxu0
      %2887 = vmatprep.mubr.f32.mxu0 0.0
      %2888 = vmatmul.mubr.f32.gmra.mrb[0].mxu0 %v2747
      %v2889 = vpop.f32.mrb[0].mxu0
      %v2890 = vadd.f32 0.0, %v2889
      %v2891 = vpop.f32.mrb[0].mxu0
      %2892 = vmatprep.mubr.f32.mxu0 0.0
      %2893 = vmatmul.mubr.f32.gmra.mrb[0].mxu0 %v2750
      %v2894 = vpop.f32.mrb[0].mxu0
      %v2895 = vadd.f32 0.0, %v2894
      %v2896 = vpop.f32.mrb[0].mxu0
      %2897 = vmatprep.mubr.f32.mxu0 0.0
      %2898 = vmatmul.mubr.f32.gmra.mrb[0].mxu0 %v2753
      %v2899 = vpop.f32.mrb[0].mxu0
      %v2900 = vadd.f32 0.0, %v2899
      %v2901 = vpop.f32.mrb[0].mxu0
      %2902 = vmatprep.mubr.f32.mxu0 0.0
      %2903 = vmatmul.mubr.f32.gmra.mrb[0].mxu0 %v2756
      %v2904 = vpop.f32.mrb[0].mxu0
      %v2905 = vadd.f32 0.0, %v2904
      %v2906 = vpop.f32.mrb[0].mxu0
      %2907 = vmatprep.mubr.f32.mxu0 0.0
      %2908 = vmatmul.mubr.f32.gmra.mrb[0].mxu0 %v2759
      %v2909 = vpop.f32.mrb[0].mxu0
      %v2910 = vadd.f32 0.0, %v2909
      %v2911 = vpop.f32.mrb[0].mxu0
      %2912 = vmatprep.mubr.f32.mxu0 0.0
      %2913 = vmatmul.mubr.f32.gmra.mrb[0].mxu0 %v2762
      %v2914 = vpop.f32.mrb[0].mxu0
      %v2915 = vadd.f32 0.0, %v2914
      %v2916 = vpop.f32.mrb[0].mxu0
      %2917 = vmatprep.mubr.f32.mxu0 0.0
      %2918 = vmatmul.mubr.f32.gmra.mrb[0].mxu0 %v2765
      %v2919 = vpop.f32.mrb[0].mxu0
      %v2920 = vadd.f32 0.0, %v2919
      %v2921 = vpop.f32.mrb[0].mxu0
      %2922 = vmatprep.mubr.f32.mxu0 0.0
      %2923 = vmatmul.mubr.f32.gmra.mrb[0].mxu0 %v2768
      %v2924 = vpop.f32.mrb[0].mxu0
      %v2925 = vadd.f32 0.0, %v2924
      %v2926 = vpop.f32.mrb[0].mxu0
      %2927 = vdwg.mxu0
      %v2928 = vadd.f32 %v2678, %v2840
      %v2929 = vadd.f32 %v2679, %v2845
      %v2930 = vadd.f32 %v2680, %v2850
      %v2931 = vadd.f32 %v2681, %v2855
      %v2932 = vadd.f32 %v2682, %v2860
      %v2933 = vadd.f32 %v2683, %v2865
      %v2934 = vadd.f32 %v2684, %v2870
      %v2935 = vadd.f32 %v2685, %v2875
      %v2936 = vadd.f32 %v2686, %v2880
      %v2937 = vadd.f32 %v2687, %v2885
      %v2938 = vadd.f32 %v2688, %v2890
      %v2939 = vadd.f32 %v2689, %v2895
      %v2940 = vadd.f32 %v2690, %v2900
      %v2941 = vadd.f32 %v2691, %v2905
      %v2942 = vadd.f32 %v2692, %v2910
      %v2943 = vadd.f32 %v2693, %v2915
      %v2944 = vadd.f32 %v2694, %v2920
      %v2945 = vadd.f32 %v2695, %v2925
      %vm2946 = vcmask 31744
      %2947 = vst.msk [vmem:[%s517] sm:$0xff] %vm2946, %v2928
      %2948 = vst.msk [vmem:[%s517 + $0x8] sm:$0xff] %vm2946, %v2929
      %v2949 = vsel %vm2946, %v2928, 0.0
      %v2950 = vsel %vm2946, %v2929, 0.0
      %v2951 = vadd.f32 %v2949, %v2950
      %v2952 = vrot.slane %v2951, 4
      %v2953 = vadd.f32 %v2951, %v2952
      %v2954 = vrot.slane %v2953, 2
      %v2955 = vadd.f32 %v2953, %v2954
      %v2956 = vrot.slane %v2955, 1
      %v2957 = vadd.f32 %v2955, %v2956
      %v2958 = vadd.f32 %v2957, 0.0
      %v2959 = vmul.f32 %v2928, %v2928
      %v2960 = vmul.f32 %v2929, %v2929
      %v2961 = vsel %vm2946, %v2959, 0.0
      %v2962 = vsel %vm2946, %v2960, 0.0
      %v2963 = vadd.f32 %v2961, %v2962
      %v2964 = vrot.slane %v2963, 4
      %v2965 = vadd.f32 %v2963, %v2964
      %v2966 = vrot.slane %v2965, 2
      %v2967 = vadd.f32 %v2965, %v2966
      %v2968 = vrot.slane %v2967, 1
      %v2969 = vadd.f32 %v2967, %v2968
      %v2970 = vadd.f32 %v2969, 0.0
      %s2971 = scalar_lea.vmem %s517, 16
      %vm2972 = vcmask 31746
      %2973 = vst.msk [vmem:[%s2971 - $0x2] sm:$0xfc] %vm2972, %v2930
      %2974 = vst.msk [vmem:[%s2971 + $0x6] sm:$0xff] %vm2946, %v2931
      %vm2975 = vcmask 25600
      %2976 = vst.msk [vmem:[%s2971 + $0xe] sm:$0x3] %vm2975, %v2932
      %vm2980 = vcmask 1045504
      %v2981 = vrot.slane %v2930, 2
      %v2982 = vrot.slane %v2931, 2
      %v2983 = vsel %vm2980, %v2981, %v2982
      %v2984 = vrot.slane %v2932, 2
      %v2985 = vsel %vm2980, %v2982, %v2984
      %v2988 = vsel %vm2946, %v2983, 0.0
      %v2989 = vsel %vm2946, %v2985, 0.0
      %v2990 = vadd.f32 %v2988, %v2989
      %v2991 = vrot.slane %v2990, 4
      %v2992 = vadd.f32 %v2990, %v2991
      %v2993 = vrot.slane %v2992, 2
      %v2994 = vadd.f32 %v2992, %v2993
      %v2995 = vrot.slane %v2994, 1
      %v2996 = vadd.f32 %v2994, %v2995
      %v2997 = vadd.f32 %v2958, %v2996
      %v2998 = vmul.f32 %v2930, %v2930
      %v2999 = vmul.f32 %v2931, %v2931
      %v3000 = vmul.f32 %v2932, %v2932
      %v3004 = vrot.slane %v2998, 2
      %v3005 = vrot.slane %v2999, 2
      %v3006 = vsel %vm2980, %v3004, %v3005
      %v3007 = vrot.slane %v3000, 2
      %v3008 = vsel %vm2980, %v3005, %v3007
      %v3011 = vsel %vm2946, %v3006, 0.0
      %v3012 = vsel %vm2946, %v3008, 0.0
      %v3013 = vadd.f32 %v3011, %v3012
      %v3014 = vrot.slane %v3013, 4
      %v3015 = vadd.f32 %v3013, %v3014
      %v3016 = vrot.slane %v3015, 2
      %v3017 = vadd.f32 %v3015, %v3016
      %v3018 = vrot.slane %v3017, 1
      %v3019 = vadd.f32 %v3017, %v3018
      %v3020 = vadd.f32 %v2970, %v3019
      %s3021 = scalar_lea.vmem %s517, 32
      %vm3022 = vcmask 31748
      %3023 = vst.msk [vmem:[%s3021 - $0x4] sm:$0xf0] %vm3022, %v2932
      %3024 = vst.msk [vmem:[%s3021 + $0x4] sm:$0xff] %vm2946, %v2933
      %vm3025 = vcmask 27648
      %3026 = vst.msk [vmem:[%s3021 + $0xc] sm:$0xf] %vm3025, %v2934
      %vm3029 = vcmask 1043456
      %v3030 = vrot.slane %v2932, 4
      %v3031 = vrot.slane %v2933, 4
      %v3032 = vsel %vm3029, %v3030, %v3031
      %v3033 = vrot.slane %v2934, 4
      %v3034 = vsel %vm3029, %v3031, %v3033
      %v3037 = vsel %vm2946, %v3032, 0.0
      %v3038 = vsel %vm2946, %v3034, 0.0
      %v3039 = vadd.f32 %v3037, %v3038
      %v3040 = vrot.slane %v3039, 4
      %v3041 = vadd.f32 %v3039, %v3040
      %v3042 = vrot.slane %v3041, 2
      %v3043 = vadd.f32 %v3041, %v3042
      %v3044 = vrot.slane %v3043, 1
      %v3045 = vadd.f32 %v3043, %v3044
      %v3046 = vadd.f32 %v2997, %v3045
      %v3047 = vmul.f32 %v2933, %v2933
      %v3048 = vmul.f32 %v2934, %v2934
      %v3051 = vrot.slane %v3000, 4
      %v3052 = vrot.slane %v3047, 4
      %v3053 = vsel %vm3029, %v3051, %v3052
      %v3054 = vrot.slane %v3048, 4
      %v3055 = vsel %vm3029, %v3052, %v3054
      %v3058 = vsel %vm2946, %v3053, 0.0
      %v3059 = vsel %vm2946, %v3055, 0.0
      %v3060 = vadd.f32 %v3058, %v3059
      %v3061 = vrot.slane %v3060, 4
      %v3062 = vadd.f32 %v3060, %v3061
      %v3063 = vrot.slane %v3062, 2
      %v3064 = vadd.f32 %v3062, %v3063
      %v3065 = vrot.slane %v3064, 1
      %v3066 = vadd.f32 %v3064, %v3065
      %v3067 = vadd.f32 %v3020, %v3066
      %s3068 = scalar_lea.vmem %s517, 48
      %vm3069 = vcmask 31750
      %3070 = vst.msk [vmem:[%s3068 - $0x6] sm:$0xc0] %vm3069, %v2934
      %3071 = vst.msk [vmem:[%s3068 + $0x2] sm:$0xff] %vm2946, %v2935
      %vm3072 = vcmask 29696
      %3073 = vst.msk [vmem:[%s3068 + $0xa] sm:$0x3f] %vm3072, %v2936
      %v3076 = vrot.slane %v2934, 6
      %v3077 = vrot.slane %v2935, 6
      %v3078 = vsel %vm825, %v3076, %v3077
      %v3079 = vrot.slane %v2936, 6
      %v3080 = vsel %vm825, %v3077, %v3079
      %v3083 = vsel %vm2946, %v3078, 0.0
      %v3084 = vsel %vm2946, %v3080, 0.0
      %v3085 = vadd.f32 %v3083, %v3084
      %v3086 = vrot.slane %v3085, 4
      %v3087 = vadd.f32 %v3085, %v3086
      %v3088 = vrot.slane %v3087, 2
      %v3089 = vadd.f32 %v3087, %v3088
      %v3090 = vrot.slane %v3089, 1
      %v3091 = vadd.f32 %v3089, %v3090
      %v3092 = vadd.f32 %v3046, %v3091
      %v3093 = vmul.f32 %v2935, %v2935
      %v3094 = vmul.f32 %v2936, %v2936
      %v3097 = vrot.slane %v3048, 6
      %v3098 = vrot.slane %v3093, 6
      %v3099 = vsel %vm825, %v3097, %v3098
      %v3100 = vrot.slane %v3094, 6
      %v3101 = vsel %vm825, %v3098, %v3100
      %v3104 = vsel %vm2946, %v3099, 0.0
      %v3105 = vsel %vm2946, %v3101, 0.0
      %v3106 = vadd.f32 %v3104, %v3105
      %v3107 = vrot.slane %v3106, 4
      %v3108 = vadd.f32 %v3106, %v3107
      %v3109 = vrot.slane %v3108, 2
      %v3110 = vadd.f32 %v3108, %v3109
      %v3111 = vrot.slane %v3110, 1
      %v3112 = vadd.f32 %v3110, %v3111
      %v3113 = vadd.f32 %v3067, %v3112
      %s3114 = scalar_lea.vmem %s517, 64
      %3115 = vst.msk [vmem:[%s3114] sm:$0xff] %vm2946, %v2937
      %3116 = vst.msk [vmem:[%s3114 + $0x8] sm:$0xff] %vm2946, %v2938
      %v3117 = vsel %vm2946, %v2937, 0.0
      %v3118 = vsel %vm2946, %v2938, 0.0
      %v3119 = vadd.f32 %v3117, %v3118
      %v3120 = vrot.slane %v3119, 4
      %v3121 = vadd.f32 %v3119, %v3120
      %v3122 = vrot.slane %v3121, 2
      %v3123 = vadd.f32 %v3121, %v3122
      %v3124 = vrot.slane %v3123, 1
      %v3125 = vadd.f32 %v3123, %v3124
      %v3126 = vadd.f32 %v3092, %v3125
      %v3127 = vmul.f32 %v2937, %v2937
      %v3128 = vmul.f32 %v2938, %v2938
      %v3129 = vsel %vm2946, %v3127, 0.0
      %v3130 = vsel %vm2946, %v3128, 0.0
      %v3131 = vadd.f32 %v3129, %v3130
      %v3132 = vrot.slane %v3131, 4
      %v3133 = vadd.f32 %v3131, %v3132
      %v3134 = vrot.slane %v3133, 2
      %v3135 = vadd.f32 %v3133, %v3134
      %v3136 = vrot.slane %v3135, 1
      %v3137 = vadd.f32 %v3135, %v3136
      %v3138 = vadd.f32 %v3113, %v3137
      %s3139 = scalar_lea.vmem %s517, 80
      %3140 = vst.msk [vmem:[%s3139 - $0x2] sm:$0xfc] %vm2972, %v2939
      %3141 = vst.msk [vmem:[%s3139 + $0x6] sm:$0xff] %vm2946, %v2940
      %3142 = vst.msk [vmem:[%s3139 + $0xe] sm:$0x3] %vm2975, %v2941
      %v3146 = vrot.slane %v2939, 2
      %v3147 = vrot.slane %v2940, 2
      %v3148 = vsel %vm2980, %v3146, %v3147
      %v3149 = vrot.slane %v2941, 2
      %v3150 = vsel %vm2980, %v3147, %v3149
      %v3153 = vsel %vm2946, %v3148, 0.0
      %v3154 = vsel %vm2946, %v3150, 0.0
      %v3155 = vadd.f32 %v3153, %v3154
      %v3156 = vrot.slane %v3155, 4
      %v3157 = vadd.f32 %v3155, %v3156
      %v3158 = vrot.slane %v3157, 2
      %v3159 = vadd.f32 %v3157, %v3158
      %v3160 = vrot.slane %v3159, 1
      %v3161 = vadd.f32 %v3159, %v3160
      %v3162 = vadd.f32 %v3126, %v3161
      %v3163 = vmul.f32 %v2939, %v2939
      %v3164 = vmul.f32 %v2940, %v2940
      %v3165 = vmul.f32 %v2941, %v2941
      %v3169 = vrot.slane %v3163, 2
      %v3170 = vrot.slane %v3164, 2
      %v3171 = vsel %vm2980, %v3169, %v3170
      %v3172 = vrot.slane %v3165, 2
      %v3173 = vsel %vm2980, %v3170, %v3172
      %v3176 = vsel %vm2946, %v3171, 0.0
      %v3177 = vsel %vm2946, %v3173, 0.0
      %v3178 = vadd.f32 %v3176, %v3177
      %v3179 = vrot.slane %v3178, 4
      %v3180 = vadd.f32 %v3178, %v3179
      %v3181 = vrot.slane %v3180, 2
      %v3182 = vadd.f32 %v3180, %v3181
      %v3183 = vrot.slane %v3182, 1
      %v3184 = vadd.f32 %v3182, %v3183
      %v3185 = vadd.f32 %v3138, %v3184
      %s3186 = scalar_lea.vmem %s517, 96
      %3187 = vst.msk [vmem:[%s3186 - $0x4] sm:$0xf0] %vm3022, %v2941
      %3188 = vst.msk [vmem:[%s3186 + $0x4] sm:$0xff] %vm2946, %v2942
      %3189 = vst.msk [vmem:[%s3186 + $0xc] sm:$0xf] %vm3025, %v2943
      %v3192 = vrot.slane %v2941, 4
      %v3193 = vrot.slane %v2942, 4
      %v3194 = vsel %vm3029, %v3192, %v3193
      %v3195 = vrot.slane %v2943, 4
      %v3196 = vsel %vm3029, %v3193, %v3195
      %v3199 = vsel %vm2946, %v3194, 0.0
      %v3200 = vsel %vm2946, %v3196, 0.0
      %v3201 = vadd.f32 %v3199, %v3200
      %v3202 = vrot.slane %v3201, 4
      %v3203 = vadd.f32 %v3201, %v3202
      %v3204 = vrot.slane %v3203, 2
      %v3205 = vadd.f32 %v3203, %v3204
      %v3206 = vrot.slane %v3205, 1
      %v3207 = vadd.f32 %v3205, %v3206
      %v3208 = vadd.f32 %v3162, %v3207
      %v3209 = vmul.f32 %v2942, %v2942
      %v3210 = vmul.f32 %v2943, %v2943
      %v3213 = vrot.slane %v3165, 4
      %v3214 = vrot.slane %v3209, 4
      %v3215 = vsel %vm3029, %v3213, %v3214
      %v3216 = vrot.slane %v3210, 4
      %v3217 = vsel %vm3029, %v3214, %v3216
      %v3220 = vsel %vm2946, %v3215, 0.0
      %v3221 = vsel %vm2946, %v3217, 0.0
      %v3222 = vadd.f32 %v3220, %v3221
      %v3223 = vrot.slane %v3222, 4
      %v3224 = vadd.f32 %v3222, %v3223
      %v3225 = vrot.slane %v3224, 2
      %v3226 = vadd.f32 %v3224, %v3225
      %v3227 = vrot.slane %v3226, 1
      %v3228 = vadd.f32 %v3226, %v3227
      %v3229 = vadd.f32 %v3185, %v3228
      %s3230 = scalar_lea.vmem %s517, 112
      %3231 = vst.msk [vmem:[%s3230 - $0x6] sm:$0xc0] %vm3069, %v2943
      %3232 = vst.msk [vmem:[%s3230 + $0x2] sm:$0xff] %vm2946, %v2944
      %3233 = vst.msk [vmem:[%s3230 + $0xa] sm:$0x3f] %vm3072, %v2945
      %v3236 = vrot.slane %v2943, 6
      %v3237 = vrot.slane %v2944, 6
      %v3238 = vsel %vm825, %v3236, %v3237
      %v3239 = vrot.slane %v2945, 6
      %v3240 = vsel %vm825, %v3237, %v3239
      %v3243 = vsel %vm2946, %v3238, 0.0
      %v3244 = vsel %vm2946, %v3240, 0.0
      %v3245 = vadd.f32 %v3243, %v3244
      %v3246 = vrot.slane %v3245, 4
      %v3247 = vadd.f32 %v3245, %v3246
      %v3248 = vrot.slane %v3247, 2
      %v3249 = vadd.f32 %v3247, %v3248
      %v3250 = vrot.slane %v3249, 1
      %v3251 = vadd.f32 %v3249, %v3250
      %v3252 = vadd.f32 %v3208, %v3251
      %v3253 = vmul.f32 %v2944, %v2944
      %v3254 = vmul.f32 %v2945, %v2945
      %v3257 = vrot.slane %v3210, 6
      %v3258 = vrot.slane %v3253, 6
      %v3259 = vsel %vm825, %v3257, %v3258
      %v3260 = vrot.slane %v3254, 6
      %v3261 = vsel %vm825, %v3258, %v3260
      %v3264 = vsel %vm2946, %v3259, 0.0
      %v3265 = vsel %vm2946, %v3261, 0.0
      %v3266 = vadd.f32 %v3264, %v3265
      %v3267 = vrot.slane %v3266, 4
      %v3268 = vadd.f32 %v3266, %v3267
      %v3269 = vrot.slane %v3268, 2
      %v3270 = vadd.f32 %v3268, %v3269
      %v3271 = vrot.slane %v3270, 1
      %v3272 = vadd.f32 %v3270, %v3271
      %v3273 = vadd.f32 %v3229, %v3272
      %v3274 = vld [vmem:[%s9] sm:$0x1]
      %v3275 = vadd.f32 %v3274, %v3252
      %vm3276 = vcmask 24576
      %3277 = vst.msk [vmem:[%s9] sm:$0x1] %vm3276, %v3275
      %v3278 = vld [vmem:[%s10] sm:$0x1]
      %v3279 = vadd.f32 %v3278, %v3273
      %3280 = vst.msk [vmem:[%s10] sm:$0x1] %vm3276, %v3279
      %s3281 = smul.u32 8, %s27
      %p3282 = scmp.lt.s32.totalorder %s26, 1
      %s3283 = scalar_select %p3282, %s26, 1
      %p3284 = scmp.lt.s32.totalorder %s3281, 15
      %s3285 = scalar_select %p3284, %s3281, 15
      %s3286 = smul.addr %s3285, 2
      %s3287 = smul.addr %s3283, 32
      %s3288 = sadd.s32 %s3286, %s3287
      %s3289 = smul.addr %s3288, 8
      %s3290 = scalar_lea.vmem %s8, %s3289
      // Predicated region
      $region57: #{residual_block_forward.7} parent=51 // pred_check
        %p3291 = pneg %p255
      $region58: #{residual_block_forward.7} parent=51 // pred_check_branch
        %3293 = sbr.rel (%p3291) target = $region60
      $region59: #{residual_block_forward.7} parent=51 // pred_region
        %s3294 = smul.u32 8, %s27
      $region60: #{residual_block_forward.7} parent=51 // pred_fallthru
        _
      // Predicated region
      $region61: #{residual_block_forward.7} parent=51 // pred_check
        %p3295 = pneg %p276
      $region62: #{residual_block_forward.7} parent=51 // pred_check_branch
        %3297 = sbr.rel (%p3295) target = $region64
      $region63: #{residual_block_forward.7} parent=51 // pred_region
        _
      $region64: #{residual_block_forward.7} parent=51 // pred_fallthru
        _
      // Predicated region
      $region65: #{residual_block_forward.7} parent=51 // pred_check
        %p3298 = pneg %p297
      $region66: #{residual_block_forward.7} parent=51 // pred_check_branch
        %3300 = sbr.rel (%p3298) target = $region68
      $region67: #{residual_block_forward.7} parent=51 // pred_region
        _
      $region68: #{residual_block_forward.7} parent=51 // pred_fallthru
        _
      // Predicated region
      $region69: #{residual_block_forward.7} parent=51 // pred_check
        %p3301 = pneg %p276
      $region70: #{residual_block_forward.7} parent=51 // pred_check_branch
        %3303 = sbr.rel (%p3301) target = $region72
      $region71: #{residual_block_forward.7} parent=51 // pred_region
        _
      $region72: #{residual_block_forward.7} parent=51 // pred_fallthru
        _
      // Predicated region
      $region73: #{residual_block_forward.7} parent=51 // pred_check
        %p3304 = pneg %p297
      $region74: #{residual_block_forward.7} parent=51 // pred_check_branch
        %3306 = sbr.rel (%p3304) target = $region76
      $region75: #{residual_block_forward.7} parent=51 // pred_region
        _
      $region76: #{residual_block_forward.7} parent=51 // pred_fallthru
        _
    $region52: #{residual_block_forward.7} parent=5 // pred_fallthru
      _
    %p3307 = scmp.le.s32.totalorder 2, %s17
    // Predicated region
    $region77: #{residual_block_forward.7} parent=5 // pred_check
      %p3308 = pneg %p3307
    $region78: #{residual_block_forward.7} parent=5 // pred_check_branch
      %3310 = sbr.rel (%p3308) target = $region80
    $region79: #{residual_block_forward.7} parent=5 // pred_region
      %s3311 = ssub.s32 %s17, 2
      // Predicated region
      $region81: #{residual_block_forward.7} parent=79 // pred_check
        %p3312 = pneg %p261
      $region82: #{residual_block_forward.7} parent=79 // pred_check_branch
        %3314 = sbr.rel (%p3312) target = $region84
      $region83: #{residual_block_forward.7} parent=79 // pred_region
        %s3315 = smul.u32 8, %s29
        %p3316 = scmp.lt.s32.totalorder %s28, 1
        %s3317 = scalar_select %p3316, %s28, 1
        %p3318 = scmp.lt.s32.totalorder %s3315, 15
        %s3319 = scalar_select %p3318, %s3315, 15
        %s3320 = smul.addr %s3319, 2
        %s3321 = smul.addr %s3317, 32
        %s3322 = sadd.s32 %s3320, %s3321
        %s3323 = smul.addr %s3322, 8
        %s3324 = scalar_lea.vmem %s8, %s3323
      $region84: #{residual_block_forward.7} parent=79 // pred_fallthru
        _
    $region80: #{residual_block_forward.7} parent=5 // pred_fallthru
      _
  $region6: #{residual_block_forward.7} parent=0 // loop_footer
    %s21 = sadd.s32 1, %s17
  $region7: #{residual_block_forward.7} parent=0 // loop_footer_branch
    %16 = sbr.rel target = $region3
  $region8: #{residual_block_forward.7} parent=0 // loop_exit
    _

</llo_original>
